<compile_context>
chip_gen: v6e
topology: v6e:2x2x1
jax: 0.10.0
libtpu: 0.0.40
codegen_flags: <defaults>
</compile_context>

<pallas_src>
import jax
import jax.numpy as jnp
import numpy as np
from jax.experimental import pallas as pl
from jax.experimental.pallas import tpu as pltpu


def _round_up(x, m):
    return ((x + m - 1) // m) * m


def _pad2(a, r, c):
    return jnp.pad(a, ((0, r - a.shape[0]), (0, c - a.shape[1])))


_VMEM_LIMIT = 48 * 1024 * 1024  # leaves headroom under v7x's 64 MiB / TC


# ----------------------------- Pallas kernels ------------------------------

def gin_message_kernel(x_ref, ea_ref, src_ref, we_ref, be_ref, msg_ref):
    """Edge-parallel message kernel.  grid = (edge_tiles,) ["parallel"].

    msg_e = relu(x[src_e] + Linear(edge_attr_e)).  Runs once per edge tile
    (hoisted out of the node-tile loop).  Gather is a one-hot bf16 matmul so
    it lowers on every TPU generation; x stays VMEM resident.
    """
    et = ea_ref.shape[0]
    n_pad = x_ref.shape[0]

    # Linear(edge_attr): small f32 matmul, once per edge tile.
    e = jnp.dot(ea_ref[...], we_ref[...],
                preferred_element_type=jnp.float32) + be_ref[...]      # [ET, C]

    # gather x_j via on-chip one-hot (bf16 exact for 0/1), f32 accumulation.
    # TODO(synk): for very large N switch to sorted-edge DMA gather with x in
    # HBM (pl.ANY) so x need not be fully VMEM resident.
    src = src_ref[...]                                                  # [ET, 1]
    gather_oh = (jax.lax.broadcasted_iota(jnp.int32, (et, n_pad), 1)
                 == src).astype(jnp.bfloat16)                           # [ET, N]
    xj = jnp.dot(gather_oh, x_ref[...],
                 preferred_element_type=jnp.float32)                    # [ET, C]

    msg_ref[...] = jnp.maximum(xj + e, 0.0).astype(jnp.bfloat16)


def gin_scatter_mlp_kernel(msg_ref, dst_ref, x_ref, eps_ref,
                           w1_ref, b1_ref, w2_ref, b2_ref,
                           ps_ref, pb_ref, o_ref, acc_ref):
    """Scatter-add + GIN epilogue.  grid = (node_tiles ["parallel"],
    edge_tiles ["arbitrary"]).  acc_ref: [NT, C] f32 scratch accumulator.
    Padded edges carry dst = -1 and match no node row.
    """
    i = pl.program_id(0)                      # node tile
    k = pl.program_id(1)                      # edge tile (reduction axis)
    nt = acc_ref.shape[0]
    et = msg_ref.shape[0]

    @pl.when(k == 0)
    def _():
        acc_ref[...] = jnp.zeros_like(acc_ref)

    dst = dst_ref[...]                                                  # [1, ET]
    rows = jax.lax.broadcasted_iota(jnp.int32, (nt, et), 0) + i * nt
    scatter_oh = (rows == dst).astype(jnp.bfloat16)                     # [NT, ET]
    acc_ref[...] += jnp.dot(scatter_oh, msg_ref[...],
                            preferred_element_type=jnp.float32)

    @pl.when(k == pl.num_programs(1) - 1)
    def _():
        out = acc_ref[...] + (1.0 + eps_ref[0]) * x_ref[...].astype(jnp.float32)
        # mlp: Linear(+BN folded) -> ReLU -> Linear -> ReLU -> (BN∘BN folded)
        h = jnp.dot(out, w1_ref[...],
                    preferred_element_type=jnp.float32) + b1_ref[...]
        h = jnp.maximum(h, 0.0)
        h = jnp.dot(h, w2_ref[...],
                    preferred_element_type=jnp.float32) + b2_ref[...]
        h = jnp.maximum(h, 0.0)
        o_ref[...] = (h * ps_ref[...] + pb_ref[...]).astype(o_ref.dtype)


def head_kernel(batch_ref, x1_ref, x2_ref, x3_ref,
                w1_ref, b1_ref, w2_ref, b2_ref, o_ref, acc_ref):
    """Fused global_add_pool(x1|x2|x3) -> lin1(+bn4) -> leaky_relu -> lin2.

    grid = (node_tiles ["arbitrary"]).  The three layer activations are
    lane-concatenated so the pooling is ONE [G, NT] @ [NT, 3H] matmul per
    node tile.  acc_ref: [G_pad, 3H] f32.  Padded nodes carry batch = -1.
    """
    i = pl.program_id(0)
    g_pad = acc_ref.shape[0]
    nth = batch_ref.shape[1]

    @pl.when(i == 0)
    def _():
        acc_ref[...] = jnp.zeros_like(acc_ref)

    b = batch_ref[...]                                                  # [1, NT]
    pool_oh = (jax.lax.broadcasted_iota(jnp.int32, (g_pad, nth), 0)
               == b).astype(jnp.bfloat16)                               # [G, NT]
    xcat = jnp.concatenate([x1_ref[...], x2_ref[...], x3_ref[...]], axis=1)
    acc_ref[...] += jnp.dot(pool_oh, xcat,
                            preferred_element_type=jnp.float32)

    @pl.when(i == pl.num_programs(0) - 1)
    def _():
        # Dropout(p=0.5) is identity in eval mode; bn4 folded into w1/b1.
        z = jnp.dot(acc_ref[...], w1_ref[...],
                    preferred_element_type=jnp.float32) + b1_ref[...]
        z = jnp.where(z > 0, z, 0.01 * z)                               # leaky_relu
        o_ref[...] = jnp.dot(z, w2_ref[...],
                             preferred_element_type=jnp.float32) + b2_ref[...]


# ------------------------------ wrappers ------------------------------------

def run_gin_layer(x_pad, src_col, dst_row, ea_pad, p, *, nt, et):
    n_pad, c_pad = x_pad.shape
    e_pad, d_pad = ea_pad.shape
    h_pad = p["w1"].shape[1]

    # Stage 1: edge-parallel message kernel (once per edge tile).
    msg = pl.pallas_call(
        gin_message_kernel,
        grid=(e_pad // et,),
        in_specs=[
            pl.BlockSpec((n_pad, c_pad), lambda k: (0, 0)),     # x (resident)
            pl.BlockSpec((et, d_pad), lambda k: (k, 0)),        # edge_attr tile
            pl.BlockSpec((et, 1), lambda k: (k, 0)),            # src indices
            pl.BlockSpec((d_pad, c_pad), lambda k: (0, 0)),     # we
            pl.BlockSpec((1, c_pad), lambda k: (0, 0)),         # be
        ],
        out_specs=pl.BlockSpec((et, c_pad), lambda k: (k, 0)),
        out_shape=jax.ShapeDtypeStruct((e_pad, c_pad), jnp.bfloat16),
        compiler_params=pltpu.CompilerParams(
            dimension_semantics=("parallel",),
            vmem_limit_bytes=_VMEM_LIMIT),
    )(x_pad, ea_pad, src_col, p["we"], p["be"])

    # Stage 2: node-tiled scatter-add over message tiles + fused epilogue MLP.
    # TODO(synk): on v7x, single-buffer the constant weight blocks via
    # pipeline_mode=pl.Buffered(1) to halve their VMEM footprint.
    const = lambda i, k: (0, 0)
    return pl.pallas_call(
        gin_scatter_mlp_kernel,
        grid=(n_pad // nt, e_pad // et),
        in_specs=[
            pl.BlockSpec((et, c_pad), lambda i, k: (k, 0)),     # msg tile
            pl.BlockSpec((1, et), lambda i, k: (0, k)),         # dst indices
            pl.BlockSpec((nt, c_pad), lambda i, k: (i, 0)),     # x tile
            pl.BlockSpec(memory_space=pltpu.MemorySpace.SMEM),  # eps scalar
            pl.BlockSpec((c_pad, h_pad), const),                # w1 (BN folded)
            pl.BlockSpec((1, h_pad), const),                    # b1
            pl.BlockSpec((h_pad, h_pad), const),                # w2
            pl.BlockSpec((1, h_pad), const),                    # b2
            pl.BlockSpec((1, h_pad), const),                    # post scale
            pl.BlockSpec((1, h_pad), const),                    # post shift
        ],
        out_specs=pl.BlockSpec((nt, h_pad), lambda i, k: (i, 0)),
        out_shape=jax.ShapeDtypeStruct((n_pad, h_pad), jnp.bfloat16),
        scratch_shapes=[pltpu.VMEM((nt, c_pad), jnp.float32)],
        compiler_params=pltpu.CompilerParams(
            dimension_semantics=("parallel", "arbitrary"),
            vmem_limit_bytes=_VMEM_LIMIT),
    )(msg, dst_row, x_pad, p["eps"], p["w1"], p["b1"], p["w2"], p["b2"],
      p["post_s"], p["post_b"])


def run_head(batch_row, x1, x2, x3, p, *, nth, g_pad):
    n_pad, h_pad = x1.shape
    c3 = p["w1"].shape[0]          # 3 * h_pad (padded concat width)
    ho = p["w1"].shape[1]
    o_pad = p["w2"].shape[1]
    const = lambda i: (0, 0)
    return pl.pallas_call(
        head_kernel,
        grid=(n_pad // nth,),
        in_specs=[
            pl.BlockSpec((1, nth), lambda i: (0, i)),            # batch ids
            pl.BlockSpec((nth, h_pad), lambda i: (i, 0)),        # x1 tile
            pl.BlockSpec((nth, h_pad), lambda i: (i, 0)),        # x2 tile
            pl.BlockSpec((nth, h_pad), lambda i: (i, 0)),        # x3 tile
            pl.BlockSpec((c3, ho), const),                       # lin1 (bn4 folded)
            pl.BlockSpec((1, ho), const),
            pl.BlockSpec((ho, o_pad), const),                    # lin2
            pl.BlockSpec((1, o_pad), const),
        ],
        out_specs=pl.BlockSpec((g_pad, o_pad), lambda i: (0, 0)),
        out_shape=jax.ShapeDtypeStruct((g_pad, o_pad), jnp.float32),
        scratch_shapes=[pltpu.VMEM((g_pad, c3), jnp.float32)],
        compiler_params=pltpu.CompilerParams(
            dimension_semantics=("arbitrary",),
            vmem_limit_bytes=_VMEM_LIMIT),
    )(batch_row, x1, x2, x3, p["w1"], p["b1"], p["w2"], p["b2"])


def gin_mollipo_forward(x_pad, src_col, dst_row, ea_pad, batch_row, params,
                        *, nt, et, nth, g_pad, n_graphs):
    x1 = run_gin_layer(x_pad, src_col, dst_row, ea_pad, params["gin1"],
                       nt=nt, et=et)
    x2 = run_gin_layer(x1, src_col, dst_row, ea_pad, params["gin2"],
                       nt=nt, et=et)
    x3 = run_gin_layer(x2, src_col, dst_row, ea_pad, params["gin3"],
                       nt=nt, et=et)
    out = run_head(batch_row, x1, x2, x3, params["head"], nth=nth, g_pad=g_pad)
    return out[:n_graphs, :1]


# ------------------------- parameters (raw + folded/padded) ------------------

def _init_linear(key, fan_in, fan_out):
    k1, k2 = jax.random.split(key)
    bound = 1.0 / np.sqrt(fan_in)
    w = jax.random.uniform(k1, (fan_in, fan_out), jnp.float32, -bound, bound)
    b = jax.random.uniform(k2, (1, fan_out), jnp.float32, -bound, bound)
    return w, b


def _bn_fold(c, bn_eps=1e-5):
    # PyTorch eval-mode defaults: gamma=1, beta=0, running_mean=0, running_var=1
    gamma = jnp.ones((1, c), jnp.float32)
    beta = jnp.zeros((1, c), jnp.float32)
    mean = jnp.zeros((1, c), jnp.float32)
    var = jnp.ones((1, c), jnp.float32)
    scale = gamma / jnp.sqrt(var + bn_eps)
    shift = beta - mean * scale
    return scale, shift


def make_raw_params(key, in_c, hid, edge_d):
    ks = jax.random.split(key, 5)

    def gin(k, cin):
        k0, k1, k2 = jax.random.split(k, 3)
        we, be = _init_linear(k0, edge_d, cin)     # GIN.lin
        w1, b1 = _init_linear(k1, cin, hid)        # mlp Linear 1
        w2, b2 = _init_linear(k2, hid, hid)        # mlp Linear 2
        return dict(we=we, be=be, eps=jnp.zeros((1,), jnp.float32),
                    w1=w1, b1=b1, w2=w2, b2=b2,
                    bn_a=_bn_fold(hid), bn_b=_bn_fold(hid), bn_o=_bn_fold(hid))

    w_lin1, b_lin1 = _init_linear(ks[3], 3 * hid, 3 * hid)
    w_lin2, b_lin2 = _init_linear(ks[4], 3 * hid, 1)
    head = dict(w_lin1=w_lin1, b_lin1=b_lin1, bn4=_bn_fold(3 * hid),
                w_lin2=w_lin2, b_lin2=b_lin2)
    return dict(gin1=gin(ks[0], in_c), gin2=gin(ks[1], hid),
                gin3=gin(ks[2], hid), head=head)


def fold_and_pad_params(raw, in_c, hid, edge_d, c_pad, d_pad):
    h_pad = c_pad

    def fold_gin(p):
        s_a, t_a = p["bn_a"]
        s_b, t_b = p["bn_b"]
        s_o, t_o = p["bn_o"]
        w1f = p["w1"] * s_a                 # fold mlp BN (after Linear1)
        b1f = p["b1"] * s_a + t_a
        post_s = s_b * s_o                  # compose mlp-tail BN with outer bn
        post_b = t_b * s_o + t_o
        return dict(
            we=_pad2(p["we"], d_pad, c_pad), be=_pad2(p["be"], 1, c_pad),
            w1=_pad2(w1f, c_pad, h_pad), b1=_pad2(b1f, 1, h_pad),
            w2=_pad2(p["w2"], h_pad, h_pad), b2=_pad2(p["b2"], 1, h_pad),
            post_s=_pad2(post_s, 1, h_pad), post_b=_pad2(post_b, 1, h_pad),
            eps=p["eps"])

    hp = raw["head"]
    s4, t4 = hp["bn4"]
    w1f = hp["w_lin1"] * s4                 # fold bn4 into lin1
    b1f = hp["b_lin1"] * s4 + t4
    ho = _round_up(3 * hid, 128)
    # Re-block lin1 rows to match the padded pooled-concat layout
    # [layer1 | pad | layer2 | pad | layer3 | pad].
    w1p = jnp.zeros((3 * h_pad, ho), jnp.float32)
    for l in range(3):
        w1p = w1p.at[l * h_pad:l * h_pad + hid, :3 * hid].set(
            w1f[l * hid:(l + 1) * hid, :])
    o_pad = 128
    head = dict(w1=w1p, b1=_pad2(b1f, 1, ho),
                w2=_pad2(hp["w_lin2"], ho, o_pad),
                b2=_pad2(hp["b_lin2"], 1, o_pad))
    return dict(gin1=fold_gin(raw["gin1"]), gin2=fold_gin(raw["gin2"]),
                gin3=fold_gin(raw["gin3"]), head=head)


# ------------------------------ pure-JAX reference ---------------------------

def _ref_gin_layer(x, src, dst, ea, p):
    e = ea @ p["we"] + p["be"]
    msg = jnp.maximum(x[src] + e, 0.0)
    agg = jnp.zeros_like(x).at[dst].add(msg)
    out = agg + (1.0 + p["eps"][0]) * x
    s_a, t_a = p["bn_a"]
    s_b, t_b = p["bn_b"]
    s_o, t_o = p["bn_o"]
    h = out @ p["w1"] + p["b1"]
    h = jnp.maximum(h * s_a + t_a, 0.0)
    h = jnp.maximum(h @ p["w2"] + p["b2"], 0.0)
    h = h * s_b + t_b
    return h * s_o + t_o


def _ref_forward(x, src, dst, ea, batch, n_graphs, raw):
    x1 = _ref_gin_layer(x, src, dst, ea, raw["gin1"])
    x2 = _ref_gin_layer(x1, src, dst, ea, raw["gin2"])
    x3 = _ref_gin_layer(x2, src, dst, ea, raw["gin3"])
    xcat = jnp.concatenate([x1, x2, x3], axis=1)
    pooled = jnp.zeros((n_graphs, xcat.shape[1]), jnp.float32).at[batch].add(xcat)
    hp = raw["head"]
    s4, t4 = hp["bn4"]
    h = pooled @ hp["w_lin1"] + hp["b_lin1"]
    h = h * s4 + t4
    h = jnp.where(h > 0, h, 0.01 * h)
    return h @ hp["w_lin2"] + hp["b_lin2"]


# ---------------------------------- main -------------------------------------

if __name__ == "__main__":
    # logical sizes (nodes, edges, graphs, channels)
    N, E, G = 16, 300, 2
    IN_C, HID, EDGE_D = 8, 32, 4

    LANE = 128
    NT, ET = 128, 512                     # node tile / edge tile (MXU-friendly)
    C_PAD = _round_up(max(IN_C, HID), LANE)   # shared padded feature width
    D_PAD = _round_up(EDGE_D, LANE)
    N_PAD = _round_up(N, NT)
    E_PAD = _round_up(E, ET)
    G_PAD = _round_up(G, 8)
    NTH = NT                              # head node tile (lane axis of pool)
    assert N_PAD % NTH == 0

    key = jax.random.PRNGKey(0)
    k_x, k_ei, k_ea, k_p = jax.random.split(key, 4)

    x = jax.random.normal(k_x, (N, IN_C), jnp.float32)
    edge_index = jax.random.randint(k_ei, (2, E), 0, N, dtype=jnp.int32)
    edge_attr = jax.random.normal(k_ea, (E, EDGE_D), jnp.float32)
    batch = jnp.concatenate([jnp.zeros(N // 2, jnp.int32),
                             jnp.ones(N - N // 2, jnp.int32)])

    raw = make_raw_params(k_p, IN_C, HID, EDGE_D)
    params = fold_and_pad_params(raw, IN_C, HID, EDGE_D, C_PAD, D_PAD)

    # device-side padded layout: activations in bf16 (MXU operands), padded
    # edges get dst=-1 (scatter to nowhere), padded nodes get batch=-1
    # (excluded from pooling).  Padded node rows of x1/x2/x3 are NOT zero
    # (bias/ReLU propagation) -- they are only masked by batch=-1.
    x_pad = jnp.zeros((N_PAD, C_PAD), jnp.bfloat16).at[:N, :IN_C].set(
        x.astype(jnp.bfloat16))
    ea_pad = jnp.zeros((E_PAD, D_PAD), jnp.float32).at[:E, :EDGE_D].set(edge_attr)
    src_col = jnp.zeros((E_PAD, 1), jnp.int32).at[:E, 0].set(edge_index[0])
    dst_row = jnp.full((1, E_PAD), -1, jnp.int32).at[0, :E].set(edge_index[1])
    batch_row = jnp.full((1, N_PAD), -1, jnp.int32).at[0, :N].set(batch)

    fwd = jax.jit(lambda xx, s, d, ea, b, pp: gin_mollipo_forward(
        xx, s, d, ea, b, pp, nt=NT, et=ET, nth=NTH, g_pad=G_PAD, n_graphs=G))
    out = fwd(x_pad, src_col, dst_row, ea_pad, batch_row, params)
    out = jax.block_until_ready(out)

    ref = _ref_forward(x, edge_index[0], edge_index[1], edge_attr, batch, G, raw)
    # bf16 activations on the gather/scatter/pool path (f32 accumulation), so
    # tolerance is loosened vs. a pure-f32 pipeline.
    np.testing.assert_allclose(np.asarray(out), np.asarray(ref),
                               rtol=5e-2, atol=5e-2)
    assert out.shape == (G, 1)

    # TODO(synk): training-mode Dropout / BatchNorm batch-statistic updates are
    # not modeled (inference semantics only).
    print("KERNEL_OK")
</pallas_src>

<mosaic_0001>
module attributes {stable_mosaic.version = 11 : i64} {
  func.func @gin_scatter_mlp_kernel(%arg0: i32, %arg1: i32, %arg2: memref<512x128xbf16, #tpu.memory_space<vmem>>, %arg3: memref<1x512xi32, #tpu.memory_space<vmem>>, %arg4: memref<128x128xbf16, #tpu.memory_space<vmem>>, %arg5: memref<1xf32, #tpu.memory_space<smem>>, %arg6: memref<128x128xf32, #tpu.memory_space<vmem>>, %arg7: memref<1x128xf32, #tpu.memory_space<vmem>>, %arg8: memref<128x128xf32, #tpu.memory_space<vmem>>, %arg9: memref<1x128xf32, #tpu.memory_space<vmem>>, %arg10: memref<1x128xf32, #tpu.memory_space<vmem>>, %arg11: memref<1x128xf32, #tpu.memory_space<vmem>>, %arg12: memref<128x128xbf16, #tpu.memory_space<vmem>>, %arg13: memref<128x128xf32, #tpu.memory_space<vmem>>) attributes {dimension_semantics = [#tpu.dimension_semantics<parallel>, #tpu.dimension_semantics<arbitrary>], iteration_bounds = array<i64: 1, 1>, scalar_prefetch = 0 : i64, scratch_operands = 1 : i64, tpu.core_type = #tpu.core_type<tc>, window_params = [{transform_indices = @transform_0, window_bounds = array<i64: 512, 128>}, {transform_indices = @transform_1, window_bounds = array<i64: 1, 512>}, {transform_indices = @transform_2, window_bounds = array<i64: 128, 128>}, {transform_indices = @transform_3, window_bounds = array<i64: 1>}, {pipeline_mode = #tpu.pipeline_mode<synchronous>, transform_indices = @transform_4, window_bounds = array<i64: 128, 128>}, {pipeline_mode = #tpu.pipeline_mode<synchronous>, transform_indices = @transform_5, window_bounds = array<i64: 1, 128>}, {pipeline_mode = #tpu.pipeline_mode<synchronous>, transform_indices = @transform_6, window_bounds = array<i64: 128, 128>}, {pipeline_mode = #tpu.pipeline_mode<synchronous>, transform_indices = @transform_7, window_bounds = array<i64: 1, 128>}, {pipeline_mode = #tpu.pipeline_mode<synchronous>, transform_indices = @transform_8, window_bounds = array<i64: 1, 128>}, {pipeline_mode = #tpu.pipeline_mode<synchronous>, transform_indices = @transform_9, window_bounds = array<i64: 1, 128>}, {transform_indices = @transform_10, window_bounds = array<i64: 128, 128>}]} {
    %c0_i32 = arith.constant 0 : i32
    %0 = arith.cmpi eq, %arg1, %c0_i32 : i32
    %1 = arith.extui %0 : i1 to i32
    %c0_i32_0 = arith.constant 0 : i32
    %2 = arith.cmpi ne, %1, %c0_i32_0 : i32
    scf.if %2 {
      %cst_10 = arith.constant 0.000000e+00 : f32
      %21 = vector.broadcast %cst_10 : f32 to vector<128x128xf32>
      %c0_11 = arith.constant 0 : index
      %c0_12 = arith.constant 0 : index
      %22 = vector.load %arg13[%c0_11, %c0_12] : memref<128x128xf32, #tpu.memory_space<vmem>>, vector<128x128xf32>
      tpu.vector_store %arg13[%c0_11, %c0_12], %21 {strides = array<i32>} : memref<128x128xf32, #tpu.memory_space<vmem>>, vector<128x128xf32>,
    } else {
    }
    %c0 = arith.constant 0 : index
    %c0_1 = arith.constant 0 : index
    %3 = vector.load %arg3[%c0, %c0_1] : memref<1x512xi32, #tpu.memory_space<vmem>>, vector<1x512xi32>
    %4 = tpu.iota {dimensions = array<i32: 0>} : vector<128x512xi32>
    %c128_i32 = arith.constant 128 : i32
    %5 = arith.muli %arg0, %c128_i32 : i32
    %6 = vector.broadcast %5 : i32 to vector<128x512xi32>
    %7 = arith.addi %4, %6 : vector<128x512xi32>
    %8 = vector.broadcast %3 : vector<1x512xi32> to vector<128x512xi32>
    %9 = arith.cmpi eq, %7, %8 : vector<128x512xi32>
    %10 = arith.extui %9 : vector<128x512xi1> to vector<128x512xi32>
    %11 = arith.sitofp %10 : vector<128x512xi32> to vector<128x512xf32>
    %12 = arith.truncf %11 : vector<128x512xf32> to vector<128x512xbf16>
    %c0_2 = arith.constant 0 : index
    %c0_3 = arith.constant 0 : index
    %13 = vector.load %arg13[%c0_2, %c0_3] : memref<128x128xf32, #tpu.memory_space<vmem>>, vector<128x128xf32>
    %c0_4 = arith.constant 0 : index
    %c0_5 = arith.constant 0 : index
    %14 = vector.load %arg2[%c0_4, %c0_5] : memref<512x128xbf16, #tpu.memory_space<vmem>>, vector<512x128xbf16>
    %cst = arith.constant dense<0.000000e+00> : vector<128x128xf32>
    %15 = tpu.matmul %12, %14, %cst {dimension_numbers = #tpu.dot_dimension_numbers<[1], [0], [0], [1], [0, 0, 1, 1], [], []>} : vector<128x512xbf16>, vector<512x128xbf16>, vector<128x128xf32> -> vector<128x128xf32>
    %16 = arith.addf %13, %15 : vector<128x128xf32>
    %c0_6 = arith.constant 0 : index
    %c0_7 = arith.constant 0 : index
    %17 = vector.load %arg13[%c0_6, %c0_7] : memref<128x128xf32, #tpu.memory_space<vmem>>, vector<128x128xf32>
    tpu.vector_store %arg13[%c0_6, %c0_7], %16 {strides = array<i32>} : memref<128x128xf32, #tpu.memory_space<vmem>>, vector<128x128xf32>,
    %c0_i32_8 = arith.constant 0 : i32
    %18 = arith.cmpi eq, %arg1, %c0_i32_8 : i32
    %19 = arith.extui %18 : i1 to i32
    %c0_i32_9 = arith.constant 0 : i32
    %20 = arith.cmpi ne, %19, %c0_i32_9 : i32
    scf.if %20 {
      %c0_10 = arith.constant 0 : index
      %c0_11 = arith.constant 0 : index
      %21 = vector.load %arg13[%c0_10, %c0_11] : memref<128x128xf32, #tpu.memory_space<vmem>>, vector<128x128xf32>
      %c0_12 = arith.constant 0 : index
      %22 = memref.load %arg5[%c0_12] : memref<1xf32, #tpu.memory_space<smem>>
      %cst_13 = arith.constant 1.000000e+00 : f32
      %23 = arith.addf %cst_13, %22 : f32
      %c0_14 = arith.constant 0 : index
      %c0_15 = arith.constant 0 : index
      %24 = vector.load %arg4[%c0_14, %c0_15] : memref<128x128xbf16, #tpu.memory_space<vmem>>, vector<128x128xbf16>
      %25 = arith.extf %24 : vector<128x128xbf16> to vector<128x128xf32>
      %26 = vector.broadcast %23 : f32 to vector<128x128xf32>
      %27 = arith.mulf %26, %25 : vector<128x128xf32>
      %28 = arith.addf %21, %27 : vector<128x128xf32>
      %c0_16 = arith.constant 0 : index
      %c0_17 = arith.constant 0 : index
      %29 = vector.load %arg6[%c0_16, %c0_17] : memref<128x128xf32, #tpu.memory_space<vmem>>, vector<128x128xf32>
      %cst_18 = arith.constant dense<0.000000e+00> : vector<128x128xf32>
      %30 = tpu.matmul %28, %29, %cst_18 {dimension_numbers = #tpu.dot_dimension_numbers<[1], [0], [0], [1], [0, 0, 1, 1], [], []>} : vector<128x128xf32>, vector<128x128xf32>, vector<128x128xf32> -> vector<128x128xf32>
      %c0_19 = arith.constant 0 : index
      %c0_20 = arith.constant 0 : index
      %31 = vector.load %arg7[%c0_19, %c0_20] : memref<1x128xf32, #tpu.memory_space<vmem>>, vector<1x128xf32>
      %32 = vector.broadcast %31 : vector<1x128xf32> to vector<128x128xf32>
      %33 = arith.addf %30, %32 : vector<128x128xf32>
      %cst_21 = arith.constant 0.000000e+00 : f32
      %34 = vector.broadcast %cst_21 : f32 to vector<128x128xf32>
      %35 = arith.maximumf %33, %34 : vector<128x128xf32>
      %c0_22 = arith.constant 0 : index
      %c0_23 = arith.constant 0 : index
      %36 = vector.load %arg8[%c0_22, %c0_23] : memref<128x128xf32, #tpu.memory_space<vmem>>, vector<128x128xf32>
      %cst_24 = arith.constant dense<0.000000e+00> : vector<128x128xf32>
      %37 = tpu.matmul %35, %36, %cst_24 {dimension_numbers = #tpu.dot_dimension_numbers<[1], [0], [0], [1], [0, 0, 1, 1], [], []>} : vector<128x128xf32>, vector<128x128xf32>, vector<128x128xf32> -> vector<128x128xf32>
      %c0_25 = arith.constant 0 : index
      %c0_26 = arith.constant 0 : index
      %38 = vector.load %arg9[%c0_25, %c0_26] : memref<1x128xf32, #tpu.memory_space<vmem>>, vector<1x128xf32>
      %39 = vector.broadcast %38 : vector<1x128xf32> to vector<128x128xf32>
      %40 = arith.addf %37, %39 : vector<128x128xf32>
      %cst_27 = arith.constant 0.000000e+00 : f32
      %41 = vector.broadcast %cst_27 : f32 to vector<128x128xf32>
      %42 = arith.maximumf %40, %41 : vector<128x128xf32>
      %c0_28 = arith.constant 0 : index
      %c0_29 = arith.constant 0 : index
      %43 = vector.load %arg10[%c0_28, %c0_29] : memref<1x128xf32, #tpu.memory_space<vmem>>, vector<1x128xf32>
      %44 = vector.broadcast %43 : vector<1x128xf32> to vector<128x128xf32>
      %45 = arith.mulf %42, %44 : vector<128x128xf32>
      %c0_30 = arith.constant 0 : index
      %c0_31 = arith.constant 0 : index
      %46 = vector.load %arg11[%c0_30, %c0_31] : memref<1x128xf32, #tpu.memory_space<vmem>>, vector<1x128xf32>
      %47 = vector.broadcast %46 : vector<1x128xf32> to vector<128x128xf32>
      %48 = arith.addf %45, %47 : vector<128x128xf32>
      %49 = arith.truncf %48 : vector<128x128xf32> to vector<128x128xbf16>
      %c0_32 = arith.constant 0 : index
      %c0_33 = arith.constant 0 : index
      %50 = vector.load %arg12[%c0_32, %c0_33] : memref<128x128xbf16, #tpu.memory_space<vmem>>, vector<128x128xbf16>
      tpu.vector_store %arg12[%c0_32, %c0_33], %49 {strides = array<i32>} : memref<128x128xbf16, #tpu.memory_space<vmem>>, vector<128x128xbf16>,
    } else {
    }
    return
  }
  func.func @transform_0(%arg0: i32, %arg1: i32) -> (i32, i32) {
    %c0_i32 = arith.constant 0 : i32
    %c0_i32_0 = arith.constant 0 : i32
    return %arg1, %c0_i32 : i32, i32
  }
  func.func @transform_1(%arg0: i32, %arg1: i32) -> (i32, i32) {
    %c0_i32 = arith.constant 0 : i32
    %c0_i32_0 = arith.constant 0 : i32
    return %c0_i32, %arg1 : i32, i32
  }
  func.func @transform_2(%arg0: i32, %arg1: i32) -> (i32, i32) {
    %c0_i32 = arith.constant 0 : i32
    %c0_i32_0 = arith.constant 0 : i32
    return %arg0, %c0_i32 : i32, i32
  }
  func.func @transform_3(%arg0: i32, %arg1: i32) -> i32 {
    %c0_i32 = arith.constant 0 : i32
    %c0_i32_0 = arith.constant 0 : i32
    return %c0_i32 : i32
  }
  func.func @transform_4(%arg0: i32, %arg1: i32) -> (i32, i32) {
    %c0_i32 = arith.constant 0 : i32
    %c0_i32_0 = arith.constant 0 : i32
    %c0_i32_1 = arith.constant 0 : i32
    return %c0_i32, %c0_i32_0 : i32, i32
  }
  func.func @transform_5(%arg0: i32, %arg1: i32) -> (i32, i32) {
    %c0_i32 = arith.constant 0 : i32
    %c0_i32_0 = arith.constant 0 : i32
    %c0_i32_1 = arith.constant 0 : i32
    return %c0_i32, %c0_i32_0 : i32, i32
  }
  func.func @transform_6(%arg0: i32, %arg1: i32) -> (i32, i32) {
    %c0_i32 = arith.constant 0 : i32
    %c0_i32_0 = arith.constant 0 : i32
    %c0_i32_1 = arith.constant 0 : i32
    return %c0_i32, %c0_i32_0 : i32, i32
  }
  func.func @transform_7(%arg0: i32, %arg1: i32) -> (i32, i32) {
    %c0_i32 = arith.constant 0 : i32
    %c0_i32_0 = arith.constant 0 : i32
    %c0_i32_1 = arith.constant 0 : i32
    return %c0_i32, %c0_i32_0 : i32, i32
  }
  func.func @transform_8(%arg0: i32, %arg1: i32) -> (i32, i32) {
    %c0_i32 = arith.constant 0 : i32
    %c0_i32_0 = arith.constant 0 : i32
    %c0_i32_1 = arith.constant 0 : i32
    return %c0_i32, %c0_i32_0 : i32, i32
  }
  func.func @transform_9(%arg0: i32, %arg1: i32) -> (i32, i32) {
    %c0_i32 = arith.constant 0 : i32
    %c0_i32_0 = arith.constant 0 : i32
    %c0_i32_1 = arith.constant 0 : i32
    return %c0_i32, %c0_i32_0 : i32, i32
  }
  func.func @transform_10(%arg0: i32, %arg1: i32) -> (i32, i32) {
    %c0_i32 = arith.constant 0 : i32
    %c0_i32_0 = arith.constant 0 : i32
    return %arg0, %c0_i32 : i32, i32
  }
}

module attributes {stable_mosaic.version = 11 : i64} {
  func.func @gin_message_kernel(%arg0: i32, %arg1: memref<128x128xbf16, #tpu.memory_space<vmem>>, %arg2: memref<512x128xf32, #tpu.memory_space<vmem>>, %arg3: memref<512x1xi32, #tpu.memory_space<vmem>>, %arg4: memref<128x128xf32, #tpu.memory_space<vmem>>, %arg5: memref<1x128xf32, #tpu.memory_space<vmem>>, %arg6: memref<512x128xbf16, #tpu.memory_space<vmem>>) attributes {dimension_semantics = [#tpu.dimension_semantics<parallel>], iteration_bounds = array<i64: 1>, scalar_prefetch = 0 : i64, scratch_operands = 0 : i64, tpu.core_type = #tpu.core_type<tc>, window_params = [{pipeline_mode = #tpu.pipeline_mode<synchronous>, transform_indices = @transform_0, window_bounds = array<i64: 128, 128>}, {transform_indices = @transform_1, window_bounds = array<i64: 512, 128>}, {transform_indices = @transform_2, window_bounds = array<i64: 512, 1>}, {pipeline_mode = #tpu.pipeline_mode<synchronous>, transform_indices = @transform_3, window_bounds = array<i64: 128, 128>}, {pipeline_mode = #tpu.pipeline_mode<synchronous>, transform_indices = @transform_4, window_bounds = array<i64: 1, 128>}, {transform_indices = @transform_5, window_bounds = array<i64: 512, 128>}]} {
    %c0 = arith.constant 0 : index
    %c0_0 = arith.constant 0 : index
    %0 = vector.load %arg2[%c0, %c0_0] : memref<512x128xf32, #tpu.memory_space<vmem>>, vector<512x128xf32>
    %c0_1 = arith.constant 0 : index
    %c0_2 = arith.constant 0 : index
    %1 = vector.load %arg4[%c0_1, %c0_2] : memref<128x128xf32, #tpu.memory_space<vmem>>, vector<128x128xf32>
    %cst = arith.constant dense<0.000000e+00> : vector<512x128xf32>
    %2 = tpu.matmul %0, %1, %cst {dimension_numbers = #tpu.dot_dimension_numbers<[1], [0], [0], [1], [0, 0, 1, 1], [], []>} : vector<512x128xf32>, vector<128x128xf32>, vector<512x128xf32> -> vector<512x128xf32>
    %c0_3 = arith.constant 0 : index
    %c0_4 = arith.constant 0 : index
    %3 = vector.load %arg5[%c0_3, %c0_4] : memref<1x128xf32, #tpu.memory_space<vmem>>, vector<1x128xf32>
    %4 = vector.broadcast %3 : vector<1x128xf32> to vector<512x128xf32>
    %5 = arith.addf %2, %4 : vector<512x128xf32>
    %c0_5 = arith.constant 0 : index
    %c0_6 = arith.constant 0 : index
    %6 = vector.load %arg3[%c0_5, %c0_6] : memref<512x1xi32, #tpu.memory_space<vmem>>, vector<512x1xi32>
    %7 = tpu.iota {dimensions = array<i32: 1>} : vector<512x128xi32>
    %8 = vector.broadcast %6 : vector<512x1xi32> to vector<512x128xi32>
    %9 = arith.cmpi eq, %7, %8 : vector<512x128xi32>
    %10 = arith.extui %9 : vector<512x128xi1> to vector<512x128xi32>
    %11 = arith.sitofp %10 : vector<512x128xi32> to vector<512x128xf32>
    %12 = arith.truncf %11 : vector<512x128xf32> to vector<512x128xbf16>
    %c0_7 = arith.constant 0 : index
    %c0_8 = arith.constant 0 : index
    %13 = vector.load %arg1[%c0_7, %c0_8] : memref<128x128xbf16, #tpu.memory_space<vmem>>, vector<128x128xbf16>
    %cst_9 = arith.constant dense<0.000000e+00> : vector<512x128xf32>
    %14 = tpu.matmul %12, %13, %cst_9 {dimension_numbers = #tpu.dot_dimension_numbers<[1], [0], [0], [1], [0, 0, 1, 1], [], []>} : vector<512x128xbf16>, vector<128x128xbf16>, vector<512x128xf32> -> vector<512x128xf32>
    %15 = arith.addf %14, %5 : vector<512x128xf32>
    %cst_10 = arith.constant 0.000000e+00 : f32
    %16 = vector.broadcast %cst_10 : f32 to vector<512x128xf32>
    %17 = arith.maximumf %15, %16 : vector<512x128xf32>
    %18 = arith.truncf %17 : vector<512x128xf32> to vector<512x128xbf16>
    %c0_11 = arith.constant 0 : index
    %c0_12 = arith.constant 0 : index
    %19 = vector.load %arg6[%c0_11, %c0_12] : memref<512x128xbf16, #tpu.memory_space<vmem>>, vector<512x128xbf16>
    tpu.vector_store %arg6[%c0_11, %c0_12], %18 {strides = array<i32>} : memref<512x128xbf16, #tpu.memory_space<vmem>>, vector<512x128xbf16>,
    return
  }
  func.func @transform_0(%arg0: i32) -> (i32, i32) {
    %c0_i32 = arith.constant 0 : i32
    %c0_i32_0 = arith.constant 0 : i32
    %c0_i32_1 = arith.constant 0 : i32
    return %c0_i32, %c0_i32_0 : i32, i32
  }
  func.func @transform_1(%arg0: i32) -> (i32, i32) {
    %c0_i32 = arith.constant 0 : i32
    %c0_i32_0 = arith.constant 0 : i32
    return %arg0, %c0_i32 : i32, i32
  }
  func.func @transform_2(%arg0: i32) -> (i32, i32) {
    %c0_i32 = arith.constant 0 : i32
    %c0_i32_0 = arith.constant 0 : i32
    return %arg0, %c0_i32 : i32, i32
  }
  func.func @transform_3(%arg0: i32) -> (i32, i32) {
    %c0_i32 = arith.constant 0 : i32
    %c0_i32_0 = arith.constant 0 : i32
    %c0_i32_1 = arith.constant 0 : i32
    return %c0_i32, %c0_i32_0 : i32, i32
  }
  func.func @transform_4(%arg0: i32) -> (i32, i32) {
    %c0_i32 = arith.constant 0 : i32
    %c0_i32_0 = arith.constant 0 : i32
    %c0_i32_1 = arith.constant 0 : i32
    return %c0_i32, %c0_i32_0 : i32, i32
  }
  func.func @transform_5(%arg0: i32) -> (i32, i32) {
    %c0_i32 = arith.constant 0 : i32
    %c0_i32_0 = arith.constant 0 : i32
    return %arg0, %c0_i32 : i32, i32
  }
}

module attributes {stable_mosaic.version = 11 : i64} {
  func.func @gin_message_kernel(%arg0: i32, %arg1: memref<128x128xbf16, #tpu.memory_space<vmem>>, %arg2: memref<512x128xf32, #tpu.memory_space<vmem>>, %arg3: memref<512x1xi32, #tpu.memory_space<vmem>>, %arg4: memref<128x128xf32, #tpu.memory_space<vmem>>, %arg5: memref<1x128xf32, #tpu.memory_space<vmem>>, %arg6: memref<512x128xbf16, #tpu.memory_space<vmem>>) attributes {dimension_semantics = [#tpu.dimension_semantics<parallel>], iteration_bounds = array<i64: 1>, scalar_prefetch = 0 : i64, scratch_operands = 0 : i64, tpu.core_type = #tpu.core_type<tc>, window_params = [{pipeline_mode = #tpu.pipeline_mode<synchronous>, transform_indices = @transform_0, window_bounds = array<i64: 128, 128>}, {transform_indices = @transform_1, window_bounds = array<i64: 512, 128>}, {transform_indices = @transform_2, window_bounds = array<i64: 512, 1>}, {pipeline_mode = #tpu.pipeline_mode<synchronous>, transform_indices = @transform_3, window_bounds = array<i64: 128, 128>}, {pipeline_mode = #tpu.pipeline_mode<synchronous>, transform_indices = @transform_4, window_bounds = array<i64: 1, 128>}, {transform_indices = @transform_5, window_bounds = array<i64: 512, 128>}]} {
    %c0 = arith.constant 0 : index
    %c0_0 = arith.constant 0 : index
    %0 = vector.load %arg2[%c0, %c0_0] : memref<512x128xf32, #tpu.memory_space<vmem>>, vector<512x128xf32>
    %c0_1 = arith.constant 0 : index
    %c0_2 = arith.constant 0 : index
    %1 = vector.load %arg4[%c0_1, %c0_2] : memref<128x128xf32, #tpu.memory_space<vmem>>, vector<128x128xf32>
    %cst = arith.constant dense<0.000000e+00> : vector<512x128xf32>
    %2 = tpu.matmul %0, %1, %cst {dimension_numbers = #tpu.dot_dimension_numbers<[1], [0], [0], [1], [0, 0, 1, 1], [], []>} : vector<512x128xf32>, vector<128x128xf32>, vector<512x128xf32> -> vector<512x128xf32>
    %c0_3 = arith.constant 0 : index
    %c0_4 = arith.constant 0 : index
    %3 = vector.load %arg5[%c0_3, %c0_4] : memref<1x128xf32, #tpu.memory_space<vmem>>, vector<1x128xf32>
    %4 = vector.broadcast %3 : vector<1x128xf32> to vector<512x128xf32>
    %5 = arith.addf %2, %4 : vector<512x128xf32>
    %c0_5 = arith.constant 0 : index
    %c0_6 = arith.constant 0 : index
    %6 = vector.load %arg3[%c0_5, %c0_6] : memref<512x1xi32, #tpu.memory_space<vmem>>, vector<512x1xi32>
    %7 = tpu.iota {dimensions = array<i32: 1>} : vector<512x128xi32>
    %8 = vector.broadcast %6 : vector<512x1xi32> to vector<512x128xi32>
    %9 = arith.cmpi eq, %7, %8 : vector<512x128xi32>
    %10 = arith.extui %9 : vector<512x128xi1> to vector<512x128xi32>
    %11 = arith.sitofp %10 : vector<512x128xi32> to vector<512x128xf32>
    %12 = arith.truncf %11 : vector<512x128xf32> to vector<512x128xbf16>
    %c0_7 = arith.constant 0 : index
    %c0_8 = arith.constant 0 : index
    %13 = vector.load %arg1[%c0_7, %c0_8] : memref<128x128xbf16, #tpu.memory_space<vmem>>, vector<128x128xbf16>
    %cst_9 = arith.constant dense<0.000000e+00> : vector<512x128xf32>
    %14 = tpu.matmul %12, %13, %cst_9 {dimension_numbers = #tpu.dot_dimension_numbers<[1], [0], [0], [1], [0, 0, 1, 1], [], []>} : vector<512x128xbf16>, vector<128x128xbf16>, vector<512x128xf32> -> vector<512x128xf32>
    %15 = arith.addf %14, %5 : vector<512x128xf32>
    %cst_10 = arith.constant 0.000000e+00 : f32
    %16 = vector.broadcast %cst_10 : f32 to vector<512x128xf32>
    %17 = arith.maximumf %15, %16 : vector<512x128xf32>
    %18 = arith.truncf %17 : vector<512x128xf32> to vector<512x128xbf16>
    %c0_11 = arith.constant 0 : index
    %c0_12 = arith.constant 0 : index
    %19 = vector.load %arg6[%c0_11, %c0_12] : memref<512x128xbf16, #tpu.memory_space<vmem>>, vector<512x128xbf16>
    tpu.vector_store %arg6[%c0_11, %c0_12], %18 {strides = array<i32>} : memref<512x128xbf16, #tpu.memory_space<vmem>>, vector<512x128xbf16>,
    return
  }
  func.func @transform_0(%arg0: i32) -> (i32, i32) {
    %c0_i32 = arith.constant 0 : i32
    %c0_i32_0 = arith.constant 0 : i32
    %c0_i32_1 = arith.constant 0 : i32
    return %c0_i32, %c0_i32_0 : i32, i32
  }
  func.func @transform_1(%arg0: i32) -> (i32, i32) {
    %c0_i32 = arith.constant 0 : i32
    %c0_i32_0 = arith.constant 0 : i32
    return %arg0, %c0_i32 : i32, i32
  }
  func.func @transform_2(%arg0: i32) -> (i32, i32) {
    %c0_i32 = arith.constant 0 : i32
    %c0_i32_0 = arith.constant 0 : i32
    return %arg0, %c0_i32 : i32, i32
  }
  func.func @transform_3(%arg0: i32) -> (i32, i32) {
    %c0_i32 = arith.constant 0 : i32
    %c0_i32_0 = arith.constant 0 : i32
    %c0_i32_1 = arith.constant 0 : i32
    return %c0_i32, %c0_i32_0 : i32, i32
  }
  func.func @transform_4(%arg0: i32) -> (i32, i32) {
    %c0_i32 = arith.constant 0 : i32
    %c0_i32_0 = arith.constant 0 : i32
    %c0_i32_1 = arith.constant 0 : i32
    return %c0_i32, %c0_i32_0 : i32, i32
  }
  func.func @transform_5(%arg0: i32) -> (i32, i32) {
    %c0_i32 = arith.constant 0 : i32
    %c0_i32_0 = arith.constant 0 : i32
    return %arg0, %c0_i32 : i32, i32
  }
}

module attributes {stable_mosaic.version = 11 : i64} {
  func.func @head_kernel(%arg0: i32, %arg1: memref<1x128xi32, #tpu.memory_space<vmem>>, %arg2: memref<128x128xbf16, #tpu.memory_space<vmem>>, %arg3: memref<128x128xbf16, #tpu.memory_space<vmem>>, %arg4: memref<128x128xbf16, #tpu.memory_space<vmem>>, %arg5: memref<384x128xf32, #tpu.memory_space<vmem>>, %arg6: memref<1x128xf32, #tpu.memory_space<vmem>>, %arg7: memref<128x128xf32, #tpu.memory_space<vmem>>, %arg8: memref<1x128xf32, #tpu.memory_space<vmem>>, %arg9: memref<8x128xf32, #tpu.memory_space<vmem>>, %arg10: memref<8x384xf32, #tpu.memory_space<vmem>>) attributes {dimension_semantics = [#tpu.dimension_semantics<arbitrary>], iteration_bounds = array<i64: 1>, scalar_prefetch = 0 : i64, scratch_operands = 1 : i64, tpu.core_type = #tpu.core_type<tc>, window_params = [{transform_indices = @transform_0, window_bounds = array<i64: 1, 128>}, {transform_indices = @transform_1, window_bounds = array<i64: 128, 128>}, {transform_indices = @transform_2, window_bounds = array<i64: 128, 128>}, {transform_indices = @transform_3, window_bounds = array<i64: 128, 128>}, {pipeline_mode = #tpu.pipeline_mode<synchronous>, transform_indices = @transform_4, window_bounds = array<i64: 384, 128>}, {pipeline_mode = #tpu.pipeline_mode<synchronous>, transform_indices = @transform_5, window_bounds = array<i64: 1, 128>}, {pipeline_mode = #tpu.pipeline_mode<synchronous>, transform_indices = @transform_6, window_bounds = array<i64: 128, 128>}, {pipeline_mode = #tpu.pipeline_mode<synchronous>, transform_indices = @transform_7, window_bounds = array<i64: 1, 128>}, {pipeline_mode = #tpu.pipeline_mode<synchronous>, transform_indices = @transform_8, window_bounds = array<i64: 8, 128>}]} {
    %c0_i32 = arith.constant 0 : i32
    %0 = arith.cmpi eq, %arg0, %c0_i32 : i32
    %1 = arith.extui %0 : i1 to i32
    %c0_i32_0 = arith.constant 0 : i32
    %2 = arith.cmpi ne, %1, %c0_i32_0 : i32
    scf.if %2 {
      %cst_14 = arith.constant 0.000000e+00 : f32
      %21 = vector.broadcast %cst_14 : f32 to vector<8x384xf32>
      %c0_15 = arith.constant 0 : index
      %c0_16 = arith.constant 0 : index
      %22 = vector.load %arg10[%c0_15, %c0_16] : memref<8x384xf32, #tpu.memory_space<vmem>>, vector<8x384xf32>
      tpu.vector_store %arg10[%c0_15, %c0_16], %21 {strides = array<i32>} : memref<8x384xf32, #tpu.memory_space<vmem>>, vector<8x384xf32>,
    } else {
    }
    %c0 = arith.constant 0 : index
    %c0_1 = arith.constant 0 : index
    %3 = vector.load %arg1[%c0, %c0_1] : memref<1x128xi32, #tpu.memory_space<vmem>>, vector<1x128xi32>
    %4 = tpu.iota {dimensions = array<i32: 0>} : vector<8x128xi32>
    %5 = vector.broadcast %3 : vector<1x128xi32> to vector<8x128xi32>
    %6 = arith.cmpi eq, %4, %5 : vector<8x128xi32>
    %7 = arith.extui %6 : vector<8x128xi1> to vector<8x128xi32>
    %8 = arith.sitofp %7 : vector<8x128xi32> to vector<8x128xf32>
    %9 = arith.truncf %8 : vector<8x128xf32> to vector<8x128xbf16>
    %c0_2 = arith.constant 0 : index
    %c0_3 = arith.constant 0 : index
    %10 = vector.load %arg2[%c0_2, %c0_3] : memref<128x128xbf16, #tpu.memory_space<vmem>>, vector<128x128xbf16>
    %c0_4 = arith.constant 0 : index
    %c0_5 = arith.constant 0 : index
    %11 = vector.load %arg3[%c0_4, %c0_5] : memref<128x128xbf16, #tpu.memory_space<vmem>>, vector<128x128xbf16>
    %c0_6 = arith.constant 0 : index
    %c0_7 = arith.constant 0 : index
    %12 = vector.load %arg4[%c0_6, %c0_7] : memref<128x128xbf16, #tpu.memory_space<vmem>>, vector<128x128xbf16>
    %13 = tpu.concatenate %10, %11, %12 in 1 : vector<128x128xbf16>, vector<128x128xbf16>, vector<128x128xbf16> -> vector<128x384xbf16>
    %c0_8 = arith.constant 0 : index
    %c0_9 = arith.constant 0 : index
    %14 = vector.load %arg10[%c0_8, %c0_9] : memref<8x384xf32, #tpu.memory_space<vmem>>, vector<8x384xf32>
    %cst = arith.constant dense<0.000000e+00> : vector<8x384xf32>
    %15 = tpu.matmul %9, %13, %cst {dimension_numbers = #tpu.dot_dimension_numbers<[1], [0], [0], [1], [0, 0, 1, 1], [], []>} : vector<8x128xbf16>, vector<128x384xbf16>, vector<8x384xf32> -> vector<8x384xf32>
    %16 = arith.addf %14, %15 : vector<8x384xf32>
    %c0_10 = arith.constant 0 : index
    %c0_11 = arith.constant 0 : index
    %17 = vector.load %arg10[%c0_10, %c0_11] : memref<8x384xf32, #tpu.memory_space<vmem>>, vector<8x384xf32>
    tpu.vector_store %arg10[%c0_10, %c0_11], %16 {strides = array<i32>} : memref<8x384xf32, #tpu.memory_space<vmem>>, vector<8x384xf32>,
    %c0_i32_12 = arith.constant 0 : i32
    %18 = arith.cmpi eq, %arg0, %c0_i32_12 : i32
    %19 = arith.extui %18 : i1 to i32
    %c0_i32_13 = arith.constant 0 : i32
    %20 = arith.cmpi ne, %19, %c0_i32_13 : i32
    scf.if %20 {
      %c0_14 = arith.constant 0 : index
      %c0_15 = arith.constant 0 : index
      %21 = vector.load %arg10[%c0_14, %c0_15] : memref<8x384xf32, #tpu.memory_space<vmem>>, vector<8x384xf32>
      %c0_16 = arith.constant 0 : index
      %c0_17 = arith.constant 0 : index
      %22 = vector.load %arg5[%c0_16, %c0_17] : memref<384x128xf32, #tpu.memory_space<vmem>>, vector<384x128xf32>
      %cst_18 = arith.constant dense<0.000000e+00> : vector<8x128xf32>
      %23 = tpu.matmul %21, %22, %cst_18 {dimension_numbers = #tpu.dot_dimension_numbers<[1], [0], [0], [1], [0, 0, 1, 1], [], []>} : vector<8x384xf32>, vector<384x128xf32>, vector<8x128xf32> -> vector<8x128xf32>
      %c0_19 = arith.constant 0 : index
      %c0_20 = arith.constant 0 : index
      %24 = vector.load %arg6[%c0_19, %c0_20] : memref<1x128xf32, #tpu.memory_space<vmem>>, vector<1x128xf32>
      %25 = vector.broadcast %24 : vector<1x128xf32> to vector<8x128xf32>
      %26 = arith.addf %23, %25 : vector<8x128xf32>
      %cst_21 = arith.constant 0.000000e+00 : f32
      %27 = vector.broadcast %cst_21 : f32 to vector<8x128xf32>
      %28 = arith.cmpf ogt, %26, %27 : vector<8x128xf32>
      %cst_22 = arith.constant 0.00999999977 : f32
      %29 = vector.broadcast %cst_22 : f32 to vector<8x128xf32>
      %30 = arith.mulf %29, %26 : vector<8x128xf32>
      %31 = arith.select %28, %26, %30 : vector<8x128xi1>, vector<8x128xf32>
      %c0_23 = arith.constant 0 : index
      %c0_24 = arith.constant 0 : index
      %32 = vector.load %arg7[%c0_23, %c0_24] : memref<128x128xf32, #tpu.memory_space<vmem>>, vector<128x128xf32>
      %cst_25 = arith.constant dense<0.000000e+00> : vector<8x128xf32>
      %33 = tpu.matmul %31, %32, %cst_25 {dimension_numbers = #tpu.dot_dimension_numbers<[1], [0], [0], [1], [0, 0, 1, 1], [], []>} : vector<8x128xf32>, vector<128x128xf32>, vector<8x128xf32> -> vector<8x128xf32>
      %c0_26 = arith.constant 0 : index
      %c0_27 = arith.constant 0 : index
      %34 = vector.load %arg8[%c0_26, %c0_27] : memref<1x128xf32, #tpu.memory_space<vmem>>, vector<1x128xf32>
      %35 = vector.broadcast %34 : vector<1x128xf32> to vector<8x128xf32>
      %36 = arith.addf %33, %35 : vector<8x128xf32>
      %c0_28 = arith.constant 0 : index
      %c0_29 = arith.constant 0 : index
      %37 = vector.load %arg9[%c0_28, %c0_29] : memref<8x128xf32, #tpu.memory_space<vmem>>, vector<8x128xf32>
      tpu.vector_store %arg9[%c0_28, %c0_29], %36 {strides = array<i32>} : memref<8x128xf32, #tpu.memory_space<vmem>>, vector<8x128xf32>,
    } else {
    }
    return
  }
  func.func @transform_0(%arg0: i32) -> (i32, i32) {
    %c0_i32 = arith.constant 0 : i32
    %c0_i32_0 = arith.constant 0 : i32
    return %c0_i32, %arg0 : i32, i32
  }
  func.func @transform_1(%arg0: i32) -> (i32, i32) {
    %c0_i32 = arith.constant 0 : i32
    %c0_i32_0 = arith.constant 0 : i32
    return %arg0, %c0_i32 : i32, i32
  }
  func.func @transform_2(%arg0: i32) -> (i32, i32) {
    %c0_i32 = arith.constant 0 : i32
    %c0_i32_0 = arith.constant 0 : i32
    return %arg0, %c0_i32 : i32, i32
  }
  func.func @transform_3(%arg0: i32) -> (i32, i32) {
    %c0_i32 = arith.constant 0 : i32
    %c0_i32_0 = arith.constant 0 : i32
    return %arg0, %c0_i32 : i32, i32
  }
  func.func @transform_4(%arg0: i32) -> (i32, i32) {
    %c0_i32 = arith.constant 0 : i32
    %c0_i32_0 = arith.constant 0 : i32
    %c0_i32_1 = arith.constant 0 : i32
    return %c0_i32, %c0_i32_0 : i32, i32
  }
  func.func @transform_5(%arg0: i32) -> (i32, i32) {
    %c0_i32 = arith.constant 0 : i32
    %c0_i32_0 = arith.constant 0 : i32
    %c0_i32_1 = arith.constant 0 : i32
    return %c0_i32, %c0_i32_0 : i32, i32
  }
  func.func @transform_6(%arg0: i32) -> (i32, i32) {
    %c0_i32 = arith.constant 0 : i32
    %c0_i32_0 = arith.constant 0 : i32
    %c0_i32_1 = arith.constant 0 : i32
    return %c0_i32, %c0_i32_0 : i32, i32
  }
  func.func @transform_7(%arg0: i32) -> (i32, i32) {
    %c0_i32 = arith.constant 0 : i32
    %c0_i32_0 = arith.constant 0 : i32
    %c0_i32_1 = arith.constant 0 : i32
    return %c0_i32, %c0_i32_0 : i32, i32
  }
  func.func @transform_8(%arg0: i32) -> (i32, i32) {
    %c0_i32 = arith.constant 0 : i32
    %c0_i32_0 = arith.constant 0 : i32
    %c0_i32_1 = arith.constant 0 : i32
    return %c0_i32, %c0_i32_0 : i32, i32
  }
}

</mosaic_0001>

<llo_original>
// kernel: _lambda_.8
$region0: #{_lambda_.8}
  #allocation0 [shape = 'u32[]', space=smem, size = 0x4, offset = 0x4, fixed_abs, tag = 'smem constant byte address 0x4 - core index']
  #allocation1 [shape = 'u32[144,128]{1,0:T(1,128)}', space=vmem, size = 0x12000, scoped, tag = 'internal scratch']
  #allocation2 [shape = 'f32[128,128]{1,0:T(8,128)}', space=vmem, size = 0x10000, scoped, tag = 'scratch operand']
  #allocation3 [shape = 'f32[1]{0:T(128)S(6)}', space=smem, size = 0x200, scoped, tag = 'scoped memory for _lambda_.8']
  %s0 = inlined_call_operand.vmem [shape: bf16[512,128], index: 0, kind: input, shape index: {}]
  %s1 = inlined_call_operand.vmem [shape: s32[1,512], index: 1, kind: input, shape index: {}]
  %s2 = inlined_call_operand.vmem [shape: bf16[128,128], index: 2, kind: input, shape index: {}]
  %s3 = inlined_call_operand.<no memory space> [shape: f32[1], index: 3, kind: input, shape index: {}]
  %s4 = inlined_call_operand.vmem [shape: f32[128,128], index: 4, kind: input, shape index: {}]
  %s5 = inlined_call_operand.vmem [shape: f32[1,128], index: 5, kind: input, shape index: {}]
  %s6 = inlined_call_operand.vmem [shape: f32[128,128], index: 6, kind: input, shape index: {}]
  %s7 = inlined_call_operand.vmem [shape: f32[1,128], index: 7, kind: input, shape index: {}]
  %s8 = inlined_call_operand.vmem [shape: f32[1,128], index: 8, kind: input, shape index: {}]
  %s9 = inlined_call_operand.vmem [shape: f32[1,128], index: 9, kind: input, shape index: {}]
  %s10 = inlined_call_operand.vmem [shape: bf16[128,128], index: 10, kind: output, shape index: {}]
  %s11 = sld [smem:[#allocation0]]
  $region58: #{_lambda_.8} parent=0
    _
  %s13 = ssub.s32 1, %s11
  %s14 = scalar_select 0, %s13, %s11
  %15 = sst [smem:[#allocation3]] %s3
  // Predicated region
  $region2: #{_lambda_.8} parent=0 // pred_check
    _
  $region3: #{_lambda_.8} parent=0 // pred_check_branch
    %17 = sbr.rel (0) target = $region5
  $region4: #{_lambda_.8} parent=0 // pred_region
    _
  $region5: #{_lambda_.8} parent=0 // pred_fallthru
    _
  // Predicated region
  $region6: #{_lambda_.8} parent=0 // pred_check
    _
  $region7: #{_lambda_.8} parent=0 // pred_check_branch
    %19 = sbr.rel (0) target = $region9
  $region8: #{_lambda_.8} parent=0 // pred_region
    _
  $region9: #{_lambda_.8} parent=0 // pred_fallthru
    _
  // Predicated region
  $region10: #{_lambda_.8} parent=0 // pred_check
    _
  $region11: #{_lambda_.8} parent=0 // pred_check_branch
    %21 = sbr.rel (0) target = $region13
  $region12: #{_lambda_.8} parent=0 // pred_region
    _
  $region13: #{_lambda_.8} parent=0 // pred_fallthru
    _
  // Predicated region
  $region14: #{_lambda_.8} parent=0 // pred_check
    _
  $region15: #{_lambda_.8} parent=0 // pred_check_branch
    %23 = sbr.rel (0) target = $region17
  $region16: #{_lambda_.8} parent=0 // pred_region
    _
  $region17: #{_lambda_.8} parent=0 // pred_fallthru
    _
  // Predicated region
  $region18: #{_lambda_.8} parent=0 // pred_check
    _
  $region19: #{_lambda_.8} parent=0 // pred_check_branch
    %25 = sbr.rel (0) target = $region21
  $region20: #{_lambda_.8} parent=0 // pred_region
    _
  $region21: #{_lambda_.8} parent=0 // pred_fallthru
    _
  // Predicated region
  $region22: #{_lambda_.8} parent=0 // pred_check
    _
  $region23: #{_lambda_.8} parent=0 // pred_check_branch
    %27 = sbr.rel (0) target = $region25
  $region24: #{_lambda_.8} parent=0 // pred_region
    _
  $region25: #{_lambda_.8} parent=0 // pred_fallthru
    _
  // Predicated region
  $region26: #{_lambda_.8} parent=0 // pred_check
    _
  $region27: #{_lambda_.8} parent=0 // pred_check_branch
    %29 = sbr.rel (0) target = $region29
  $region28: #{_lambda_.8} parent=0 // pred_region
    _
  $region29: #{_lambda_.8} parent=0 // pred_fallthru
    _
  // Predicated region
  $region30: #{_lambda_.8} parent=0 // pred_check
    _
  $region31: #{_lambda_.8} parent=0 // pred_check_branch
    %31 = sbr.rel (0) target = $region33
  $region32: #{_lambda_.8} parent=0 // pred_region
    _
  $region33: #{_lambda_.8} parent=0 // pred_fallthru
    _
  // Predicated region
  $region34: #{_lambda_.8} parent=0 // pred_check
    _
  $region35: #{_lambda_.8} parent=0 // pred_check_branch
    %33 = sbr.rel (0) target = $region37
  $region36: #{_lambda_.8} parent=0 // pred_region
    _
  $region37: #{_lambda_.8} parent=0 // pred_fallthru
    _
  // Predicated region
  $region38: #{_lambda_.8} parent=0 // pred_check
    _
  $region39: #{_lambda_.8} parent=0 // pred_check_branch
    %35 = sbr.rel (0) target = $region41
  $region40: #{_lambda_.8} parent=0 // pred_region
    _
  $region41: #{_lambda_.8} parent=0 // pred_fallthru
    _
  %p37 = scmp.eq.s32.totalorder 0, 0
  // Predicated region
  $region42: #{_lambda_.8} parent=0 // pred_check
    %p38 = pneg %p37
  $region43: #{_lambda_.8} parent=0 // pred_check_branch
    %40 = sbr.rel (%p38) target = $region45
  $region44: #{_lambda_.8} parent=0 // pred_region
    %41 = vst [vmem:[#allocation2] sm:$0xff] 0.0
    %42 = vst [vmem:[#allocation2 + $0x8] sm:$0xff] 0.0
    %43 = vst [vmem:[#allocation2 + $0x10] sm:$0xff] 0.0
    %44 = vst [vmem:[#allocation2 + $0x18] sm:$0xff] 0.0
    %45 = vst [vmem:[#allocation2 + $0x20] sm:$0xff] 0.0
    %46 = vst [vmem:[#allocation2 + $0x28] sm:$0xff] 0.0
    %47 = vst [vmem:[#allocation2 + $0x30] sm:$0xff] 0.0
    %48 = vst [vmem:[#allocation2 + $0x38] sm:$0xff] 0.0
    %49 = vst [vmem:[#allocation2 + $0x40] sm:$0xff] 0.0
    %50 = vst [vmem:[#allocation2 + $0x48] sm:$0xff] 0.0
    %51 = vst [vmem:[#allocation2 + $0x50] sm:$0xff] 0.0
    %52 = vst [vmem:[#allocation2 + $0x58] sm:$0xff] 0.0
    %53 = vst [vmem:[#allocation2 + $0x60] sm:$0xff] 0.0
    %54 = vst [vmem:[#allocation2 + $0x68] sm:$0xff] 0.0
    %55 = vst [vmem:[#allocation2 + $0x70] sm:$0xff] 0.0
    %56 = vst [vmem:[#allocation2 + $0x78] sm:$0xff] 0.0
  $region45: #{_lambda_.8} parent=0 // pred_fallthru
    _
  %v57 = vld [vmem:[%s1] sm:$0xf]
  %v58 = vlaneseq
  %v59 = vshrl.u32 %v58, 7
  %v60 = vadd.s32 %v59, 8
  %v61 = vadd.s32 %v59, 16
  %v62 = vadd.s32 %v59, 24
  %v63 = vadd.s32 %v59, 32
  %v64 = vadd.s32 %v59, 40
  %v65 = vadd.s32 %v59, 48
  %v66 = vadd.s32 %v59, 56
  %v67 = vadd.s32 %v59, 64
  %v68 = vadd.s32 %v59, 72
  %v69 = vadd.s32 %v59, 80
  %v70 = vadd.s32 %v59, 88
  %v71 = vadd.s32 %v59, 96
  %v72 = vadd.s32 %v59, 104
  %v73 = vadd.s32 %v59, 112
  %v74 = vadd.s32 %v59, 120
  %s75 = smul.u32 0, 128
  %v76 = vstv %s75
  %v77 = vadd.s32 %v59, %v76
  %v78 = vadd.s32 %v60, %v76
  %v79 = vadd.s32 %v61, %v76
  %v80 = vadd.s32 %v62, %v76
  %v81 = vadd.s32 %v63, %v76
  %v82 = vadd.s32 %v64, %v76
  %v83 = vadd.s32 %v65, %v76
  %v84 = vadd.s32 %v66, %v76
  %v85 = vadd.s32 %v67, %v76
  %v86 = vadd.s32 %v68, %v76
  %v87 = vadd.s32 %v69, %v76
  %v88 = vadd.s32 %v70, %v76
  %v89 = vadd.s32 %v71, %v76
  %v90 = vadd.s32 %v72, %v76
  %v91 = vadd.s32 %v73, %v76
  %v92 = vadd.s32 %v74, %v76
  %v93 = vlaneseq
  %v94 = vshrl.u32 %v93, 7
  %v95 = vsub.s32 0, %v94
  %v96 = vrot.slane %v57, %v95
  %v97 = vlaneseq
  %v98 = vshrl.u32 %v97, 7
  %v99 = vsub.s32 1, %v98
  %v100 = vrot.slane %v57, %v99
  %v101 = vlaneseq
  %v102 = vshrl.u32 %v101, 7
  %v103 = vsub.s32 2, %v102
  %v104 = vrot.slane %v57, %v103
  %v105 = vlaneseq
  %v106 = vshrl.u32 %v105, 7
  %v107 = vsub.s32 3, %v106
  %v108 = vrot.slane %v57, %v107
  %vm109 = vcmp.eq.s32.totalorder %v77, %v96
  %vm110 = vcmp.eq.s32.totalorder %v77, %v100
  %vm111 = vcmp.eq.s32.totalorder %v77, %v104
  %vm112 = vcmp.eq.s32.totalorder %v77, %v108
  %vm113 = vcmp.eq.s32.totalorder %v78, %v96
  %vm114 = vcmp.eq.s32.totalorder %v78, %v100
  %vm115 = vcmp.eq.s32.totalorder %v78, %v104
  %vm116 = vcmp.eq.s32.totalorder %v78, %v108
  %vm117 = vcmp.eq.s32.totalorder %v79, %v96
  %vm118 = vcmp.eq.s32.totalorder %v79, %v100
  %vm119 = vcmp.eq.s32.totalorder %v79, %v104
  %vm120 = vcmp.eq.s32.totalorder %v79, %v108
  %vm121 = vcmp.eq.s32.totalorder %v80, %v96
  %vm122 = vcmp.eq.s32.totalorder %v80, %v100
  %vm123 = vcmp.eq.s32.totalorder %v80, %v104
  %vm124 = vcmp.eq.s32.totalorder %v80, %v108
  %vm125 = vcmp.eq.s32.totalorder %v81, %v96
  %vm126 = vcmp.eq.s32.totalorder %v81, %v100
  %vm127 = vcmp.eq.s32.totalorder %v81, %v104
  %vm128 = vcmp.eq.s32.totalorder %v81, %v108
  %vm129 = vcmp.eq.s32.totalorder %v82, %v96
  %vm130 = vcmp.eq.s32.totalorder %v82, %v100
  %vm131 = vcmp.eq.s32.totalorder %v82, %v104
  %vm132 = vcmp.eq.s32.totalorder %v82, %v108
  %vm133 = vcmp.eq.s32.totalorder %v83, %v96
  %vm134 = vcmp.eq.s32.totalorder %v83, %v100
  %vm135 = vcmp.eq.s32.totalorder %v83, %v104
  %vm136 = vcmp.eq.s32.totalorder %v83, %v108
  %vm137 = vcmp.eq.s32.totalorder %v84, %v96
  %vm138 = vcmp.eq.s32.totalorder %v84, %v100
  %vm139 = vcmp.eq.s32.totalorder %v84, %v104
  %vm140 = vcmp.eq.s32.totalorder %v84, %v108
  %vm141 = vcmp.eq.s32.totalorder %v85, %v96
  %vm142 = vcmp.eq.s32.totalorder %v85, %v100
  %vm143 = vcmp.eq.s32.totalorder %v85, %v104
  %vm144 = vcmp.eq.s32.totalorder %v85, %v108
  %vm145 = vcmp.eq.s32.totalorder %v86, %v96
  %vm146 = vcmp.eq.s32.totalorder %v86, %v100
  %vm147 = vcmp.eq.s32.totalorder %v86, %v104
  %vm148 = vcmp.eq.s32.totalorder %v86, %v108
  %vm149 = vcmp.eq.s32.totalorder %v87, %v96
  %vm150 = vcmp.eq.s32.totalorder %v87, %v100
  %vm151 = vcmp.eq.s32.totalorder %v87, %v104
  %vm152 = vcmp.eq.s32.totalorder %v87, %v108
  %vm153 = vcmp.eq.s32.totalorder %v88, %v96
  %vm154 = vcmp.eq.s32.totalorder %v88, %v100
  %vm155 = vcmp.eq.s32.totalorder %v88, %v104
  %vm156 = vcmp.eq.s32.totalorder %v88, %v108
  %vm157 = vcmp.eq.s32.totalorder %v89, %v96
  %vm158 = vcmp.eq.s32.totalorder %v89, %v100
  %vm159 = vcmp.eq.s32.totalorder %v89, %v104
  %vm160 = vcmp.eq.s32.totalorder %v89, %v108
  %vm161 = vcmp.eq.s32.totalorder %v90, %v96
  %vm162 = vcmp.eq.s32.totalorder %v90, %v100
  %vm163 = vcmp.eq.s32.totalorder %v90, %v104
  %vm164 = vcmp.eq.s32.totalorder %v90, %v108
  %vm165 = vcmp.eq.s32.totalorder %v91, %v96
  %vm166 = vcmp.eq.s32.totalorder %v91, %v100
  %vm167 = vcmp.eq.s32.totalorder %v91, %v104
  %vm168 = vcmp.eq.s32.totalorder %v91, %v108
  %vm169 = vcmp.eq.s32.totalorder %v92, %v96
  %vm170 = vcmp.eq.s32.totalorder %v92, %v100
  %vm171 = vcmp.eq.s32.totalorder %v92, %v104
  %vm172 = vcmp.eq.s32.totalorder %v92, %v108
  %v173 = vsel %vm109, 1, 0
  %v174 = vsel %vm110, 1, 0
  %v175 = vsel %vm111, 1, 0
  %v176 = vsel %vm112, 1, 0
  %v177 = vsel %vm113, 1, 0
  %v178 = vsel %vm114, 1, 0
  %v179 = vsel %vm115, 1, 0
  %v180 = vsel %vm116, 1, 0
  %v181 = vsel %vm117, 1, 0
  %v182 = vsel %vm118, 1, 0
  %v183 = vsel %vm119, 1, 0
  %v184 = vsel %vm120, 1, 0
  %v185 = vsel %vm121, 1, 0
  %v186 = vsel %vm122, 1, 0
  %v187 = vsel %vm123, 1, 0
  %v188 = vsel %vm124, 1, 0
  %v189 = vsel %vm125, 1, 0
  %v190 = vsel %vm126, 1, 0
  %v191 = vsel %vm127, 1, 0
  %v192 = vsel %vm128, 1, 0
  %v193 = vsel %vm129, 1, 0
  %v194 = vsel %vm130, 1, 0
  %v195 = vsel %vm131, 1, 0
  %v196 = vsel %vm132, 1, 0
  %v197 = vsel %vm133, 1, 0
  %v198 = vsel %vm134, 1, 0
  %v199 = vsel %vm135, 1, 0
  %v200 = vsel %vm136, 1, 0
  %v201 = vsel %vm137, 1, 0
  %v202 = vsel %vm138, 1, 0
  %v203 = vsel %vm139, 1, 0
  %v204 = vsel %vm140, 1, 0
  %v205 = vsel %vm141, 1, 0
  %v206 = vsel %vm142, 1, 0
  %v207 = vsel %vm143, 1, 0
  %v208 = vsel %vm144, 1, 0
  %v209 = vsel %vm145, 1, 0
  %v210 = vsel %vm146, 1, 0
  %v211 = vsel %vm147, 1, 0
  %v212 = vsel %vm148, 1, 0
  %v213 = vsel %vm149, 1, 0
  %v214 = vsel %vm150, 1, 0
  %v215 = vsel %vm151, 1, 0
  %v216 = vsel %vm152, 1, 0
  %v217 = vsel %vm153, 1, 0
  %v218 = vsel %vm154, 1, 0
  %v219 = vsel %vm155, 1, 0
  %v220 = vsel %vm156, 1, 0
  %v221 = vsel %vm157, 1, 0
  %v222 = vsel %vm158, 1, 0
  %v223 = vsel %vm159, 1, 0
  %v224 = vsel %vm160, 1, 0
  %v225 = vsel %vm161, 1, 0
  %v226 = vsel %vm162, 1, 0
  %v227 = vsel %vm163, 1, 0
  %v228 = vsel %vm164, 1, 0
  %v229 = vsel %vm165, 1, 0
  %v230 = vsel %vm166, 1, 0
  %v231 = vsel %vm167, 1, 0
  %v232 = vsel %vm168, 1, 0
  %v233 = vsel %vm169, 1, 0
  %v234 = vsel %vm170, 1, 0
  %v235 = vsel %vm171, 1, 0
  %v236 = vsel %vm172, 1, 0
  %v237 = vcvt.s32.f32 %v173
  %v238 = vcvt.s32.f32 %v174
  %v239 = vcvt.s32.f32 %v175
  %v240 = vcvt.s32.f32 %v176
  %v241 = vcvt.s32.f32 %v177
  %v242 = vcvt.s32.f32 %v178
  %v243 = vcvt.s32.f32 %v179
  %v244 = vcvt.s32.f32 %v180
  %v245 = vcvt.s32.f32 %v181
  %v246 = vcvt.s32.f32 %v182
  %v247 = vcvt.s32.f32 %v183
  %v248 = vcvt.s32.f32 %v184
  %v249 = vcvt.s32.f32 %v185
  %v250 = vcvt.s32.f32 %v186
  %v251 = vcvt.s32.f32 %v187
  %v252 = vcvt.s32.f32 %v188
  %v253 = vcvt.s32.f32 %v189
  %v254 = vcvt.s32.f32 %v190
  %v255 = vcvt.s32.f32 %v191
  %v256 = vcvt.s32.f32 %v192
  %v257 = vcvt.s32.f32 %v193
  %v258 = vcvt.s32.f32 %v194
  %v259 = vcvt.s32.f32 %v195
  %v260 = vcvt.s32.f32 %v196
  %v261 = vcvt.s32.f32 %v197
  %v262 = vcvt.s32.f32 %v198
  %v263 = vcvt.s32.f32 %v199
  %v264 = vcvt.s32.f32 %v200
  %v265 = vcvt.s32.f32 %v201
  %v266 = vcvt.s32.f32 %v202
  %v267 = vcvt.s32.f32 %v203
  %v268 = vcvt.s32.f32 %v204
  %v269 = vcvt.s32.f32 %v205
  %v270 = vcvt.s32.f32 %v206
  %v271 = vcvt.s32.f32 %v207
  %v272 = vcvt.s32.f32 %v208
  %v273 = vcvt.s32.f32 %v209
  %v274 = vcvt.s32.f32 %v210
  %v275 = vcvt.s32.f32 %v211
  %v276 = vcvt.s32.f32 %v212
  %v277 = vcvt.s32.f32 %v213
  %v278 = vcvt.s32.f32 %v214
  %v279 = vcvt.s32.f32 %v215
  %v280 = vcvt.s32.f32 %v216
  %v281 = vcvt.s32.f32 %v217
  %v282 = vcvt.s32.f32 %v218
  %v283 = vcvt.s32.f32 %v219
  %v284 = vcvt.s32.f32 %v220
  %v285 = vcvt.s32.f32 %v221
  %v286 = vcvt.s32.f32 %v222
  %v287 = vcvt.s32.f32 %v223
  %v288 = vcvt.s32.f32 %v224
  %v289 = vcvt.s32.f32 %v225
  %v290 = vcvt.s32.f32 %v226
  %v291 = vcvt.s32.f32 %v227
  %v292 = vcvt.s32.f32 %v228
  %v293 = vcvt.s32.f32 %v229
  %v294 = vcvt.s32.f32 %v230
  %v295 = vcvt.s32.f32 %v231
  %v296 = vcvt.s32.f32 %v232
  %v297 = vcvt.s32.f32 %v233
  %v298 = vcvt.s32.f32 %v234
  %v299 = vcvt.s32.f32 %v235
  %v300 = vcvt.s32.f32 %v236
  %v301 = vpack.c.bf16 %v241, %v237
  %v302 = vpack.c.bf16 %v242, %v238
  %v303 = vpack.c.bf16 %v243, %v239
  %v304 = vpack.c.bf16 %v244, %v240
  %v305 = vpack.c.bf16 %v249, %v245
  %v306 = vpack.c.bf16 %v250, %v246
  %v307 = vpack.c.bf16 %v251, %v247
  %v308 = vpack.c.bf16 %v252, %v248
  %v309 = vpack.c.bf16 %v257, %v253
  %v310 = vpack.c.bf16 %v258, %v254
  %v311 = vpack.c.bf16 %v259, %v255
  %v312 = vpack.c.bf16 %v260, %v256
  %v313 = vpack.c.bf16 %v265, %v261
  %v314 = vpack.c.bf16 %v266, %v262
  %v315 = vpack.c.bf16 %v267, %v263
  %v316 = vpack.c.bf16 %v268, %v264
  %v317 = vpack.c.bf16 %v273, %v269
  %v318 = vpack.c.bf16 %v274, %v270
  %v319 = vpack.c.bf16 %v275, %v271
  %v320 = vpack.c.bf16 %v276, %v272
  %v321 = vpack.c.bf16 %v281, %v277
  %v322 = vpack.c.bf16 %v282, %v278
  %v323 = vpack.c.bf16 %v283, %v279
  %v324 = vpack.c.bf16 %v284, %v280
  %v325 = vpack.c.bf16 %v289, %v285
  %v326 = vpack.c.bf16 %v290, %v286
  %v327 = vpack.c.bf16 %v291, %v287
  %v328 = vpack.c.bf16 %v292, %v288
  %v329 = vpack.c.bf16 %v297, %v293
  %v330 = vpack.c.bf16 %v298, %v294
  %v331 = vpack.c.bf16 %v299, %v295
  %v332 = vpack.c.bf16 %v300, %v296
  %v333 = vld [vmem:[#allocation2] sm:$0xff]
  %v334 = vld [vmem:[#allocation2 + $0x8] sm:$0xff]
  %v335 = vld [vmem:[#allocation2 + $0x10] sm:$0xff]
  %v336 = vld [vmem:[#allocation2 + $0x18] sm:$0xff]
  %v337 = vld [vmem:[#allocation2 + $0x20] sm:$0xff]
  %v338 = vld [vmem:[#allocation2 + $0x28] sm:$0xff]
  %v339 = vld [vmem:[#allocation2 + $0x30] sm:$0xff]
  %v340 = vld [vmem:[#allocation2 + $0x38] sm:$0xff]
  %v341 = vld [vmem:[#allocation2 + $0x40] sm:$0xff]
  %v342 = vld [vmem:[#allocation2 + $0x48] sm:$0xff]
  %v343 = vld [vmem:[#allocation2 + $0x50] sm:$0xff]
  %v344 = vld [vmem:[#allocation2 + $0x58] sm:$0xff]
  %v345 = vld [vmem:[#allocation2 + $0x60] sm:$0xff]
  %v346 = vld [vmem:[#allocation2 + $0x68] sm:$0xff]
  %v347 = vld [vmem:[#allocation2 + $0x70] sm:$0xff]
  %v348 = vld [vmem:[#allocation2 + $0x78] sm:$0xff]
  %v349 = vld [vmem:[%s0] sm:$0xf]
  %v350 = vld [vmem:[%s0 + $0x4] sm:$0xf]
  %v351 = vld [vmem:[%s0 + $0x8] sm:$0xf]
  %v352 = vld [vmem:[%s0 + $0xc] sm:$0xf]
  %v353 = vld [vmem:[%s0 + $0x10] sm:$0xf]
  %v354 = vld [vmem:[%s0 + $0x14] sm:$0xf]
  %v355 = vld [vmem:[%s0 + $0x18] sm:$0xf]
  %v356 = vld [vmem:[%s0 + $0x1c] sm:$0xf]
  %v357 = vld [vmem:[%s0 + $0x20] sm:$0xf]
  %v358 = vld [vmem:[%s0 + $0x24] sm:$0xf]
  %v359 = vld [vmem:[%s0 + $0x28] sm:$0xf]
  %v360 = vld [vmem:[%s0 + $0x2c] sm:$0xf]
  %v361 = vld [vmem:[%s0 + $0x30] sm:$0xf]
  %v362 = vld [vmem:[%s0 + $0x34] sm:$0xf]
  %v363 = vld [vmem:[%s0 + $0x38] sm:$0xf]
  %v364 = vld [vmem:[%s0 + $0x3c] sm:$0xf]
  %v365 = vld [vmem:[%s0 + $0x40] sm:$0xf]
  %v366 = vld [vmem:[%s0 + $0x44] sm:$0xf]
  %v367 = vld [vmem:[%s0 + $0x48] sm:$0xf]
  %v368 = vld [vmem:[%s0 + $0x4c] sm:$0xf]
  %v369 = vld [vmem:[%s0 + $0x50] sm:$0xf]
  %v370 = vld [vmem:[%s0 + $0x54] sm:$0xf]
  %v371 = vld [vmem:[%s0 + $0x58] sm:$0xf]
  %v372 = vld [vmem:[%s0 + $0x5c] sm:$0xf]
  %v373 = vld [vmem:[%s0 + $0x60] sm:$0xf]
  %v374 = vld [vmem:[%s0 + $0x64] sm:$0xf]
  %v375 = vld [vmem:[%s0 + $0x68] sm:$0xf]
  %v376 = vld [vmem:[%s0 + $0x6c] sm:$0xf]
  %v377 = vld [vmem:[%s0 + $0x70] sm:$0xf]
  %v378 = vld [vmem:[%s0 + $0x74] sm:$0xf]
  %v379 = vld [vmem:[%s0 + $0x78] sm:$0xf]
  %v380 = vld [vmem:[%s0 + $0x7c] sm:$0xf]
  %v381 = vld [vmem:[%s0 + $0x80] sm:$0xf]
  %v382 = vld [vmem:[%s0 + $0x84] sm:$0xf]
  %v383 = vld [vmem:[%s0 + $0x88] sm:$0xf]
  %v384 = vld [vmem:[%s0 + $0x8c] sm:$0xf]
  %v385 = vld [vmem:[%s0 + $0x90] sm:$0xf]
  %v386 = vld [vmem:[%s0 + $0x94] sm:$0xf]
  %v387 = vld [vmem:[%s0 + $0x98] sm:$0xf]
  %v388 = vld [vmem:[%s0 + $0x9c] sm:$0xf]
  %v389 = vld [vmem:[%s0 + $0xa0] sm:$0xf]
  %v390 = vld [vmem:[%s0 + $0xa4] sm:$0xf]
  %v391 = vld [vmem:[%s0 + $0xa8] sm:$0xf]
  %v392 = vld [vmem:[%s0 + $0xac] sm:$0xf]
  %v393 = vld [vmem:[%s0 + $0xb0] sm:$0xf]
  %v394 = vld [vmem:[%s0 + $0xb4] sm:$0xf]
  %v395 = vld [vmem:[%s0 + $0xb8] sm:$0xf]
  %v396 = vld [vmem:[%s0 + $0xbc] sm:$0xf]
  %v397 = vld [vmem:[%s0 + $0xc0] sm:$0xf]
  %v398 = vld [vmem:[%s0 + $0xc4] sm:$0xf]
  %v399 = vld [vmem:[%s0 + $0xc8] sm:$0xf]
  %v400 = vld [vmem:[%s0 + $0xcc] sm:$0xf]
  %v401 = vld [vmem:[%s0 + $0xd0] sm:$0xf]
  %v402 = vld [vmem:[%s0 + $0xd4] sm:$0xf]
  %v403 = vld [vmem:[%s0 + $0xd8] sm:$0xf]
  %v404 = vld [vmem:[%s0 + $0xdc] sm:$0xf]
  %v405 = vld [vmem:[%s0 + $0xe0] sm:$0xf]
  %v406 = vld [vmem:[%s0 + $0xe4] sm:$0xf]
  %v407 = vld [vmem:[%s0 + $0xe8] sm:$0xf]
  %v408 = vld [vmem:[%s0 + $0xec] sm:$0xf]
  %v409 = vld [vmem:[%s0 + $0xf0] sm:$0xf]
  %v410 = vld [vmem:[%s0 + $0xf4] sm:$0xf]
  %v411 = vld [vmem:[%s0 + $0xf8] sm:$0xf]
  %v412 = vld [vmem:[%s0 + $0xfc] sm:$0xf]
  %v477 = vunpack.c.l.b16 %v349
  %v478 = vunpack.c.l.b16 %v350
  %v479 = vunpack.c.l.b16 %v351
  %v480 = vunpack.c.l.b16 %v352
  %v481 = vunpack.c.l.b16 %v353
  %v482 = vunpack.c.l.b16 %v354
  %v483 = vunpack.c.l.b16 %v355
  %v484 = vunpack.c.l.b16 %v356
  %v485 = vunpack.c.l.b16 %v357
  %v486 = vunpack.c.l.b16 %v358
  %v487 = vunpack.c.l.b16 %v359
  %v488 = vunpack.c.l.b16 %v360
  %v489 = vunpack.c.l.b16 %v361
  %v490 = vunpack.c.l.b16 %v362
  %v491 = vunpack.c.l.b16 %v363
  %v492 = vunpack.c.l.b16 %v364
  %v493 = vunpack.c.l.b16 %v365
  %v494 = vunpack.c.l.b16 %v366
  %v495 = vunpack.c.l.b16 %v367
  %v496 = vunpack.c.l.b16 %v368
  %v497 = vunpack.c.l.b16 %v369
  %v498 = vunpack.c.l.b16 %v370
  %v499 = vunpack.c.l.b16 %v371
  %v500 = vunpack.c.l.b16 %v372
  %v501 = vunpack.c.l.b16 %v373
  %v502 = vunpack.c.l.b16 %v374
  %v503 = vunpack.c.l.b16 %v375
  %v504 = vunpack.c.l.b16 %v376
  %v505 = vunpack.c.l.b16 %v377
  %v506 = vunpack.c.l.b16 %v378
  %v507 = vunpack.c.l.b16 %v379
  %v508 = vunpack.c.l.b16 %v380
  %v509 = vunpack.c.l.b16 %v381
  %v510 = vunpack.c.l.b16 %v382
  %v511 = vunpack.c.l.b16 %v383
  %v512 = vunpack.c.l.b16 %v384
  %v513 = vunpack.c.l.b16 %v385
  %v514 = vunpack.c.l.b16 %v386
  %v515 = vunpack.c.l.b16 %v387
  %v516 = vunpack.c.l.b16 %v388
  %v517 = vunpack.c.l.b16 %v389
  %v518 = vunpack.c.l.b16 %v390
  %v519 = vunpack.c.l.b16 %v391
  %v520 = vunpack.c.l.b16 %v392
  %v521 = vunpack.c.l.b16 %v393
  %v522 = vunpack.c.l.b16 %v394
  %v523 = vunpack.c.l.b16 %v395
  %v524 = vunpack.c.l.b16 %v396
  %v525 = vunpack.c.l.b16 %v397
  %v526 = vunpack.c.l.b16 %v398
  %v527 = vunpack.c.l.b16 %v399
  %v528 = vunpack.c.l.b16 %v400
  %v529 = vunpack.c.l.b16 %v401
  %v530 = vunpack.c.l.b16 %v402
  %v531 = vunpack.c.l.b16 %v403
  %v532 = vunpack.c.l.b16 %v404
  %v533 = vunpack.c.l.b16 %v405
  %v534 = vunpack.c.l.b16 %v406
  %v535 = vunpack.c.l.b16 %v407
  %v536 = vunpack.c.l.b16 %v408
  %v537 = vunpack.c.l.b16 %v409
  %v538 = vunpack.c.l.b16 %v410
  %v539 = vunpack.c.l.b16 %v411
  %v540 = vunpack.c.l.b16 %v412
  %v541 = vpack.c.b16 %v478, %v477
  %v542 = vpack.c.b16 %v480, %v479
  %v543 = vpack.c.b16 %v482, %v481
  %v544 = vpack.c.b16 %v484, %v483
  %v545 = vpack.c.b16 %v486, %v485
  %v546 = vpack.c.b16 %v488, %v487
  %v547 = vpack.c.b16 %v490, %v489
  %v548 = vpack.c.b16 %v492, %v491
  %v549 = vpack.c.b16 %v494, %v493
  %v550 = vpack.c.b16 %v496, %v495
  %v551 = vpack.c.b16 %v498, %v497
  %v552 = vpack.c.b16 %v500, %v499
  %v553 = vpack.c.b16 %v502, %v501
  %v554 = vpack.c.b16 %v504, %v503
  %v555 = vpack.c.b16 %v506, %v505
  %v556 = vpack.c.b16 %v508, %v507
  %v557 = vpack.c.b16 %v510, %v509
  %v558 = vpack.c.b16 %v512, %v511
  %v559 = vpack.c.b16 %v514, %v513
  %v560 = vpack.c.b16 %v516, %v515
  %v561 = vpack.c.b16 %v518, %v517
  %v562 = vpack.c.b16 %v520, %v519
  %v563 = vpack.c.b16 %v522, %v521
  %v564 = vpack.c.b16 %v524, %v523
  %v565 = vpack.c.b16 %v526, %v525
  %v566 = vpack.c.b16 %v528, %v527
  %v567 = vpack.c.b16 %v530, %v529
  %v568 = vpack.c.b16 %v532, %v531
  %v569 = vpack.c.b16 %v534, %v533
  %v570 = vpack.c.b16 %v536, %v535
  %v571 = vpack.c.b16 %v538, %v537
  %v572 = vpack.c.b16 %v540, %v539
  %605 = vmatprep.subr.bf16.mxu0 0
  %606 = vmatpush1.bf16.msra.mxu0 %v548
  %607 = vmatprep.subr.bf16.mxu0 0
  %608 = vmatpush1.bf16.msra.mxu0 %v547
  %609 = vmatprep.subr.bf16.mxu0 0
  %610 = vmatpush1.bf16.msra.mxu0 %v546
  %611 = vmatprep.subr.bf16.mxu0 0
  %612 = vmatpush1.bf16.msra.mxu0 %v545
  %613 = vmatprep.subr.bf16.mxu0 0
  %614 = vmatpush1.bf16.msra.mxu0 %v544
  %615 = vmatprep.subr.bf16.mxu0 0
  %616 = vmatpush1.bf16.msra.mxu0 %v543
  %617 = vmatprep.subr.bf16.mxu0 0
  %618 = vmatpush1.bf16.msra.mxu0 %v542
  %619 = vmatprep.subr.bf16.mxu0 0
  %620 = vmatpush1.bf16.msra.mxu0 %v541
  %621 = vmatprep.subr.bf16.mxu0 0
  %622 = vmatpush2.bf16.msra.mxu0 %v556
  %623 = vmatprep.subr.bf16.mxu0 0
  %624 = vmatpush2.bf16.msra.mxu0 %v555
  %625 = vmatprep.subr.bf16.mxu0 0
  %626 = vmatpush2.bf16.msra.mxu0 %v554
  %627 = vmatprep.subr.bf16.mxu0 0
  %628 = vmatpush2.bf16.msra.mxu0 %v553
  %629 = vmatprep.subr.bf16.mxu0 0
  %630 = vmatpush2.bf16.msra.mxu0 %v552
  %631 = vmatprep.subr.bf16.mxu0 0
  %632 = vmatpush2.bf16.msra.mxu0 %v551
  %633 = vmatprep.subr.bf16.mxu0 0
  %634 = vmatpush2.bf16.msra.mxu0 %v550
  %635 = vmatprep.subr.bf16.mxu0 0
  %636 = vmatpush2.bf16.msra.mxu0 %v549
  %637 = vmatprep.mubr.bf16.mxu0 %v302
  %638 = vmatmul.mubr.bf16.gmra.mxu0 %v301
  %v639 = vpop.f32.mrf.mxu0
  %v640 = vadd.f32 0.0, %v639
  %v641 = vpop.f32.mrf.mxu0
  %v642 = vpop.f32.mrf.mxu0
  %v643 = vadd.f32 0.0, %v642
  %v644 = vpop.f32.mrf.mxu0
  %645 = vmatprep.mubr.bf16.mxu0 %v306
  %646 = vmatmul.mubr.bf16.gmra.mxu0 %v305
  %v647 = vpop.f32.mrf.mxu0
  %v648 = vadd.f32 0.0, %v647
  %v649 = vpop.f32.mrf.mxu0
  %v650 = vpop.f32.mrf.mxu0
  %v651 = vadd.f32 0.0, %v650
  %v652 = vpop.f32.mrf.mxu0
  %653 = vmatprep.mubr.bf16.mxu0 %v310
  %654 = vmatmul.mubr.bf16.gmra.mxu0 %v309
  %v655 = vpop.f32.mrf.mxu0
  %v656 = vadd.f32 0.0, %v655
  %v657 = vpop.f32.mrf.mxu0
  %v658 = vpop.f32.mrf.mxu0
  %v659 = vadd.f32 0.0, %v658
  %v660 = vpop.f32.mrf.mxu0
  %661 = vmatprep.mubr.bf16.mxu0 %v314
  %662 = vmatmul.mubr.bf16.gmra.mxu0 %v313
  %v663 = vpop.f32.mrf.mxu0
  %v664 = vadd.f32 0.0, %v663
  %v665 = vpop.f32.mrf.mxu0
  %v666 = vpop.f32.mrf.mxu0
  %v667 = vadd.f32 0.0, %v666
  %v668 = vpop.f32.mrf.mxu0
  %669 = vmatprep.mubr.bf16.mxu0 %v318
  %670 = vmatmul.mubr.bf16.gmra.mxu0 %v317
  %v671 = vpop.f32.mrf.mxu0
  %v672 = vadd.f32 0.0, %v671
  %v673 = vpop.f32.mrf.mxu0
  %v674 = vpop.f32.mrf.mxu0
  %v675 = vadd.f32 0.0, %v674
  %v676 = vpop.f32.mrf.mxu0
  %677 = vmatprep.mubr.bf16.mxu0 %v322
  %678 = vmatmul.mubr.bf16.gmra.mxu0 %v321
  %v679 = vpop.f32.mrf.mxu0
  %v680 = vadd.f32 0.0, %v679
  %v681 = vpop.f32.mrf.mxu0
  %v682 = vpop.f32.mrf.mxu0
  %v683 = vadd.f32 0.0, %v682
  %v684 = vpop.f32.mrf.mxu0
  %685 = vmatprep.mubr.bf16.mxu0 %v326
  %686 = vmatmul.mubr.bf16.gmra.mxu0 %v325
  %v687 = vpop.f32.mrf.mxu0
  %v688 = vadd.f32 0.0, %v687
  %v689 = vpop.f32.mrf.mxu0
  %v690 = vpop.f32.mrf.mxu0
  %v691 = vadd.f32 0.0, %v690
  %v692 = vpop.f32.mrf.mxu0
  %693 = vmatprep.mubr.bf16.mxu0 %v330
  %694 = vmatmul.mubr.bf16.gmra.mxu0 %v329
  %v695 = vpop.f32.mrf.mxu0
  %v696 = vadd.f32 0.0, %v695
  %v697 = vpop.f32.mrf.mxu0
  %v698 = vpop.f32.mrf.mxu0
  %v699 = vadd.f32 0.0, %v698
  %v700 = vpop.f32.mrf.mxu0
  %701 = vdwg.mxu0
  %702 = vmatprep.subr.bf16.mxu0 0
  %703 = vmatpush1.bf16.msra.mxu0 %v564
  %704 = vmatprep.subr.bf16.mxu0 0
  %705 = vmatpush1.bf16.msra.mxu0 %v563
  %706 = vmatprep.subr.bf16.mxu0 0
  %707 = vmatpush1.bf16.msra.mxu0 %v562
  %708 = vmatprep.subr.bf16.mxu0 0
  %709 = vmatpush1.bf16.msra.mxu0 %v561
  %710 = vmatprep.subr.bf16.mxu0 0
  %711 = vmatpush1.bf16.msra.mxu0 %v560
  %712 = vmatprep.subr.bf16.mxu0 0
  %713 = vmatpush1.bf16.msra.mxu0 %v559
  %714 = vmatprep.subr.bf16.mxu0 0
  %715 = vmatpush1.bf16.msra.mxu0 %v558
  %716 = vmatprep.subr.bf16.mxu0 0
  %717 = vmatpush1.bf16.msra.mxu0 %v557
  %718 = vmatprep.subr.bf16.mxu0 0
  %719 = vmatpush2.bf16.msra.mxu0 %v572
  %720 = vmatprep.subr.bf16.mxu0 0
  %721 = vmatpush2.bf16.msra.mxu0 %v571
  %722 = vmatprep.subr.bf16.mxu0 0
  %723 = vmatpush2.bf16.msra.mxu0 %v570
  %724 = vmatprep.subr.bf16.mxu0 0
  %725 = vmatpush2.bf16.msra.mxu0 %v569
  %726 = vmatprep.subr.bf16.mxu0 0
  %727 = vmatpush2.bf16.msra.mxu0 %v568
  %728 = vmatprep.subr.bf16.mxu0 0
  %729 = vmatpush2.bf16.msra.mxu0 %v567
  %730 = vmatprep.subr.bf16.mxu0 0
  %731 = vmatpush2.bf16.msra.mxu0 %v566
  %732 = vmatprep.subr.bf16.mxu0 0
  %733 = vmatpush2.bf16.msra.mxu0 %v565
  %734 = vmatprep.mubr.bf16.mxu0 %v304
  %735 = vmatmul.mubr.bf16.gmra.mxu0 %v303
  %v736 = vpop.f32.mrf.mxu0
  %v737 = vadd.f32 %v640, %v736
  %v738 = vpop.f32.mrf.mxu0
  %v739 = vpop.f32.mrf.mxu0
  %v740 = vadd.f32 %v643, %v739
  %v741 = vpop.f32.mrf.mxu0
  %742 = vmatprep.mubr.bf16.mxu0 %v308
  %743 = vmatmul.mubr.bf16.gmra.mxu0 %v307
  %v744 = vpop.f32.mrf.mxu0
  %v745 = vadd.f32 %v648, %v744
  %v746 = vpop.f32.mrf.mxu0
  %v747 = vpop.f32.mrf.mxu0
  %v748 = vadd.f32 %v651, %v747
  %v749 = vpop.f32.mrf.mxu0
  %750 = vmatprep.mubr.bf16.mxu0 %v312
  %751 = vmatmul.mubr.bf16.gmra.mxu0 %v311
  %v752 = vpop.f32.mrf.mxu0
  %v753 = vadd.f32 %v656, %v752
  %v754 = vpop.f32.mrf.mxu0
  %v755 = vpop.f32.mrf.mxu0
  %v756 = vadd.f32 %v659, %v755
  %v757 = vpop.f32.mrf.mxu0
  %758 = vmatprep.mubr.bf16.mxu0 %v316
  %759 = vmatmul.mubr.bf16.gmra.mxu0 %v315
  %v760 = vpop.f32.mrf.mxu0
  %v761 = vadd.f32 %v664, %v760
  %v762 = vpop.f32.mrf.mxu0
  %v763 = vpop.f32.mrf.mxu0
  %v764 = vadd.f32 %v667, %v763
  %v765 = vpop.f32.mrf.mxu0
  %766 = vmatprep.mubr.bf16.mxu0 %v320
  %767 = vmatmul.mubr.bf16.gmra.mxu0 %v319
  %v768 = vpop.f32.mrf.mxu0
  %v769 = vadd.f32 %v672, %v768
  %v770 = vpop.f32.mrf.mxu0
  %v771 = vpop.f32.mrf.mxu0
  %v772 = vadd.f32 %v675, %v771
  %v773 = vpop.f32.mrf.mxu0
  %774 = vmatprep.mubr.bf16.mxu0 %v324
  %775 = vmatmul.mubr.bf16.gmra.mxu0 %v323
  %v776 = vpop.f32.mrf.mxu0
  %v777 = vadd.f32 %v680, %v776
  %v778 = vpop.f32.mrf.mxu0
  %v779 = vpop.f32.mrf.mxu0
  %v780 = vadd.f32 %v683, %v779
  %v781 = vpop.f32.mrf.mxu0
  %782 = vmatprep.mubr.bf16.mxu0 %v328
  %783 = vmatmul.mubr.bf16.gmra.mxu0 %v327
  %v784 = vpop.f32.mrf.mxu0
  %v785 = vadd.f32 %v688, %v784
  %v786 = vpop.f32.mrf.mxu0
  %v787 = vpop.f32.mrf.mxu0
  %v788 = vadd.f32 %v691, %v787
  %v789 = vpop.f32.mrf.mxu0
  %790 = vmatprep.mubr.bf16.mxu0 %v332
  %791 = vmatmul.mubr.bf16.gmra.mxu0 %v331
  %v792 = vpop.f32.mrf.mxu0
  %v793 = vadd.f32 %v696, %v792
  %v794 = vpop.f32.mrf.mxu0
  %v795 = vpop.f32.mrf.mxu0
  %v796 = vadd.f32 %v699, %v795
  %v797 = vpop.f32.mrf.mxu0
  %798 = vdwg.mxu0
  %v799 = vadd.f32 %v333, %v737
  %v800 = vadd.f32 %v334, %v740
  %v801 = vadd.f32 %v335, %v745
  %v802 = vadd.f32 %v336, %v748
  %v803 = vadd.f32 %v337, %v753
  %v804 = vadd.f32 %v338, %v756
  %v805 = vadd.f32 %v339, %v761
  %v806 = vadd.f32 %v340, %v764
  %v807 = vadd.f32 %v341, %v769
  %v808 = vadd.f32 %v342, %v772
  %v809 = vadd.f32 %v343, %v777
  %v810 = vadd.f32 %v344, %v780
  %v811 = vadd.f32 %v345, %v785
  %v812 = vadd.f32 %v346, %v788
  %v813 = vadd.f32 %v347, %v793
  %v814 = vadd.f32 %v348, %v796
  %815 = vst [vmem:[#allocation2] sm:$0xff] %v799
  %816 = vst [vmem:[#allocation2 + $0x8] sm:$0xff] %v800
  %817 = vst [vmem:[#allocation2 + $0x10] sm:$0xff] %v801
  %818 = vst [vmem:[#allocation2 + $0x18] sm:$0xff] %v802
  %819 = vst [vmem:[#allocation2 + $0x20] sm:$0xff] %v803
  %820 = vst [vmem:[#allocation2 + $0x28] sm:$0xff] %v804
  %821 = vst [vmem:[#allocation2 + $0x30] sm:$0xff] %v805
  %822 = vst [vmem:[#allocation2 + $0x38] sm:$0xff] %v806
  %823 = vst [vmem:[#allocation2 + $0x40] sm:$0xff] %v807
  %824 = vst [vmem:[#allocation2 + $0x48] sm:$0xff] %v808
  %825 = vst [vmem:[#allocation2 + $0x50] sm:$0xff] %v809
  %826 = vst [vmem:[#allocation2 + $0x58] sm:$0xff] %v810
  %827 = vst [vmem:[#allocation2 + $0x60] sm:$0xff] %v811
  %828 = vst [vmem:[#allocation2 + $0x68] sm:$0xff] %v812
  %829 = vst [vmem:[#allocation2 + $0x70] sm:$0xff] %v813
  %830 = vst [vmem:[#allocation2 + $0x78] sm:$0xff] %v814
  // Predicated region
  $region46: #{_lambda_.8} parent=0 // pred_check
    %p831 = pneg %p37
  $region47: #{_lambda_.8} parent=0 // pred_check_branch
    %833 = sbr.rel (%p831) target = $region49
  $region48: #{_lambda_.8} parent=0 // pred_region
    %v834 = vld [vmem:[#allocation2] sm:$0xff]
    %v835 = vld [vmem:[#allocation2 + $0x8] sm:$0xff]
    %v836 = vld [vmem:[#allocation2 + $0x10] sm:$0xff]
    %v837 = vld [vmem:[#allocation2 + $0x18] sm:$0xff]
    %v838 = vld [vmem:[#allocation2 + $0x20] sm:$0xff]
    %v839 = vld [vmem:[#allocation2 + $0x28] sm:$0xff]
    %v840 = vld [vmem:[#allocation2 + $0x30] sm:$0xff]
    %v841 = vld [vmem:[#allocation2 + $0x38] sm:$0xff]
    %v842 = vld [vmem:[#allocation2 + $0x40] sm:$0xff]
    %v843 = vld [vmem:[#allocation2 + $0x48] sm:$0xff]
    %v844 = vld [vmem:[#allocation2 + $0x50] sm:$0xff]
    %v845 = vld [vmem:[#allocation2 + $0x58] sm:$0xff]
    %v846 = vld [vmem:[#allocation2 + $0x60] sm:$0xff]
    %v847 = vld [vmem:[#allocation2 + $0x68] sm:$0xff]
    %v848 = vld [vmem:[#allocation2 + $0x70] sm:$0xff]
    %v849 = vld [vmem:[#allocation2 + $0x78] sm:$0xff]
    %s850 = sld [smem:[#allocation3]]
    %s851 = sadd.f32 %s850, 1.0
    %v852 = vld [vmem:[%s2] sm:$0xf]
    %v853 = vld [vmem:[%s2 + $0x4] sm:$0xf]
    %v854 = vld [vmem:[%s2 + $0x8] sm:$0xf]
    %v855 = vld [vmem:[%s2 + $0xc] sm:$0xf]
    %v856 = vld [vmem:[%s2 + $0x10] sm:$0xf]
    %v857 = vld [vmem:[%s2 + $0x14] sm:$0xf]
    %v858 = vld [vmem:[%s2 + $0x18] sm:$0xf]
    %v859 = vld [vmem:[%s2 + $0x1c] sm:$0xf]
    %v860 = vld [vmem:[%s2 + $0x20] sm:$0xf]
    %v861 = vld [vmem:[%s2 + $0x24] sm:$0xf]
    %v862 = vld [vmem:[%s2 + $0x28] sm:$0xf]
    %v863 = vld [vmem:[%s2 + $0x2c] sm:$0xf]
    %v864 = vld [vmem:[%s2 + $0x30] sm:$0xf]
    %v865 = vld [vmem:[%s2 + $0x34] sm:$0xf]
    %v866 = vld [vmem:[%s2 + $0x38] sm:$0xf]
    %v867 = vld [vmem:[%s2 + $0x3c] sm:$0xf]
    %v868 = vunpack.c.l.bf16 %v852
    %v869 = vunpack.c.l.bf16 %v853
    %v870 = vunpack.c.l.bf16 %v854
    %v871 = vunpack.c.l.bf16 %v855
    %v872 = vunpack.c.l.bf16 %v856
    %v873 = vunpack.c.l.bf16 %v857
    %v874 = vunpack.c.l.bf16 %v858
    %v875 = vunpack.c.l.bf16 %v859
    %v876 = vunpack.c.l.bf16 %v860
    %v877 = vunpack.c.l.bf16 %v861
    %v878 = vunpack.c.l.bf16 %v862
    %v879 = vunpack.c.l.bf16 %v863
    %v880 = vunpack.c.l.bf16 %v864
    %v881 = vunpack.c.l.bf16 %v865
    %v882 = vunpack.c.l.bf16 %v866
    %v883 = vunpack.c.l.bf16 %v867
    %v884 = vstv %s851
    %v885 = vmul.f32 %v884, %v868
    %v886 = vmul.f32 %v884, %v869
    %v887 = vmul.f32 %v884, %v870
    %v888 = vmul.f32 %v884, %v871
    %v889 = vmul.f32 %v884, %v872
    %v890 = vmul.f32 %v884, %v873
    %v891 = vmul.f32 %v884, %v874
    %v892 = vmul.f32 %v884, %v875
    %v893 = vmul.f32 %v884, %v876
    %v894 = vmul.f32 %v884, %v877
    %v895 = vmul.f32 %v884, %v878
    %v896 = vmul.f32 %v884, %v879
    %v897 = vmul.f32 %v884, %v880
    %v898 = vmul.f32 %v884, %v881
    %v899 = vmul.f32 %v884, %v882
    %v900 = vmul.f32 %v884, %v883
    %v901 = vadd.f32 %v834, %v885
    %v902 = vadd.f32 %v835, %v886
    %v903 = vadd.f32 %v836, %v887
    %v904 = vadd.f32 %v837, %v888
    %v905 = vadd.f32 %v838, %v889
    %v906 = vadd.f32 %v839, %v890
    %v907 = vadd.f32 %v840, %v891
    %v908 = vadd.f32 %v841, %v892
    %v909 = vadd.f32 %v842, %v893
    %v910 = vadd.f32 %v843, %v894
    %v911 = vadd.f32 %v844, %v895
    %v912 = vadd.f32 %v845, %v896
    %v913 = vadd.f32 %v846, %v897
    %v914 = vadd.f32 %v847, %v898
    %v915 = vadd.f32 %v848, %v899
    %v916 = vadd.f32 %v849, %v900
    %v917 = vld [vmem:[%s4] sm:$0xff]
    %v918 = vld [vmem:[%s4 + $0x8] sm:$0xff]
    %v919 = vld [vmem:[%s4 + $0x10] sm:$0xff]
    %v920 = vld [vmem:[%s4 + $0x18] sm:$0xff]
    %v921 = vld [vmem:[%s4 + $0x20] sm:$0xff]
    %v922 = vld [vmem:[%s4 + $0x28] sm:$0xff]
    %v923 = vld [vmem:[%s4 + $0x30] sm:$0xff]
    %v924 = vld [vmem:[%s4 + $0x38] sm:$0xff]
    %v925 = vld [vmem:[%s4 + $0x40] sm:$0xff]
    %v926 = vld [vmem:[%s4 + $0x48] sm:$0xff]
    %v927 = vld [vmem:[%s4 + $0x50] sm:$0xff]
    %v928 = vld [vmem:[%s4 + $0x58] sm:$0xff]
    %v929 = vld [vmem:[%s4 + $0x60] sm:$0xff]
    %v930 = vld [vmem:[%s4 + $0x68] sm:$0xff]
    %v931 = vld [vmem:[%s4 + $0x70] sm:$0xff]
    %v932 = vld [vmem:[%s4 + $0x78] sm:$0xff]
    %v933 = vld [vmem:[%s5] sm:$0x1]
    %v935 = vlaneseq
    %v936 = vshrl.u32 %v935, 7
    %v937 = vsub.s32 0, %v936
    %v938 = vrot.slane %v933, %v937
    %940 = vmatprep.subr.mxu0 0.0
    %941 = vmatpush1.msra.mxu0 %v932
    %942 = vmatprep.subr.mxu0 0.0
    %943 = vmatpush1.msra.mxu0 %v931
    %944 = vmatprep.subr.mxu0 0.0
    %945 = vmatpush1.msra.mxu0 %v930
    %946 = vmatprep.subr.mxu0 0.0
    %947 = vmatpush1.msra.mxu0 %v929
    %948 = vmatprep.subr.mxu0 0.0
    %949 = vmatpush1.msra.mxu0 %v928
    %950 = vmatprep.subr.mxu0 0.0
    %951 = vmatpush1.msra.mxu0 %v927
    %952 = vmatprep.subr.mxu0 0.0
    %953 = vmatpush1.msra.mxu0 %v926
    %954 = vmatprep.subr.mxu0 0.0
    %955 = vmatpush1.msra.mxu0 %v925
    %956 = vmatprep.subr.mxu0 0.0
    %957 = vmatpush1.msra.mxu0 %v924
    %958 = vmatprep.subr.mxu0 0.0
    %959 = vmatpush1.msra.mxu0 %v923
    %960 = vmatprep.subr.mxu0 0.0
    %961 = vmatpush1.msra.mxu0 %v922
    %962 = vmatprep.subr.mxu0 0.0
    %963 = vmatpush1.msra.mxu0 %v921
    %964 = vmatprep.subr.mxu0 0.0
    %965 = vmatpush1.msra.mxu0 %v920
    %966 = vmatprep.subr.mxu0 0.0
    %967 = vmatpush1.msra.mxu0 %v919
    %968 = vmatprep.subr.mxu0 0.0
    %969 = vmatpush1.msra.mxu0 %v918
    %970 = vmatprep.subr.mxu0 0.0
    %971 = vmatpush1.msra.mxu0 %v917
    %972 = vmatprep.subr.mxu0 0.0
    %973 = vmatpush2.msra.mxu0 0.0
    %974 = vmatprep.subr.mxu0 0.0
    %975 = vmatpush2.msra.mxu0 0.0
    %976 = vmatprep.subr.mxu0 0.0
    %977 = vmatpush2.msra.mxu0 0.0
    %978 = vmatprep.subr.mxu0 0.0
    %979 = vmatpush2.msra.mxu0 0.0
    %980 = vmatprep.subr.mxu0 0.0
    %981 = vmatpush2.msra.mxu0 0.0
    %982 = vmatprep.subr.mxu0 0.0
    %983 = vmatpush2.msra.mxu0 0.0
    %984 = vmatprep.subr.mxu0 0.0
    %985 = vmatpush2.msra.mxu0 0.0
    %986 = vmatprep.subr.mxu0 0.0
    %987 = vmatpush2.msra.mxu0 0.0
    %988 = vmatprep.subr.mxu0 0.0
    %989 = vmatpush2.msra.mxu0 0.0
    %990 = vmatprep.subr.mxu0 0.0
    %991 = vmatpush2.msra.mxu0 0.0
    %992 = vmatprep.subr.mxu0 0.0
    %993 = vmatpush2.msra.mxu0 0.0
    %994 = vmatprep.subr.mxu0 0.0
    %995 = vmatpush2.msra.mxu0 0.0
    %996 = vmatprep.subr.mxu0 0.0
    %997 = vmatpush2.msra.mxu0 0.0
    %998 = vmatprep.subr.mxu0 0.0
    %999 = vmatpush2.msra.mxu0 0.0
    %1000 = vmatprep.subr.mxu0 0.0
    %1001 = vmatpush2.msra.mxu0 0.0
    %1002 = vmatprep.subr.mxu0 0.0
    %1003 = vmatpush2.msra.mxu0 0.0
    %1004 = vmatprep.mubr.f32.mxu0 0.0
    %1005 = vmatmul.mubr.f32.gmra.mxu0 %v901
    %v1006 = vpop.f32.mrf.mxu0
    %v1007 = vadd.f32 %v938, %v1006
    %v1008 = vpop.f32.mrf.mxu0
    %1009 = vmatprep.mubr.f32.mxu0 0.0
    %1010 = vmatmul.mubr.f32.gmra.mxu0 %v902
    %v1011 = vpop.f32.mrf.mxu0
    %v1012 = vadd.f32 %v938, %v1011
    %v1013 = vpop.f32.mrf.mxu0
    %1014 = vmatprep.mubr.f32.mxu0 0.0
    %1015 = vmatmul.mubr.f32.gmra.mxu0 %v903
    %v1016 = vpop.f32.mrf.mxu0
    %v1017 = vadd.f32 %v938, %v1016
    %v1018 = vpop.f32.mrf.mxu0
    %1019 = vmatprep.mubr.f32.mxu0 0.0
    %1020 = vmatmul.mubr.f32.gmra.mxu0 %v904
    %v1021 = vpop.f32.mrf.mxu0
    %v1022 = vadd.f32 %v938, %v1021
    %v1023 = vpop.f32.mrf.mxu0
    %1024 = vmatprep.mubr.f32.mxu0 0.0
    %1025 = vmatmul.mubr.f32.gmra.mxu0 %v905
    %v1026 = vpop.f32.mrf.mxu0
    %v1027 = vadd.f32 %v938, %v1026
    %v1028 = vpop.f32.mrf.mxu0
    %1029 = vmatprep.mubr.f32.mxu0 0.0
    %1030 = vmatmul.mubr.f32.gmra.mxu0 %v906
    %v1031 = vpop.f32.mrf.mxu0
    %v1032 = vadd.f32 %v938, %v1031
    %v1033 = vpop.f32.mrf.mxu0
    %1034 = vmatprep.mubr.f32.mxu0 0.0
    %1035 = vmatmul.mubr.f32.gmra.mxu0 %v907
    %v1036 = vpop.f32.mrf.mxu0
    %v1037 = vadd.f32 %v938, %v1036
    %v1038 = vpop.f32.mrf.mxu0
    %1039 = vmatprep.mubr.f32.mxu0 0.0
    %1040 = vmatmul.mubr.f32.gmra.mxu0 %v908
    %v1041 = vpop.f32.mrf.mxu0
    %v1042 = vadd.f32 %v938, %v1041
    %v1043 = vpop.f32.mrf.mxu0
    %1044 = vmatprep.mubr.f32.mxu0 0.0
    %1045 = vmatmul.mubr.f32.gmra.mxu0 %v909
    %v1046 = vpop.f32.mrf.mxu0
    %v1047 = vadd.f32 %v938, %v1046
    %v1048 = vpop.f32.mrf.mxu0
    %1049 = vmatprep.mubr.f32.mxu0 0.0
    %1050 = vmatmul.mubr.f32.gmra.mxu0 %v910
    %v1051 = vpop.f32.mrf.mxu0
    %v1052 = vadd.f32 %v938, %v1051
    %v1053 = vpop.f32.mrf.mxu0
    %1054 = vmatprep.mubr.f32.mxu0 0.0
    %1055 = vmatmul.mubr.f32.gmra.mxu0 %v911
    %v1056 = vpop.f32.mrf.mxu0
    %v1057 = vadd.f32 %v938, %v1056
    %v1058 = vpop.f32.mrf.mxu0
    %1059 = vmatprep.mubr.f32.mxu0 0.0
    %1060 = vmatmul.mubr.f32.gmra.mxu0 %v912
    %v1061 = vpop.f32.mrf.mxu0
    %v1062 = vadd.f32 %v938, %v1061
    %v1063 = vpop.f32.mrf.mxu0
    %1064 = vmatprep.mubr.f32.mxu0 0.0
    %1065 = vmatmul.mubr.f32.gmra.mxu0 %v913
    %v1066 = vpop.f32.mrf.mxu0
    %v1067 = vadd.f32 %v938, %v1066
    %v1068 = vpop.f32.mrf.mxu0
    %1069 = vmatprep.mubr.f32.mxu0 0.0
    %1070 = vmatmul.mubr.f32.gmra.mxu0 %v914
    %v1071 = vpop.f32.mrf.mxu0
    %v1072 = vadd.f32 %v938, %v1071
    %v1073 = vpop.f32.mrf.mxu0
    %1074 = vmatprep.mubr.f32.mxu0 0.0
    %1075 = vmatmul.mubr.f32.gmra.mxu0 %v915
    %v1076 = vpop.f32.mrf.mxu0
    %v1077 = vadd.f32 %v938, %v1076
    %v1078 = vpop.f32.mrf.mxu0
    %1079 = vmatprep.mubr.f32.mxu0 0.0
    %1080 = vmatmul.mubr.f32.gmra.mxu0 %v916
    %v1081 = vpop.f32.mrf.mxu0
    %v1082 = vadd.f32 %v938, %v1081
    %v1083 = vpop.f32.mrf.mxu0
    %1084 = vdwg.mxu0
    %v1085 = vmax.f32 %v1007, 0.0
    %v1086 = vmax.f32 %v1012, 0.0
    %v1087 = vmax.f32 %v1017, 0.0
    %v1088 = vmax.f32 %v1022, 0.0
    %v1089 = vmax.f32 %v1027, 0.0
    %v1090 = vmax.f32 %v1032, 0.0
    %v1091 = vmax.f32 %v1037, 0.0
    %v1092 = vmax.f32 %v1042, 0.0
    %v1093 = vmax.f32 %v1047, 0.0
    %v1094 = vmax.f32 %v1052, 0.0
    %v1095 = vmax.f32 %v1057, 0.0
    %v1096 = vmax.f32 %v1062, 0.0
    %v1097 = vmax.f32 %v1067, 0.0
    %v1098 = vmax.f32 %v1072, 0.0
    %v1099 = vmax.f32 %v1077, 0.0
    %v1100 = vmax.f32 %v1082, 0.0
    %v1101 = vld [vmem:[%s6] sm:$0xff]
    %v1102 = vld [vmem:[%s6 + $0x8] sm:$0xff]
    %v1103 = vld [vmem:[%s6 + $0x10] sm:$0xff]
    %v1104 = vld [vmem:[%s6 + $0x18] sm:$0xff]
    %v1105 = vld [vmem:[%s6 + $0x20] sm:$0xff]
    %v1106 = vld [vmem:[%s6 + $0x28] sm:$0xff]
    %v1107 = vld [vmem:[%s6 + $0x30] sm:$0xff]
    %v1108 = vld [vmem:[%s6 + $0x38] sm:$0xff]
    %v1109 = vld [vmem:[%s6 + $0x40] sm:$0xff]
    %v1110 = vld [vmem:[%s6 + $0x48] sm:$0xff]
    %v1111 = vld [vmem:[%s6 + $0x50] sm:$0xff]
    %v1112 = vld [vmem:[%s6 + $0x58] sm:$0xff]
    %v1113 = vld [vmem:[%s6 + $0x60] sm:$0xff]
    %v1114 = vld [vmem:[%s6 + $0x68] sm:$0xff]
    %v1115 = vld [vmem:[%s6 + $0x70] sm:$0xff]
    %v1116 = vld [vmem:[%s6 + $0x78] sm:$0xff]
    %v1117 = vld [vmem:[%s7] sm:$0x1]
    %v1119 = vlaneseq
    %v1120 = vshrl.u32 %v1119, 7
    %v1121 = vsub.s32 0, %v1120
    %v1122 = vrot.slane %v1117, %v1121
    %1124 = vmatprep.subr.mxu0 0.0
    %1125 = vmatpush1.msra.mxu0 %v1116
    %1126 = vmatprep.subr.mxu0 0.0
    %1127 = vmatpush1.msra.mxu0 %v1115
    %1128 = vmatprep.subr.mxu0 0.0
    %1129 = vmatpush1.msra.mxu0 %v1114
    %1130 = vmatprep.subr.mxu0 0.0
    %1131 = vmatpush1.msra.mxu0 %v1113
    %1132 = vmatprep.subr.mxu0 0.0
    %1133 = vmatpush1.msra.mxu0 %v1112
    %1134 = vmatprep.subr.mxu0 0.0
    %1135 = vmatpush1.msra.mxu0 %v1111
    %1136 = vmatprep.subr.mxu0 0.0
    %1137 = vmatpush1.msra.mxu0 %v1110
    %1138 = vmatprep.subr.mxu0 0.0
    %1139 = vmatpush1.msra.mxu0 %v1109
    %1140 = vmatprep.subr.mxu0 0.0
    %1141 = vmatpush1.msra.mxu0 %v1108
    %1142 = vmatprep.subr.mxu0 0.0
    %1143 = vmatpush1.msra.mxu0 %v1107
    %1144 = vmatprep.subr.mxu0 0.0
    %1145 = vmatpush1.msra.mxu0 %v1106
    %1146 = vmatprep.subr.mxu0 0.0
    %1147 = vmatpush1.msra.mxu0 %v1105
    %1148 = vmatprep.subr.mxu0 0.0
    %1149 = vmatpush1.msra.mxu0 %v1104
    %1150 = vmatprep.subr.mxu0 0.0
    %1151 = vmatpush1.msra.mxu0 %v1103
    %1152 = vmatprep.subr.mxu0 0.0
    %1153 = vmatpush1.msra.mxu0 %v1102
    %1154 = vmatprep.subr.mxu0 0.0
    %1155 = vmatpush1.msra.mxu0 %v1101
    %1156 = vmatprep.subr.mxu0 0.0
    %1157 = vmatpush2.msra.mxu0 0.0
    %1158 = vmatprep.subr.mxu0 0.0
    %1159 = vmatpush2.msra.mxu0 0.0
    %1160 = vmatprep.subr.mxu0 0.0
    %1161 = vmatpush2.msra.mxu0 0.0
    %1162 = vmatprep.subr.mxu0 0.0
    %1163 = vmatpush2.msra.mxu0 0.0
    %1164 = vmatprep.subr.mxu0 0.0
    %1165 = vmatpush2.msra.mxu0 0.0
    %1166 = vmatprep.subr.mxu0 0.0
    %1167 = vmatpush2.msra.mxu0 0.0
    %1168 = vmatprep.subr.mxu0 0.0
    %1169 = vmatpush2.msra.mxu0 0.0
    %1170 = vmatprep.subr.mxu0 0.0
    %1171 = vmatpush2.msra.mxu0 0.0
    %1172 = vmatprep.subr.mxu0 0.0
    %1173 = vmatpush2.msra.mxu0 0.0
    %1174 = vmatprep.subr.mxu0 0.0
    %1175 = vmatpush2.msra.mxu0 0.0
    %1176 = vmatprep.subr.mxu0 0.0
    %1177 = vmatpush2.msra.mxu0 0.0
    %1178 = vmatprep.subr.mxu0 0.0
    %1179 = vmatpush2.msra.mxu0 0.0
    %1180 = vmatprep.subr.mxu0 0.0
    %1181 = vmatpush2.msra.mxu0 0.0
    %1182 = vmatprep.subr.mxu0 0.0
    %1183 = vmatpush2.msra.mxu0 0.0
    %1184 = vmatprep.subr.mxu0 0.0
    %1185 = vmatpush2.msra.mxu0 0.0
    %1186 = vmatprep.subr.mxu0 0.0
    %1187 = vmatpush2.msra.mxu0 0.0
    %1188 = vmatprep.mubr.f32.mxu0 0.0
    %1189 = vmatmul.mubr.f32.gmra.mxu0 %v1085
    %v1190 = vpop.f32.mrf.mxu0
    %v1191 = vadd.f32 %v1122, %v1190
    %v1192 = vpop.f32.mrf.mxu0
    %1193 = vmatprep.mubr.f32.mxu0 0.0
    %1194 = vmatmul.mubr.f32.gmra.mxu0 %v1086
    %v1195 = vpop.f32.mrf.mxu0
    %v1196 = vadd.f32 %v1122, %v1195
    %v1197 = vpop.f32.mrf.mxu0
    %1198 = vmatprep.mubr.f32.mxu0 0.0
    %1199 = vmatmul.mubr.f32.gmra.mxu0 %v1087
    %v1200 = vpop.f32.mrf.mxu0
    %v1201 = vadd.f32 %v1122, %v1200
    %v1202 = vpop.f32.mrf.mxu0
    %1203 = vmatprep.mubr.f32.mxu0 0.0
    %1204 = vmatmul.mubr.f32.gmra.mxu0 %v1088
    %v1205 = vpop.f32.mrf.mxu0
    %v1206 = vadd.f32 %v1122, %v1205
    %v1207 = vpop.f32.mrf.mxu0
    %1208 = vmatprep.mubr.f32.mxu0 0.0
    %1209 = vmatmul.mubr.f32.gmra.mxu0 %v1089
    %v1210 = vpop.f32.mrf.mxu0
    %v1211 = vadd.f32 %v1122, %v1210
    %v1212 = vpop.f32.mrf.mxu0
    %1213 = vmatprep.mubr.f32.mxu0 0.0
    %1214 = vmatmul.mubr.f32.gmra.mxu0 %v1090
    %v1215 = vpop.f32.mrf.mxu0
    %v1216 = vadd.f32 %v1122, %v1215
    %v1217 = vpop.f32.mrf.mxu0
    %1218 = vmatprep.mubr.f32.mxu0 0.0
    %1219 = vmatmul.mubr.f32.gmra.mxu0 %v1091
    %v1220 = vpop.f32.mrf.mxu0
    %v1221 = vadd.f32 %v1122, %v1220
    %v1222 = vpop.f32.mrf.mxu0
    %1223 = vmatprep.mubr.f32.mxu0 0.0
    %1224 = vmatmul.mubr.f32.gmra.mxu0 %v1092
    %v1225 = vpop.f32.mrf.mxu0
    %v1226 = vadd.f32 %v1122, %v1225
    %v1227 = vpop.f32.mrf.mxu0
    %1228 = vmatprep.mubr.f32.mxu0 0.0
    %1229 = vmatmul.mubr.f32.gmra.mxu0 %v1093
    %v1230 = vpop.f32.mrf.mxu0
    %v1231 = vadd.f32 %v1122, %v1230
    %v1232 = vpop.f32.mrf.mxu0
    %1233 = vmatprep.mubr.f32.mxu0 0.0
    %1234 = vmatmul.mubr.f32.gmra.mxu0 %v1094
    %v1235 = vpop.f32.mrf.mxu0
    %v1236 = vadd.f32 %v1122, %v1235
    %v1237 = vpop.f32.mrf.mxu0
    %1238 = vmatprep.mubr.f32.mxu0 0.0
    %1239 = vmatmul.mubr.f32.gmra.mxu0 %v1095
    %v1240 = vpop.f32.mrf.mxu0
    %v1241 = vadd.f32 %v1122, %v1240
    %v1242 = vpop.f32.mrf.mxu0
    %1243 = vmatprep.mubr.f32.mxu0 0.0
    %1244 = vmatmul.mubr.f32.gmra.mxu0 %v1096
    %v1245 = vpop.f32.mrf.mxu0
    %v1246 = vadd.f32 %v1122, %v1245
    %v1247 = vpop.f32.mrf.mxu0
    %1248 = vmatprep.mubr.f32.mxu0 0.0
    %1249 = vmatmul.mubr.f32.gmra.mxu0 %v1097
    %v1250 = vpop.f32.mrf.mxu0
    %v1251 = vadd.f32 %v1122, %v1250
    %v1252 = vpop.f32.mrf.mxu0
    %1253 = vmatprep.mubr.f32.mxu0 0.0
    %1254 = vmatmul.mubr.f32.gmra.mxu0 %v1098
    %v1255 = vpop.f32.mrf.mxu0
    %v1256 = vadd.f32 %v1122, %v1255
    %v1257 = vpop.f32.mrf.mxu0
    %1258 = vmatprep.mubr.f32.mxu0 0.0
    %1259 = vmatmul.mubr.f32.gmra.mxu0 %v1099
    %v1260 = vpop.f32.mrf.mxu0
    %v1261 = vadd.f32 %v1122, %v1260
    %v1262 = vpop.f32.mrf.mxu0
    %1263 = vmatprep.mubr.f32.mxu0 0.0
    %1264 = vmatmul.mubr.f32.gmra.mxu0 %v1100
    %v1265 = vpop.f32.mrf.mxu0
    %v1266 = vadd.f32 %v1122, %v1265
    %v1267 = vpop.f32.mrf.mxu0
    %1268 = vdwg.mxu0
    %v1269 = vmax.f32 %v1191, 0.0
    %v1270 = vmax.f32 %v1196, 0.0
    %v1271 = vmax.f32 %v1201, 0.0
    %v1272 = vmax.f32 %v1206, 0.0
    %v1273 = vmax.f32 %v1211, 0.0
    %v1274 = vmax.f32 %v1216, 0.0
    %v1275 = vmax.f32 %v1221, 0.0
    %v1276 = vmax.f32 %v1226, 0.0
    %v1277 = vmax.f32 %v1231, 0.0
    %v1278 = vmax.f32 %v1236, 0.0
    %v1279 = vmax.f32 %v1241, 0.0
    %v1280 = vmax.f32 %v1246, 0.0
    %v1281 = vmax.f32 %v1251, 0.0
    %v1282 = vmax.f32 %v1256, 0.0
    %v1283 = vmax.f32 %v1261, 0.0
    %v1284 = vmax.f32 %v1266, 0.0
    %v1285 = vld [vmem:[%s8] sm:$0x1]
    %v1287 = vlaneseq
    %v1288 = vshrl.u32 %v1287, 7
    %v1289 = vsub.s32 0, %v1288
    %v1290 = vrot.slane %v1285, %v1289
    %v1292 = vmul.f32 %v1269, %v1290
    %v1293 = vmul.f32 %v1270, %v1290
    %v1294 = vmul.f32 %v1271, %v1290
    %v1295 = vmul.f32 %v1272, %v1290
    %v1296 = vmul.f32 %v1273, %v1290
    %v1297 = vmul.f32 %v1274, %v1290
    %v1298 = vmul.f32 %v1275, %v1290
    %v1299 = vmul.f32 %v1276, %v1290
    %v1300 = vmul.f32 %v1277, %v1290
    %v1301 = vmul.f32 %v1278, %v1290
    %v1302 = vmul.f32 %v1279, %v1290
    %v1303 = vmul.f32 %v1280, %v1290
    %v1304 = vmul.f32 %v1281, %v1290
    %v1305 = vmul.f32 %v1282, %v1290
    %v1306 = vmul.f32 %v1283, %v1290
    %v1307 = vmul.f32 %v1284, %v1290
    %v1308 = vld [vmem:[%s9] sm:$0x1]
    %v1310 = vlaneseq
    %v1311 = vshrl.u32 %v1310, 7
    %v1312 = vsub.s32 0, %v1311
    %v1313 = vrot.slane %v1308, %v1312
    %v1315 = vadd.f32 %v1292, %v1313
    %v1316 = vadd.f32 %v1293, %v1313
    %v1317 = vadd.f32 %v1294, %v1313
    %v1318 = vadd.f32 %v1295, %v1313
    %v1319 = vadd.f32 %v1296, %v1313
    %v1320 = vadd.f32 %v1297, %v1313
    %v1321 = vadd.f32 %v1298, %v1313
    %v1322 = vadd.f32 %v1299, %v1313
    %v1323 = vadd.f32 %v1300, %v1313
    %v1324 = vadd.f32 %v1301, %v1313
    %v1325 = vadd.f32 %v1302, %v1313
    %v1326 = vadd.f32 %v1303, %v1313
    %v1327 = vadd.f32 %v1304, %v1313
    %v1328 = vadd.f32 %v1305, %v1313
    %v1329 = vadd.f32 %v1306, %v1313
    %v1330 = vadd.f32 %v1307, %v1313
    %v1331 = vpack.c.bf16 %v1316, %v1315
    %v1332 = vpack.c.bf16 %v1318, %v1317
    %v1333 = vpack.c.bf16 %v1320, %v1319
    %v1334 = vpack.c.bf16 %v1322, %v1321
    %v1335 = vpack.c.bf16 %v1324, %v1323
    %v1336 = vpack.c.bf16 %v1326, %v1325
    %v1337 = vpack.c.bf16 %v1328, %v1327
    %v1338 = vpack.c.bf16 %v1330, %v1329
    %v1347 = vunpack.c.l.b16 %v1331
    %v1348 = vunpack.c.h.b16 %v1331
    %v1349 = vunpack.c.l.b16 %v1332
    %v1350 = vunpack.c.h.b16 %v1332
    %v1351 = vunpack.c.l.b16 %v1333
    %v1352 = vunpack.c.h.b16 %v1333
    %v1353 = vunpack.c.l.b16 %v1334
    %v1354 = vunpack.c.h.b16 %v1334
    %v1355 = vunpack.c.l.b16 %v1335
    %v1356 = vunpack.c.h.b16 %v1335
    %v1357 = vunpack.c.l.b16 %v1336
    %v1358 = vunpack.c.h.b16 %v1336
    %v1359 = vunpack.c.l.b16 %v1337
    %v1360 = vunpack.c.h.b16 %v1337
    %v1361 = vunpack.c.l.b16 %v1338
    %v1362 = vunpack.c.h.b16 %v1338
    %v1363 = vpack.c.b16 %v1347, %v1347
    %v1364 = vpack.c.b16 %v1348, %v1348
    %v1365 = vpack.c.b16 %v1349, %v1349
    %v1366 = vpack.c.b16 %v1350, %v1350
    %v1367 = vpack.c.b16 %v1351, %v1351
    %v1368 = vpack.c.b16 %v1352, %v1352
    %v1369 = vpack.c.b16 %v1353, %v1353
    %v1370 = vpack.c.b16 %v1354, %v1354
    %v1371 = vpack.c.b16 %v1355, %v1355
    %v1372 = vpack.c.b16 %v1356, %v1356
    %v1373 = vpack.c.b16 %v1357, %v1357
    %v1374 = vpack.c.b16 %v1358, %v1358
    %v1375 = vpack.c.b16 %v1359, %v1359
    %v1376 = vpack.c.b16 %v1360, %v1360
    %v1377 = vpack.c.b16 %v1361, %v1361
    %v1378 = vpack.c.b16 %v1362, %v1362
    %1395 = vst [vmem:[%s10] sm:$0xf] %v1363
    %1396 = vst [vmem:[%s10 + $0x4] sm:$0xf] %v1364
    %1397 = vst [vmem:[%s10 + $0x8] sm:$0xf] %v1365
    %1398 = vst [vmem:[%s10 + $0xc] sm:$0xf] %v1366
    %1399 = vst [vmem:[%s10 + $0x10] sm:$0xf] %v1367
    %1400 = vst [vmem:[%s10 + $0x14] sm:$0xf] %v1368
    %1401 = vst [vmem:[%s10 + $0x18] sm:$0xf] %v1369
    %1402 = vst [vmem:[%s10 + $0x1c] sm:$0xf] %v1370
    %1403 = vst [vmem:[%s10 + $0x20] sm:$0xf] %v1371
    %1404 = vst [vmem:[%s10 + $0x24] sm:$0xf] %v1372
    %1405 = vst [vmem:[%s10 + $0x28] sm:$0xf] %v1373
    %1406 = vst [vmem:[%s10 + $0x2c] sm:$0xf] %v1374
    %1407 = vst [vmem:[%s10 + $0x30] sm:$0xf] %v1375
    %1408 = vst [vmem:[%s10 + $0x34] sm:$0xf] %v1376
    %1409 = vst [vmem:[%s10 + $0x38] sm:$0xf] %v1377
    %1410 = vst [vmem:[%s10 + $0x3c] sm:$0xf] %v1378
  $region49: #{_lambda_.8} parent=0 // pred_fallthru
    _
  // Predicated region
  $region50: #{_lambda_.8} parent=0 // pred_check
    _
  $region51: #{_lambda_.8} parent=0 // pred_check_branch
    %1412 = sbr.rel (0) target = $region53
  $region52: #{_lambda_.8} parent=0 // pred_region
    _
  $region53: #{_lambda_.8} parent=0 // pred_fallthru
    _
  // Predicated region
  $region54: #{_lambda_.8} parent=0 // pred_check
    _
  $region55: #{_lambda_.8} parent=0 // pred_check_branch
    %1414 = sbr.rel (0) target = $region57
  $region56: #{_lambda_.8} parent=0 // pred_region
    _
  $region57: #{_lambda_.8} parent=0 // pred_fallthru
    _

// kernel: _lambda_.9
$region0: #{_lambda_.9}
  #allocation0 [shape = 'u32[]', space=smem, size = 0x4, offset = 0x4, fixed_abs, tag = 'smem constant byte address 0x4 - core index']
  #allocation1 [shape = 'u32[144,128]{1,0:T(1,128)}', space=vmem, size = 0x12000, scoped, tag = 'internal scratch']
  %s0 = inlined_call_operand.vmem [shape: bf16[128,128], index: 0, kind: input, shape index: {}]
  %s1 = inlined_call_operand.vmem [shape: f32[512,128], index: 1, kind: input, shape index: {}]
  %s2 = inlined_call_operand.vmem [shape: s32[512,1], index: 2, kind: input, shape index: {}]
  %s3 = inlined_call_operand.vmem [shape: f32[128,128], index: 3, kind: input, shape index: {}]
  %s4 = inlined_call_operand.vmem [shape: f32[1,128], index: 4, kind: input, shape index: {}]
  %s5 = inlined_call_operand.vmem [shape: bf16[512,128], index: 5, kind: output, shape index: {}]
  %s6 = sld [smem:[#allocation0]]
  $region30: #{_lambda_.9} parent=0
    _
  %s8 = ssub.s32 1, %s6
  %s9 = scalar_select 0, %s8, %s6
  // Predicated region
  $region2: #{_lambda_.9} parent=0 // pred_check
    _
  $region3: #{_lambda_.9} parent=0 // pred_check_branch
    %11 = sbr.rel (0) target = $region5
  $region4: #{_lambda_.9} parent=0 // pred_region
    _
  $region5: #{_lambda_.9} parent=0 // pred_fallthru
    _
  // Predicated region
  $region6: #{_lambda_.9} parent=0 // pred_check
    _
  $region7: #{_lambda_.9} parent=0 // pred_check_branch
    %13 = sbr.rel (0) target = $region9
  $region8: #{_lambda_.9} parent=0 // pred_region
    _
  $region9: #{_lambda_.9} parent=0 // pred_fallthru
    _
  // Predicated region
  $region10: #{_lambda_.9} parent=0 // pred_check
    _
  $region11: #{_lambda_.9} parent=0 // pred_check_branch
    %15 = sbr.rel (0) target = $region13
  $region12: #{_lambda_.9} parent=0 // pred_region
    _
  $region13: #{_lambda_.9} parent=0 // pred_fallthru
    _
  // Predicated region
  $region14: #{_lambda_.9} parent=0 // pred_check
    _
  $region15: #{_lambda_.9} parent=0 // pred_check_branch
    %17 = sbr.rel (0) target = $region17
  $region16: #{_lambda_.9} parent=0 // pred_region
    _
  $region17: #{_lambda_.9} parent=0 // pred_fallthru
    _
  // Predicated region
  $region18: #{_lambda_.9} parent=0 // pred_check
    _
  $region19: #{_lambda_.9} parent=0 // pred_check_branch
    %19 = sbr.rel (0) target = $region21
  $region20: #{_lambda_.9} parent=0 // pred_region
    _
  $region21: #{_lambda_.9} parent=0 // pred_fallthru
    _
  %v21 = vld [vmem:[%s1] sm:$0xff]
  %v22 = vld [vmem:[%s1 + $0x8] sm:$0xff]
  %v23 = vld [vmem:[%s1 + $0x10] sm:$0xff]
  %v24 = vld [vmem:[%s1 + $0x18] sm:$0xff]
  %v25 = vld [vmem:[%s1 + $0x20] sm:$0xff]
  %v26 = vld [vmem:[%s1 + $0x28] sm:$0xff]
  %v27 = vld [vmem:[%s1 + $0x30] sm:$0xff]
  %v28 = vld [vmem:[%s1 + $0x38] sm:$0xff]
  %v29 = vld [vmem:[%s1 + $0x40] sm:$0xff]
  %v30 = vld [vmem:[%s1 + $0x48] sm:$0xff]
  %v31 = vld [vmem:[%s1 + $0x50] sm:$0xff]
  %v32 = vld [vmem:[%s1 + $0x58] sm:$0xff]
  %v33 = vld [vmem:[%s1 + $0x60] sm:$0xff]
  %v34 = vld [vmem:[%s1 + $0x68] sm:$0xff]
  %v35 = vld [vmem:[%s1 + $0x70] sm:$0xff]
  %v36 = vld [vmem:[%s1 + $0x78] sm:$0xff]
  %v37 = vld [vmem:[%s1 + $0x80] sm:$0xff]
  %v38 = vld [vmem:[%s1 + $0x88] sm:$0xff]
  %v39 = vld [vmem:[%s1 + $0x90] sm:$0xff]
  %v40 = vld [vmem:[%s1 + $0x98] sm:$0xff]
  %v41 = vld [vmem:[%s1 + $0xa0] sm:$0xff]
  %v42 = vld [vmem:[%s1 + $0xa8] sm:$0xff]
  %v43 = vld [vmem:[%s1 + $0xb0] sm:$0xff]
  %v44 = vld [vmem:[%s1 + $0xb8] sm:$0xff]
  %v45 = vld [vmem:[%s1 + $0xc0] sm:$0xff]
  %v46 = vld [vmem:[%s1 + $0xc8] sm:$0xff]
  %v47 = vld [vmem:[%s1 + $0xd0] sm:$0xff]
  %v48 = vld [vmem:[%s1 + $0xd8] sm:$0xff]
  %v49 = vld [vmem:[%s1 + $0xe0] sm:$0xff]
  %v50 = vld [vmem:[%s1 + $0xe8] sm:$0xff]
  %v51 = vld [vmem:[%s1 + $0xf0] sm:$0xff]
  %v52 = vld [vmem:[%s1 + $0xf8] sm:$0xff]
  %v53 = vld [vmem:[%s1 + $0x100] sm:$0xff]
  %v54 = vld [vmem:[%s1 + $0x108] sm:$0xff]
  %v55 = vld [vmem:[%s1 + $0x110] sm:$0xff]
  %v56 = vld [vmem:[%s1 + $0x118] sm:$0xff]
  %v57 = vld [vmem:[%s1 + $0x120] sm:$0xff]
  %v58 = vld [vmem:[%s1 + $0x128] sm:$0xff]
  %v59 = vld [vmem:[%s1 + $0x130] sm:$0xff]
  %v60 = vld [vmem:[%s1 + $0x138] sm:$0xff]
  %v61 = vld [vmem:[%s1 + $0x140] sm:$0xff]
  %v62 = vld [vmem:[%s1 + $0x148] sm:$0xff]
  %v63 = vld [vmem:[%s1 + $0x150] sm:$0xff]
  %v64 = vld [vmem:[%s1 + $0x158] sm:$0xff]
  %v65 = vld [vmem:[%s1 + $0x160] sm:$0xff]
  %v66 = vld [vmem:[%s1 + $0x168] sm:$0xff]
  %v67 = vld [vmem:[%s1 + $0x170] sm:$0xff]
  %v68 = vld [vmem:[%s1 + $0x178] sm:$0xff]
  %v69 = vld [vmem:[%s1 + $0x180] sm:$0xff]
  %v70 = vld [vmem:[%s1 + $0x188] sm:$0xff]
  %v71 = vld [vmem:[%s1 + $0x190] sm:$0xff]
  %v72 = vld [vmem:[%s1 + $0x198] sm:$0xff]
  %v73 = vld [vmem:[%s1 + $0x1a0] sm:$0xff]
  %v74 = vld [vmem:[%s1 + $0x1a8] sm:$0xff]
  %v75 = vld [vmem:[%s1 + $0x1b0] sm:$0xff]
  %v76 = vld [vmem:[%s1 + $0x1b8] sm:$0xff]
  %v77 = vld [vmem:[%s1 + $0x1c0] sm:$0xff]
  %v78 = vld [vmem:[%s1 + $0x1c8] sm:$0xff]
  %v79 = vld [vmem:[%s1 + $0x1d0] sm:$0xff]
  %v80 = vld [vmem:[%s1 + $0x1d8] sm:$0xff]
  %v81 = vld [vmem:[%s1 + $0x1e0] sm:$0xff]
  %v82 = vld [vmem:[%s1 + $0x1e8] sm:$0xff]
  %v83 = vld [vmem:[%s1 + $0x1f0] sm:$0xff]
  %v84 = vld [vmem:[%s1 + $0x1f8] sm:$0xff]
  %v85 = vld [vmem:[%s3] sm:$0xff]
  %v86 = vld [vmem:[%s3 + $0x8] sm:$0xff]
  %v87 = vld [vmem:[%s3 + $0x10] sm:$0xff]
  %v88 = vld [vmem:[%s3 + $0x18] sm:$0xff]
  %v89 = vld [vmem:[%s3 + $0x20] sm:$0xff]
  %v90 = vld [vmem:[%s3 + $0x28] sm:$0xff]
  %v91 = vld [vmem:[%s3 + $0x30] sm:$0xff]
  %v92 = vld [vmem:[%s3 + $0x38] sm:$0xff]
  %v93 = vld [vmem:[%s3 + $0x40] sm:$0xff]
  %v94 = vld [vmem:[%s3 + $0x48] sm:$0xff]
  %v95 = vld [vmem:[%s3 + $0x50] sm:$0xff]
  %v96 = vld [vmem:[%s3 + $0x58] sm:$0xff]
  %v97 = vld [vmem:[%s3 + $0x60] sm:$0xff]
  %v98 = vld [vmem:[%s3 + $0x68] sm:$0xff]
  %v99 = vld [vmem:[%s3 + $0x70] sm:$0xff]
  %v100 = vld [vmem:[%s3 + $0x78] sm:$0xff]
  %v101 = vld [vmem:[%s4] sm:$0x1]
  %v103 = vlaneseq
  %v104 = vshrl.u32 %v103, 7
  %v105 = vsub.s32 0, %v104
  %v106 = vrot.slane %v101, %v105
  %108 = vmatprep.subr.mxu0 0.0
  %109 = vmatpush1.msra.mxu0 %v100
  %110 = vmatprep.subr.mxu0 0.0
  %111 = vmatpush1.msra.mxu0 %v99
  %112 = vmatprep.subr.mxu0 0.0
  %113 = vmatpush1.msra.mxu0 %v98
  %114 = vmatprep.subr.mxu0 0.0
  %115 = vmatpush1.msra.mxu0 %v97
  %116 = vmatprep.subr.mxu0 0.0
  %117 = vmatpush1.msra.mxu0 %v96
  %118 = vmatprep.subr.mxu0 0.0
  %119 = vmatpush1.msra.mxu0 %v95
  %120 = vmatprep.subr.mxu0 0.0
  %121 = vmatpush1.msra.mxu0 %v94
  %122 = vmatprep.subr.mxu0 0.0
  %123 = vmatpush1.msra.mxu0 %v93
  %124 = vmatprep.subr.mxu0 0.0
  %125 = vmatpush1.msra.mxu0 %v92
  %126 = vmatprep.subr.mxu0 0.0
  %127 = vmatpush1.msra.mxu0 %v91
  %128 = vmatprep.subr.mxu0 0.0
  %129 = vmatpush1.msra.mxu0 %v90
  %130 = vmatprep.subr.mxu0 0.0
  %131 = vmatpush1.msra.mxu0 %v89
  %132 = vmatprep.subr.mxu0 0.0
  %133 = vmatpush1.msra.mxu0 %v88
  %134 = vmatprep.subr.mxu0 0.0
  %135 = vmatpush1.msra.mxu0 %v87
  %136 = vmatprep.subr.mxu0 0.0
  %137 = vmatpush1.msra.mxu0 %v86
  %138 = vmatprep.subr.mxu0 0.0
  %139 = vmatpush1.msra.mxu0 %v85
  %140 = vmatprep.subr.mxu0 0.0
  %141 = vmatpush2.msra.mxu0 0.0
  %142 = vmatprep.subr.mxu0 0.0
  %143 = vmatpush2.msra.mxu0 0.0
  %144 = vmatprep.subr.mxu0 0.0
  %145 = vmatpush2.msra.mxu0 0.0
  %146 = vmatprep.subr.mxu0 0.0
  %147 = vmatpush2.msra.mxu0 0.0
  %148 = vmatprep.subr.mxu0 0.0
  %149 = vmatpush2.msra.mxu0 0.0
  %150 = vmatprep.subr.mxu0 0.0
  %151 = vmatpush2.msra.mxu0 0.0
  %152 = vmatprep.subr.mxu0 0.0
  %153 = vmatpush2.msra.mxu0 0.0
  %154 = vmatprep.subr.mxu0 0.0
  %155 = vmatpush2.msra.mxu0 0.0
  %156 = vmatprep.subr.mxu0 0.0
  %157 = vmatpush2.msra.mxu0 0.0
  %158 = vmatprep.subr.mxu0 0.0
  %159 = vmatpush2.msra.mxu0 0.0
  %160 = vmatprep.subr.mxu0 0.0
  %161 = vmatpush2.msra.mxu0 0.0
  %162 = vmatprep.subr.mxu0 0.0
  %163 = vmatpush2.msra.mxu0 0.0
  %164 = vmatprep.subr.mxu0 0.0
  %165 = vmatpush2.msra.mxu0 0.0
  %166 = vmatprep.subr.mxu0 0.0
  %167 = vmatpush2.msra.mxu0 0.0
  %168 = vmatprep.subr.mxu0 0.0
  %169 = vmatpush2.msra.mxu0 0.0
  %170 = vmatprep.subr.mxu0 0.0
  %171 = vmatpush2.msra.mxu0 0.0
  %172 = vmatprep.mubr.f32.mxu0 0.0
  %173 = vmatmul.mubr.f32.gmra.mxu0 %v21
  %v174 = vpop.f32.mrf.mxu0
  %v175 = vadd.f32 %v106, %v174
  %v176 = vpop.f32.mrf.mxu0
  %177 = vmatprep.mubr.f32.mxu0 0.0
  %178 = vmatmul.mubr.f32.gmra.mxu0 %v22
  %v179 = vpop.f32.mrf.mxu0
  %v180 = vadd.f32 %v106, %v179
  %v181 = vpop.f32.mrf.mxu0
  %182 = vmatprep.mubr.f32.mxu0 0.0
  %183 = vmatmul.mubr.f32.gmra.mxu0 %v23
  %v184 = vpop.f32.mrf.mxu0
  %v185 = vadd.f32 %v106, %v184
  %v186 = vpop.f32.mrf.mxu0
  %187 = vmatprep.mubr.f32.mxu0 0.0
  %188 = vmatmul.mubr.f32.gmra.mxu0 %v24
  %v189 = vpop.f32.mrf.mxu0
  %v190 = vadd.f32 %v106, %v189
  %v191 = vpop.f32.mrf.mxu0
  %192 = vmatprep.mubr.f32.mxu0 0.0
  %193 = vmatmul.mubr.f32.gmra.mxu0 %v25
  %v194 = vpop.f32.mrf.mxu0
  %v195 = vadd.f32 %v106, %v194
  %v196 = vpop.f32.mrf.mxu0
  %197 = vmatprep.mubr.f32.mxu0 0.0
  %198 = vmatmul.mubr.f32.gmra.mxu0 %v26
  %v199 = vpop.f32.mrf.mxu0
  %v200 = vadd.f32 %v106, %v199
  %v201 = vpop.f32.mrf.mxu0
  %202 = vmatprep.mubr.f32.mxu0 0.0
  %203 = vmatmul.mubr.f32.gmra.mxu0 %v27
  %v204 = vpop.f32.mrf.mxu0
  %v205 = vadd.f32 %v106, %v204
  %v206 = vpop.f32.mrf.mxu0
  %207 = vmatprep.mubr.f32.mxu0 0.0
  %208 = vmatmul.mubr.f32.gmra.mxu0 %v28
  %v209 = vpop.f32.mrf.mxu0
  %v210 = vadd.f32 %v106, %v209
  %v211 = vpop.f32.mrf.mxu0
  %212 = vmatprep.mubr.f32.mxu0 0.0
  %213 = vmatmul.mubr.f32.gmra.mxu0 %v29
  %v214 = vpop.f32.mrf.mxu0
  %v215 = vadd.f32 %v106, %v214
  %v216 = vpop.f32.mrf.mxu0
  %217 = vmatprep.mubr.f32.mxu0 0.0
  %218 = vmatmul.mubr.f32.gmra.mxu0 %v30
  %v219 = vpop.f32.mrf.mxu0
  %v220 = vadd.f32 %v106, %v219
  %v221 = vpop.f32.mrf.mxu0
  %222 = vmatprep.mubr.f32.mxu0 0.0
  %223 = vmatmul.mubr.f32.gmra.mxu0 %v31
  %v224 = vpop.f32.mrf.mxu0
  %v225 = vadd.f32 %v106, %v224
  %v226 = vpop.f32.mrf.mxu0
  %227 = vmatprep.mubr.f32.mxu0 0.0
  %228 = vmatmul.mubr.f32.gmra.mxu0 %v32
  %v229 = vpop.f32.mrf.mxu0
  %v230 = vadd.f32 %v106, %v229
  %v231 = vpop.f32.mrf.mxu0
  %232 = vmatprep.mubr.f32.mxu0 0.0
  %233 = vmatmul.mubr.f32.gmra.mxu0 %v33
  %v234 = vpop.f32.mrf.mxu0
  %v235 = vadd.f32 %v106, %v234
  %v236 = vpop.f32.mrf.mxu0
  %237 = vmatprep.mubr.f32.mxu0 0.0
  %238 = vmatmul.mubr.f32.gmra.mxu0 %v34
  %v239 = vpop.f32.mrf.mxu0
  %v240 = vadd.f32 %v106, %v239
  %v241 = vpop.f32.mrf.mxu0
  %242 = vmatprep.mubr.f32.mxu0 0.0
  %243 = vmatmul.mubr.f32.gmra.mxu0 %v35
  %v244 = vpop.f32.mrf.mxu0
  %v245 = vadd.f32 %v106, %v244
  %v246 = vpop.f32.mrf.mxu0
  %247 = vmatprep.mubr.f32.mxu0 0.0
  %248 = vmatmul.mubr.f32.gmra.mxu0 %v36
  %v249 = vpop.f32.mrf.mxu0
  %v250 = vadd.f32 %v106, %v249
  %v251 = vpop.f32.mrf.mxu0
  %252 = vmatprep.mubr.f32.mxu0 0.0
  %253 = vmatmul.mubr.f32.gmra.mxu0 %v37
  %v254 = vpop.f32.mrf.mxu0
  %v255 = vadd.f32 %v106, %v254
  %v256 = vpop.f32.mrf.mxu0
  %257 = vmatprep.mubr.f32.mxu0 0.0
  %258 = vmatmul.mubr.f32.gmra.mxu0 %v38
  %v259 = vpop.f32.mrf.mxu0
  %v260 = vadd.f32 %v106, %v259
  %v261 = vpop.f32.mrf.mxu0
  %262 = vmatprep.mubr.f32.mxu0 0.0
  %263 = vmatmul.mubr.f32.gmra.mxu0 %v39
  %v264 = vpop.f32.mrf.mxu0
  %v265 = vadd.f32 %v106, %v264
  %v266 = vpop.f32.mrf.mxu0
  %267 = vmatprep.mubr.f32.mxu0 0.0
  %268 = vmatmul.mubr.f32.gmra.mxu0 %v40
  %v269 = vpop.f32.mrf.mxu0
  %v270 = vadd.f32 %v106, %v269
  %v271 = vpop.f32.mrf.mxu0
  %272 = vmatprep.mubr.f32.mxu0 0.0
  %273 = vmatmul.mubr.f32.gmra.mxu0 %v41
  %v274 = vpop.f32.mrf.mxu0
  %v275 = vadd.f32 %v106, %v274
  %v276 = vpop.f32.mrf.mxu0
  %277 = vmatprep.mubr.f32.mxu0 0.0
  %278 = vmatmul.mubr.f32.gmra.mxu0 %v42
  %v279 = vpop.f32.mrf.mxu0
  %v280 = vadd.f32 %v106, %v279
  %v281 = vpop.f32.mrf.mxu0
  %282 = vmatprep.mubr.f32.mxu0 0.0
  %283 = vmatmul.mubr.f32.gmra.mxu0 %v43
  %v284 = vpop.f32.mrf.mxu0
  %v285 = vadd.f32 %v106, %v284
  %v286 = vpop.f32.mrf.mxu0
  %287 = vmatprep.mubr.f32.mxu0 0.0
  %288 = vmatmul.mubr.f32.gmra.mxu0 %v44
  %v289 = vpop.f32.mrf.mxu0
  %v290 = vadd.f32 %v106, %v289
  %v291 = vpop.f32.mrf.mxu0
  %292 = vmatprep.mubr.f32.mxu0 0.0
  %293 = vmatmul.mubr.f32.gmra.mxu0 %v45
  %v294 = vpop.f32.mrf.mxu0
  %v295 = vadd.f32 %v106, %v294
  %v296 = vpop.f32.mrf.mxu0
  %297 = vmatprep.mubr.f32.mxu0 0.0
  %298 = vmatmul.mubr.f32.gmra.mxu0 %v46
  %v299 = vpop.f32.mrf.mxu0
  %v300 = vadd.f32 %v106, %v299
  %v301 = vpop.f32.mrf.mxu0
  %302 = vmatprep.mubr.f32.mxu0 0.0
  %303 = vmatmul.mubr.f32.gmra.mxu0 %v47
  %v304 = vpop.f32.mrf.mxu0
  %v305 = vadd.f32 %v106, %v304
  %v306 = vpop.f32.mrf.mxu0
  %307 = vmatprep.mubr.f32.mxu0 0.0
  %308 = vmatmul.mubr.f32.gmra.mxu0 %v48
  %v309 = vpop.f32.mrf.mxu0
  %v310 = vadd.f32 %v106, %v309
  %v311 = vpop.f32.mrf.mxu0
  %312 = vmatprep.mubr.f32.mxu0 0.0
  %313 = vmatmul.mubr.f32.gmra.mxu0 %v49
  %v314 = vpop.f32.mrf.mxu0
  %v315 = vadd.f32 %v106, %v314
  %v316 = vpop.f32.mrf.mxu0
  %317 = vmatprep.mubr.f32.mxu0 0.0
  %318 = vmatmul.mubr.f32.gmra.mxu0 %v50
  %v319 = vpop.f32.mrf.mxu0
  %v320 = vadd.f32 %v106, %v319
  %v321 = vpop.f32.mrf.mxu0
  %322 = vmatprep.mubr.f32.mxu0 0.0
  %323 = vmatmul.mubr.f32.gmra.mxu0 %v51
  %v324 = vpop.f32.mrf.mxu0
  %v325 = vadd.f32 %v106, %v324
  %v326 = vpop.f32.mrf.mxu0
  %327 = vmatprep.mubr.f32.mxu0 0.0
  %328 = vmatmul.mubr.f32.gmra.mxu0 %v52
  %v329 = vpop.f32.mrf.mxu0
  %v330 = vadd.f32 %v106, %v329
  %v331 = vpop.f32.mrf.mxu0
  %332 = vmatprep.mubr.f32.mxu0 0.0
  %333 = vmatmul.mubr.f32.gmra.mxu0 %v53
  %v334 = vpop.f32.mrf.mxu0
  %v335 = vadd.f32 %v106, %v334
  %v336 = vpop.f32.mrf.mxu0
  %337 = vmatprep.mubr.f32.mxu0 0.0
  %338 = vmatmul.mubr.f32.gmra.mxu0 %v54
  %v339 = vpop.f32.mrf.mxu0
  %v340 = vadd.f32 %v106, %v339
  %v341 = vpop.f32.mrf.mxu0
  %342 = vmatprep.mubr.f32.mxu0 0.0
  %343 = vmatmul.mubr.f32.gmra.mxu0 %v55
  %v344 = vpop.f32.mrf.mxu0
  %v345 = vadd.f32 %v106, %v344
  %v346 = vpop.f32.mrf.mxu0
  %347 = vmatprep.mubr.f32.mxu0 0.0
  %348 = vmatmul.mubr.f32.gmra.mxu0 %v56
  %v349 = vpop.f32.mrf.mxu0
  %v350 = vadd.f32 %v106, %v349
  %v351 = vpop.f32.mrf.mxu0
  %352 = vmatprep.mubr.f32.mxu0 0.0
  %353 = vmatmul.mubr.f32.gmra.mxu0 %v57
  %v354 = vpop.f32.mrf.mxu0
  %v355 = vadd.f32 %v106, %v354
  %v356 = vpop.f32.mrf.mxu0
  %357 = vmatprep.mubr.f32.mxu0 0.0
  %358 = vmatmul.mubr.f32.gmra.mxu0 %v58
  %v359 = vpop.f32.mrf.mxu0
  %v360 = vadd.f32 %v106, %v359
  %v361 = vpop.f32.mrf.mxu0
  %362 = vmatprep.mubr.f32.mxu0 0.0
  %363 = vmatmul.mubr.f32.gmra.mxu0 %v59
  %v364 = vpop.f32.mrf.mxu0
  %v365 = vadd.f32 %v106, %v364
  %v366 = vpop.f32.mrf.mxu0
  %367 = vmatprep.mubr.f32.mxu0 0.0
  %368 = vmatmul.mubr.f32.gmra.mxu0 %v60
  %v369 = vpop.f32.mrf.mxu0
  %v370 = vadd.f32 %v106, %v369
  %v371 = vpop.f32.mrf.mxu0
  %372 = vmatprep.mubr.f32.mxu0 0.0
  %373 = vmatmul.mubr.f32.gmra.mxu0 %v61
  %v374 = vpop.f32.mrf.mxu0
  %v375 = vadd.f32 %v106, %v374
  %v376 = vpop.f32.mrf.mxu0
  %377 = vmatprep.mubr.f32.mxu0 0.0
  %378 = vmatmul.mubr.f32.gmra.mxu0 %v62
  %v379 = vpop.f32.mrf.mxu0
  %v380 = vadd.f32 %v106, %v379
  %v381 = vpop.f32.mrf.mxu0
  %382 = vmatprep.mubr.f32.mxu0 0.0
  %383 = vmatmul.mubr.f32.gmra.mxu0 %v63
  %v384 = vpop.f32.mrf.mxu0
  %v385 = vadd.f32 %v106, %v384
  %v386 = vpop.f32.mrf.mxu0
  %387 = vmatprep.mubr.f32.mxu0 0.0
  %388 = vmatmul.mubr.f32.gmra.mxu0 %v64
  %v389 = vpop.f32.mrf.mxu0
  %v390 = vadd.f32 %v106, %v389
  %v391 = vpop.f32.mrf.mxu0
  %392 = vmatprep.mubr.f32.mxu0 0.0
  %393 = vmatmul.mubr.f32.gmra.mxu0 %v65
  %v394 = vpop.f32.mrf.mxu0
  %v395 = vadd.f32 %v106, %v394
  %v396 = vpop.f32.mrf.mxu0
  %397 = vmatprep.mubr.f32.mxu0 0.0
  %398 = vmatmul.mubr.f32.gmra.mxu0 %v66
  %v399 = vpop.f32.mrf.mxu0
  %v400 = vadd.f32 %v106, %v399
  %v401 = vpop.f32.mrf.mxu0
  %402 = vmatprep.mubr.f32.mxu0 0.0
  %403 = vmatmul.mubr.f32.gmra.mxu0 %v67
  %v404 = vpop.f32.mrf.mxu0
  %v405 = vadd.f32 %v106, %v404
  %v406 = vpop.f32.mrf.mxu0
  %407 = vmatprep.mubr.f32.mxu0 0.0
  %408 = vmatmul.mubr.f32.gmra.mxu0 %v68
  %v409 = vpop.f32.mrf.mxu0
  %v410 = vadd.f32 %v106, %v409
  %v411 = vpop.f32.mrf.mxu0
  %412 = vmatprep.mubr.f32.mxu0 0.0
  %413 = vmatmul.mubr.f32.gmra.mxu0 %v69
  %v414 = vpop.f32.mrf.mxu0
  %v415 = vadd.f32 %v106, %v414
  %v416 = vpop.f32.mrf.mxu0
  %417 = vmatprep.mubr.f32.mxu0 0.0
  %418 = vmatmul.mubr.f32.gmra.mxu0 %v70
  %v419 = vpop.f32.mrf.mxu0
  %v420 = vadd.f32 %v106, %v419
  %v421 = vpop.f32.mrf.mxu0
  %422 = vmatprep.mubr.f32.mxu0 0.0
  %423 = vmatmul.mubr.f32.gmra.mxu0 %v71
  %v424 = vpop.f32.mrf.mxu0
  %v425 = vadd.f32 %v106, %v424
  %v426 = vpop.f32.mrf.mxu0
  %427 = vmatprep.mubr.f32.mxu0 0.0
  %428 = vmatmul.mubr.f32.gmra.mxu0 %v72
  %v429 = vpop.f32.mrf.mxu0
  %v430 = vadd.f32 %v106, %v429
  %v431 = vpop.f32.mrf.mxu0
  %432 = vmatprep.mubr.f32.mxu0 0.0
  %433 = vmatmul.mubr.f32.gmra.mxu0 %v73
  %v434 = vpop.f32.mrf.mxu0
  %v435 = vadd.f32 %v106, %v434
  %v436 = vpop.f32.mrf.mxu0
  %437 = vmatprep.mubr.f32.mxu0 0.0
  %438 = vmatmul.mubr.f32.gmra.mxu0 %v74
  %v439 = vpop.f32.mrf.mxu0
  %v440 = vadd.f32 %v106, %v439
  %v441 = vpop.f32.mrf.mxu0
  %442 = vmatprep.mubr.f32.mxu0 0.0
  %443 = vmatmul.mubr.f32.gmra.mxu0 %v75
  %v444 = vpop.f32.mrf.mxu0
  %v445 = vadd.f32 %v106, %v444
  %v446 = vpop.f32.mrf.mxu0
  %447 = vmatprep.mubr.f32.mxu0 0.0
  %448 = vmatmul.mubr.f32.gmra.mxu0 %v76
  %v449 = vpop.f32.mrf.mxu0
  %v450 = vadd.f32 %v106, %v449
  %v451 = vpop.f32.mrf.mxu0
  %452 = vmatprep.mubr.f32.mxu0 0.0
  %453 = vmatmul.mubr.f32.gmra.mxu0 %v77
  %v454 = vpop.f32.mrf.mxu0
  %v455 = vadd.f32 %v106, %v454
  %v456 = vpop.f32.mrf.mxu0
  %457 = vmatprep.mubr.f32.mxu0 0.0
  %458 = vmatmul.mubr.f32.gmra.mxu0 %v78
  %v459 = vpop.f32.mrf.mxu0
  %v460 = vadd.f32 %v106, %v459
  %v461 = vpop.f32.mrf.mxu0
  %462 = vmatprep.mubr.f32.mxu0 0.0
  %463 = vmatmul.mubr.f32.gmra.mxu0 %v79
  %v464 = vpop.f32.mrf.mxu0
  %v465 = vadd.f32 %v106, %v464
  %v466 = vpop.f32.mrf.mxu0
  %467 = vmatprep.mubr.f32.mxu0 0.0
  %468 = vmatmul.mubr.f32.gmra.mxu0 %v80
  %v469 = vpop.f32.mrf.mxu0
  %v470 = vadd.f32 %v106, %v469
  %v471 = vpop.f32.mrf.mxu0
  %472 = vmatprep.mubr.f32.mxu0 0.0
  %473 = vmatmul.mubr.f32.gmra.mxu0 %v81
  %v474 = vpop.f32.mrf.mxu0
  %v475 = vadd.f32 %v106, %v474
  %v476 = vpop.f32.mrf.mxu0
  %477 = vmatprep.mubr.f32.mxu0 0.0
  %478 = vmatmul.mubr.f32.gmra.mxu0 %v82
  %v479 = vpop.f32.mrf.mxu0
  %v480 = vadd.f32 %v106, %v479
  %v481 = vpop.f32.mrf.mxu0
  %482 = vmatprep.mubr.f32.mxu0 0.0
  %483 = vmatmul.mubr.f32.gmra.mxu0 %v83
  %v484 = vpop.f32.mrf.mxu0
  %v485 = vadd.f32 %v106, %v484
  %v486 = vpop.f32.mrf.mxu0
  %487 = vmatprep.mubr.f32.mxu0 0.0
  %488 = vmatmul.mubr.f32.gmra.mxu0 %v84
  %v489 = vpop.f32.mrf.mxu0
  %v490 = vadd.f32 %v106, %v489
  %v491 = vpop.f32.mrf.mxu0
  %492 = vdwg.mxu0
  %v493 = vld [vmem:[%s2] sm:$0xff]
  %v494 = vld [vmem:[%s2 + $0x8] sm:$0xff]
  %v495 = vld [vmem:[%s2 + $0x10] sm:$0xff]
  %v496 = vld [vmem:[%s2 + $0x18] sm:$0xff]
  %v497 = vld [vmem:[%s2 + $0x20] sm:$0xff]
  %v498 = vld [vmem:[%s2 + $0x28] sm:$0xff]
  %v499 = vld [vmem:[%s2 + $0x30] sm:$0xff]
  %v500 = vld [vmem:[%s2 + $0x38] sm:$0xff]
  %v501 = vld [vmem:[%s2 + $0x40] sm:$0xff]
  %v502 = vld [vmem:[%s2 + $0x48] sm:$0xff]
  %v503 = vld [vmem:[%s2 + $0x50] sm:$0xff]
  %v504 = vld [vmem:[%s2 + $0x58] sm:$0xff]
  %v505 = vld [vmem:[%s2 + $0x60] sm:$0xff]
  %v506 = vld [vmem:[%s2 + $0x68] sm:$0xff]
  %v507 = vld [vmem:[%s2 + $0x70] sm:$0xff]
  %v508 = vld [vmem:[%s2 + $0x78] sm:$0xff]
  %v509 = vld [vmem:[%s2 + $0x80] sm:$0xff]
  %v510 = vld [vmem:[%s2 + $0x88] sm:$0xff]
  %v511 = vld [vmem:[%s2 + $0x90] sm:$0xff]
  %v512 = vld [vmem:[%s2 + $0x98] sm:$0xff]
  %v513 = vld [vmem:[%s2 + $0xa0] sm:$0xff]
  %v514 = vld [vmem:[%s2 + $0xa8] sm:$0xff]
  %v515 = vld [vmem:[%s2 + $0xb0] sm:$0xff]
  %v516 = vld [vmem:[%s2 + $0xb8] sm:$0xff]
  %v517 = vld [vmem:[%s2 + $0xc0] sm:$0xff]
  %v518 = vld [vmem:[%s2 + $0xc8] sm:$0xff]
  %v519 = vld [vmem:[%s2 + $0xd0] sm:$0xff]
  %v520 = vld [vmem:[%s2 + $0xd8] sm:$0xff]
  %v521 = vld [vmem:[%s2 + $0xe0] sm:$0xff]
  %v522 = vld [vmem:[%s2 + $0xe8] sm:$0xff]
  %v523 = vld [vmem:[%s2 + $0xf0] sm:$0xff]
  %v524 = vld [vmem:[%s2 + $0xf8] sm:$0xff]
  %v525 = vld [vmem:[%s2 + $0x100] sm:$0xff]
  %v526 = vld [vmem:[%s2 + $0x108] sm:$0xff]
  %v527 = vld [vmem:[%s2 + $0x110] sm:$0xff]
  %v528 = vld [vmem:[%s2 + $0x118] sm:$0xff]
  %v529 = vld [vmem:[%s2 + $0x120] sm:$0xff]
  %v530 = vld [vmem:[%s2 + $0x128] sm:$0xff]
  %v531 = vld [vmem:[%s2 + $0x130] sm:$0xff]
  %v532 = vld [vmem:[%s2 + $0x138] sm:$0xff]
  %v533 = vld [vmem:[%s2 + $0x140] sm:$0xff]
  %v534 = vld [vmem:[%s2 + $0x148] sm:$0xff]
  %v535 = vld [vmem:[%s2 + $0x150] sm:$0xff]
  %v536 = vld [vmem:[%s2 + $0x158] sm:$0xff]
  %v537 = vld [vmem:[%s2 + $0x160] sm:$0xff]
  %v538 = vld [vmem:[%s2 + $0x168] sm:$0xff]
  %v539 = vld [vmem:[%s2 + $0x170] sm:$0xff]
  %v540 = vld [vmem:[%s2 + $0x178] sm:$0xff]
  %v541 = vld [vmem:[%s2 + $0x180] sm:$0xff]
  %v542 = vld [vmem:[%s2 + $0x188] sm:$0xff]
  %v543 = vld [vmem:[%s2 + $0x190] sm:$0xff]
  %v544 = vld [vmem:[%s2 + $0x198] sm:$0xff]
  %v545 = vld [vmem:[%s2 + $0x1a0] sm:$0xff]
  %v546 = vld [vmem:[%s2 + $0x1a8] sm:$0xff]
  %v547 = vld [vmem:[%s2 + $0x1b0] sm:$0xff]
  %v548 = vld [vmem:[%s2 + $0x1b8] sm:$0xff]
  %v549 = vld [vmem:[%s2 + $0x1c0] sm:$0xff]
  %v550 = vld [vmem:[%s2 + $0x1c8] sm:$0xff]
  %v551 = vld [vmem:[%s2 + $0x1d0] sm:$0xff]
  %v552 = vld [vmem:[%s2 + $0x1d8] sm:$0xff]
  %v553 = vld [vmem:[%s2 + $0x1e0] sm:$0xff]
  %v554 = vld [vmem:[%s2 + $0x1e8] sm:$0xff]
  %v555 = vld [vmem:[%s2 + $0x1f0] sm:$0xff]
  %v556 = vld [vmem:[%s2 + $0x1f8] sm:$0xff]
  %v557 = vlaneseq
  %v558 = vand.u32 %v557, 127
  %559 = vset.pattern.permute.xlu0 0
  %560 = vperm.xlu0 %559, %v493
  %v561 = vpop.permute.xlu0 %560
  %562 = vset.pattern.permute.xlu0 0
  %563 = vperm.xlu0 %562, %v494
  %v564 = vpop.permute.xlu0 %563
  %565 = vset.pattern.permute.xlu0 0
  %566 = vperm.xlu0 %565, %v495
  %v567 = vpop.permute.xlu0 %566
  %568 = vset.pattern.permute.xlu0 0
  %569 = vperm.xlu0 %568, %v496
  %v570 = vpop.permute.xlu0 %569
  %571 = vset.pattern.permute.xlu0 0
  %572 = vperm.xlu0 %571, %v497
  %v573 = vpop.permute.xlu0 %572
  %574 = vset.pattern.permute.xlu0 0
  %575 = vperm.xlu0 %574, %v498
  %v576 = vpop.permute.xlu0 %575
  %577 = vset.pattern.permute.xlu0 0
  %578 = vperm.xlu0 %577, %v499
  %v579 = vpop.permute.xlu0 %578
  %580 = vset.pattern.permute.xlu0 0
  %581 = vperm.xlu0 %580, %v500
  %v582 = vpop.permute.xlu0 %581
  %583 = vset.pattern.permute.xlu0 0
  %584 = vperm.xlu0 %583, %v501
  %v585 = vpop.permute.xlu0 %584
  %586 = vset.pattern.permute.xlu0 0
  %587 = vperm.xlu0 %586, %v502
  %v588 = vpop.permute.xlu0 %587
  %589 = vset.pattern.permute.xlu0 0
  %590 = vperm.xlu0 %589, %v503
  %v591 = vpop.permute.xlu0 %590
  %592 = vset.pattern.permute.xlu0 0
  %593 = vperm.xlu0 %592, %v504
  %v594 = vpop.permute.xlu0 %593
  %595 = vset.pattern.permute.xlu0 0
  %596 = vperm.xlu0 %595, %v505
  %v597 = vpop.permute.xlu0 %596
  %598 = vset.pattern.permute.xlu0 0
  %599 = vperm.xlu0 %598, %v506
  %v600 = vpop.permute.xlu0 %599
  %601 = vset.pattern.permute.xlu0 0
  %602 = vperm.xlu0 %601, %v507
  %v603 = vpop.permute.xlu0 %602
  %604 = vset.pattern.permute.xlu0 0
  %605 = vperm.xlu0 %604, %v508
  %v606 = vpop.permute.xlu0 %605
  %607 = vset.pattern.permute.xlu0 0
  %608 = vperm.xlu0 %607, %v509
  %v609 = vpop.permute.xlu0 %608
  %610 = vset.pattern.permute.xlu0 0
  %611 = vperm.xlu0 %610, %v510
  %v612 = vpop.permute.xlu0 %611
  %613 = vset.pattern.permute.xlu0 0
  %614 = vperm.xlu0 %613, %v511
  %v615 = vpop.permute.xlu0 %614
  %616 = vset.pattern.permute.xlu0 0
  %617 = vperm.xlu0 %616, %v512
  %v618 = vpop.permute.xlu0 %617
  %619 = vset.pattern.permute.xlu0 0
  %620 = vperm.xlu0 %619, %v513
  %v621 = vpop.permute.xlu0 %620
  %622 = vset.pattern.permute.xlu0 0
  %623 = vperm.xlu0 %622, %v514
  %v624 = vpop.permute.xlu0 %623
  %625 = vset.pattern.permute.xlu0 0
  %626 = vperm.xlu0 %625, %v515
  %v627 = vpop.permute.xlu0 %626
  %628 = vset.pattern.permute.xlu0 0
  %629 = vperm.xlu0 %628, %v516
  %v630 = vpop.permute.xlu0 %629
  %631 = vset.pattern.permute.xlu0 0
  %632 = vperm.xlu0 %631, %v517
  %v633 = vpop.permute.xlu0 %632
  %634 = vset.pattern.permute.xlu0 0
  %635 = vperm.xlu0 %634, %v518
  %v636 = vpop.permute.xlu0 %635
  %637 = vset.pattern.permute.xlu0 0
  %638 = vperm.xlu0 %637, %v519
  %v639 = vpop.permute.xlu0 %638
  %640 = vset.pattern.permute.xlu0 0
  %641 = vperm.xlu0 %640, %v520
  %v642 = vpop.permute.xlu0 %641
  %643 = vset.pattern.permute.xlu0 0
  %644 = vperm.xlu0 %643, %v521
  %v645 = vpop.permute.xlu0 %644
  %646 = vset.pattern.permute.xlu0 0
  %647 = vperm.xlu0 %646, %v522
  %v648 = vpop.permute.xlu0 %647
  %649 = vset.pattern.permute.xlu0 0
  %650 = vperm.xlu0 %649, %v523
  %v651 = vpop.permute.xlu0 %650
  %652 = vset.pattern.permute.xlu0 0
  %653 = vperm.xlu0 %652, %v524
  %v654 = vpop.permute.xlu0 %653
  %655 = vset.pattern.permute.xlu0 0
  %656 = vperm.xlu0 %655, %v525
  %v657 = vpop.permute.xlu0 %656
  %658 = vset.pattern.permute.xlu0 0
  %659 = vperm.xlu0 %658, %v526
  %v660 = vpop.permute.xlu0 %659
  %661 = vset.pattern.permute.xlu0 0
  %662 = vperm.xlu0 %661, %v527
  %v663 = vpop.permute.xlu0 %662
  %664 = vset.pattern.permute.xlu0 0
  %665 = vperm.xlu0 %664, %v528
  %v666 = vpop.permute.xlu0 %665
  %667 = vset.pattern.permute.xlu0 0
  %668 = vperm.xlu0 %667, %v529
  %v669 = vpop.permute.xlu0 %668
  %670 = vset.pattern.permute.xlu0 0
  %671 = vperm.xlu0 %670, %v530
  %v672 = vpop.permute.xlu0 %671
  %673 = vset.pattern.permute.xlu0 0
  %674 = vperm.xlu0 %673, %v531
  %v675 = vpop.permute.xlu0 %674
  %676 = vset.pattern.permute.xlu0 0
  %677 = vperm.xlu0 %676, %v532
  %v678 = vpop.permute.xlu0 %677
  %679 = vset.pattern.permute.xlu0 0
  %680 = vperm.xlu0 %679, %v533
  %v681 = vpop.permute.xlu0 %680
  %682 = vset.pattern.permute.xlu0 0
  %683 = vperm.xlu0 %682, %v534
  %v684 = vpop.permute.xlu0 %683
  %685 = vset.pattern.permute.xlu0 0
  %686 = vperm.xlu0 %685, %v535
  %v687 = vpop.permute.xlu0 %686
  %688 = vset.pattern.permute.xlu0 0
  %689 = vperm.xlu0 %688, %v536
  %v690 = vpop.permute.xlu0 %689
  %691 = vset.pattern.permute.xlu0 0
  %692 = vperm.xlu0 %691, %v537
  %v693 = vpop.permute.xlu0 %692
  %694 = vset.pattern.permute.xlu0 0
  %695 = vperm.xlu0 %694, %v538
  %v696 = vpop.permute.xlu0 %695
  %697 = vset.pattern.permute.xlu0 0
  %698 = vperm.xlu0 %697, %v539
  %v699 = vpop.permute.xlu0 %698
  %700 = vset.pattern.permute.xlu0 0
  %701 = vperm.xlu0 %700, %v540
  %v702 = vpop.permute.xlu0 %701
  %703 = vset.pattern.permute.xlu0 0
  %704 = vperm.xlu0 %703, %v541
  %v705 = vpop.permute.xlu0 %704
  %706 = vset.pattern.permute.xlu0 0
  %707 = vperm.xlu0 %706, %v542
  %v708 = vpop.permute.xlu0 %707
  %709 = vset.pattern.permute.xlu0 0
  %710 = vperm.xlu0 %709, %v543
  %v711 = vpop.permute.xlu0 %710
  %712 = vset.pattern.permute.xlu0 0
  %713 = vperm.xlu0 %712, %v544
  %v714 = vpop.permute.xlu0 %713
  %715 = vset.pattern.permute.xlu0 0
  %716 = vperm.xlu0 %715, %v545
  %v717 = vpop.permute.xlu0 %716
  %718 = vset.pattern.permute.xlu0 0
  %719 = vperm.xlu0 %718, %v546
  %v720 = vpop.permute.xlu0 %719
  %721 = vset.pattern.permute.xlu0 0
  %722 = vperm.xlu0 %721, %v547
  %v723 = vpop.permute.xlu0 %722
  %724 = vset.pattern.permute.xlu0 0
  %725 = vperm.xlu0 %724, %v548
  %v726 = vpop.permute.xlu0 %725
  %727 = vset.pattern.permute.xlu0 0
  %728 = vperm.xlu0 %727, %v549
  %v729 = vpop.permute.xlu0 %728
  %730 = vset.pattern.permute.xlu0 0
  %731 = vperm.xlu0 %730, %v550
  %v732 = vpop.permute.xlu0 %731
  %733 = vset.pattern.permute.xlu0 0
  %734 = vperm.xlu0 %733, %v551
  %v735 = vpop.permute.xlu0 %734
  %736 = vset.pattern.permute.xlu0 0
  %737 = vperm.xlu0 %736, %v552
  %v738 = vpop.permute.xlu0 %737
  %739 = vset.pattern.permute.xlu0 0
  %740 = vperm.xlu0 %739, %v553
  %v741 = vpop.permute.xlu0 %740
  %742 = vset.pattern.permute.xlu0 0
  %743 = vperm.xlu0 %742, %v554
  %v744 = vpop.permute.xlu0 %743
  %745 = vset.pattern.permute.xlu0 0
  %746 = vperm.xlu0 %745, %v555
  %v747 = vpop.permute.xlu0 %746
  %748 = vset.pattern.permute.xlu0 0
  %749 = vperm.xlu0 %748, %v556
  %v750 = vpop.permute.xlu0 %749
  %vm751 = vcmp.eq.s32.totalorder %v558, %v561
  %vm752 = vcmp.eq.s32.totalorder %v558, %v564
  %vm753 = vcmp.eq.s32.totalorder %v558, %v567
  %vm754 = vcmp.eq.s32.totalorder %v558, %v570
  %vm755 = vcmp.eq.s32.totalorder %v558, %v573
  %vm756 = vcmp.eq.s32.totalorder %v558, %v576
  %vm757 = vcmp.eq.s32.totalorder %v558, %v579
  %vm758 = vcmp.eq.s32.totalorder %v558, %v582
  %vm759 = vcmp.eq.s32.totalorder %v558, %v585
  %vm760 = vcmp.eq.s32.totalorder %v558, %v588
  %vm761 = vcmp.eq.s32.totalorder %v558, %v591
  %vm762 = vcmp.eq.s32.totalorder %v558, %v594
  %vm763 = vcmp.eq.s32.totalorder %v558, %v597
  %vm764 = vcmp.eq.s32.totalorder %v558, %v600
  %vm765 = vcmp.eq.s32.totalorder %v558, %v603
  %vm766 = vcmp.eq.s32.totalorder %v558, %v606
  %vm767 = vcmp.eq.s32.totalorder %v558, %v609
  %vm768 = vcmp.eq.s32.totalorder %v558, %v612
  %vm769 = vcmp.eq.s32.totalorder %v558, %v615
  %vm770 = vcmp.eq.s32.totalorder %v558, %v618
  %vm771 = vcmp.eq.s32.totalorder %v558, %v621
  %vm772 = vcmp.eq.s32.totalorder %v558, %v624
  %vm773 = vcmp.eq.s32.totalorder %v558, %v627
  %vm774 = vcmp.eq.s32.totalorder %v558, %v630
  %vm775 = vcmp.eq.s32.totalorder %v558, %v633
  %vm776 = vcmp.eq.s32.totalorder %v558, %v636
  %vm777 = vcmp.eq.s32.totalorder %v558, %v639
  %vm778 = vcmp.eq.s32.totalorder %v558, %v642
  %vm779 = vcmp.eq.s32.totalorder %v558, %v645
  %vm780 = vcmp.eq.s32.totalorder %v558, %v648
  %vm781 = vcmp.eq.s32.totalorder %v558, %v651
  %vm782 = vcmp.eq.s32.totalorder %v558, %v654
  %vm783 = vcmp.eq.s32.totalorder %v558, %v657
  %vm784 = vcmp.eq.s32.totalorder %v558, %v660
  %vm785 = vcmp.eq.s32.totalorder %v558, %v663
  %vm786 = vcmp.eq.s32.totalorder %v558, %v666
  %vm787 = vcmp.eq.s32.totalorder %v558, %v669
  %vm788 = vcmp.eq.s32.totalorder %v558, %v672
  %vm789 = vcmp.eq.s32.totalorder %v558, %v675
  %vm790 = vcmp.eq.s32.totalorder %v558, %v678
  %vm791 = vcmp.eq.s32.totalorder %v558, %v681
  %vm792 = vcmp.eq.s32.totalorder %v558, %v684
  %vm793 = vcmp.eq.s32.totalorder %v558, %v687
  %vm794 = vcmp.eq.s32.totalorder %v558, %v690
  %vm795 = vcmp.eq.s32.totalorder %v558, %v693
  %vm796 = vcmp.eq.s32.totalorder %v558, %v696
  %vm797 = vcmp.eq.s32.totalorder %v558, %v699
  %vm798 = vcmp.eq.s32.totalorder %v558, %v702
  %vm799 = vcmp.eq.s32.totalorder %v558, %v705
  %vm800 = vcmp.eq.s32.totalorder %v558, %v708
  %vm801 = vcmp.eq.s32.totalorder %v558, %v711
  %vm802 = vcmp.eq.s32.totalorder %v558, %v714
  %vm803 = vcmp.eq.s32.totalorder %v558, %v717
  %vm804 = vcmp.eq.s32.totalorder %v558, %v720
  %vm805 = vcmp.eq.s32.totalorder %v558, %v723
  %vm806 = vcmp.eq.s32.totalorder %v558, %v726
  %vm807 = vcmp.eq.s32.totalorder %v558, %v729
  %vm808 = vcmp.eq.s32.totalorder %v558, %v732
  %vm809 = vcmp.eq.s32.totalorder %v558, %v735
  %vm810 = vcmp.eq.s32.totalorder %v558, %v738
  %vm811 = vcmp.eq.s32.totalorder %v558, %v741
  %vm812 = vcmp.eq.s32.totalorder %v558, %v744
  %vm813 = vcmp.eq.s32.totalorder %v558, %v747
  %vm814 = vcmp.eq.s32.totalorder %v558, %v750
  %v815 = vsel %vm751, 1, 0
  %v816 = vsel %vm752, 1, 0
  %v817 = vsel %vm753, 1, 0
  %v818 = vsel %vm754, 1, 0
  %v819 = vsel %vm755, 1, 0
  %v820 = vsel %vm756, 1, 0
  %v821 = vsel %vm757, 1, 0
  %v822 = vsel %vm758, 1, 0
  %v823 = vsel %vm759, 1, 0
  %v824 = vsel %vm760, 1, 0
  %v825 = vsel %vm761, 1, 0
  %v826 = vsel %vm762, 1, 0
  %v827 = vsel %vm763, 1, 0
  %v828 = vsel %vm764, 1, 0
  %v829 = vsel %vm765, 1, 0
  %v830 = vsel %vm766, 1, 0
  %v831 = vsel %vm767, 1, 0
  %v832 = vsel %vm768, 1, 0
  %v833 = vsel %vm769, 1, 0
  %v834 = vsel %vm770, 1, 0
  %v835 = vsel %vm771, 1, 0
  %v836 = vsel %vm772, 1, 0
  %v837 = vsel %vm773, 1, 0
  %v838 = vsel %vm774, 1, 0
  %v839 = vsel %vm775, 1, 0
  %v840 = vsel %vm776, 1, 0
  %v841 = vsel %vm777, 1, 0
  %v842 = vsel %vm778, 1, 0
  %v843 = vsel %vm779, 1, 0
  %v844 = vsel %vm780, 1, 0
  %v845 = vsel %vm781, 1, 0
  %v846 = vsel %vm782, 1, 0
  %v847 = vsel %vm783, 1, 0
  %v848 = vsel %vm784, 1, 0
  %v849 = vsel %vm785, 1, 0
  %v850 = vsel %vm786, 1, 0
  %v851 = vsel %vm787, 1, 0
  %v852 = vsel %vm788, 1, 0
  %v853 = vsel %vm789, 1, 0
  %v854 = vsel %vm790, 1, 0
  %v855 = vsel %vm791, 1, 0
  %v856 = vsel %vm792, 1, 0
  %v857 = vsel %vm793, 1, 0
  %v858 = vsel %vm794, 1, 0
  %v859 = vsel %vm795, 1, 0
  %v860 = vsel %vm796, 1, 0
  %v861 = vsel %vm797, 1, 0
  %v862 = vsel %vm798, 1, 0
  %v863 = vsel %vm799, 1, 0
  %v864 = vsel %vm800, 1, 0
  %v865 = vsel %vm801, 1, 0
  %v866 = vsel %vm802, 1, 0
  %v867 = vsel %vm803, 1, 0
  %v868 = vsel %vm804, 1, 0
  %v869 = vsel %vm805, 1, 0
  %v870 = vsel %vm806, 1, 0
  %v871 = vsel %vm807, 1, 0
  %v872 = vsel %vm808, 1, 0
  %v873 = vsel %vm809, 1, 0
  %v874 = vsel %vm810, 1, 0
  %v875 = vsel %vm811, 1, 0
  %v876 = vsel %vm812, 1, 0
  %v877 = vsel %vm813, 1, 0
  %v878 = vsel %vm814, 1, 0
  %v879 = vcvt.s32.f32 %v815
  %v880 = vcvt.s32.f32 %v816
  %v881 = vcvt.s32.f32 %v817
  %v882 = vcvt.s32.f32 %v818
  %v883 = vcvt.s32.f32 %v819
  %v884 = vcvt.s32.f32 %v820
  %v885 = vcvt.s32.f32 %v821
  %v886 = vcvt.s32.f32 %v822
  %v887 = vcvt.s32.f32 %v823
  %v888 = vcvt.s32.f32 %v824
  %v889 = vcvt.s32.f32 %v825
  %v890 = vcvt.s32.f32 %v826
  %v891 = vcvt.s32.f32 %v827
  %v892 = vcvt.s32.f32 %v828
  %v893 = vcvt.s32.f32 %v829
  %v894 = vcvt.s32.f32 %v830
  %v895 = vcvt.s32.f32 %v831
  %v896 = vcvt.s32.f32 %v832
  %v897 = vcvt.s32.f32 %v833
  %v898 = vcvt.s32.f32 %v834
  %v899 = vcvt.s32.f32 %v835
  %v900 = vcvt.s32.f32 %v836
  %v901 = vcvt.s32.f32 %v837
  %v902 = vcvt.s32.f32 %v838
  %v903 = vcvt.s32.f32 %v839
  %v904 = vcvt.s32.f32 %v840
  %v905 = vcvt.s32.f32 %v841
  %v906 = vcvt.s32.f32 %v842
  %v907 = vcvt.s32.f32 %v843
  %v908 = vcvt.s32.f32 %v844
  %v909 = vcvt.s32.f32 %v845
  %v910 = vcvt.s32.f32 %v846
  %v911 = vcvt.s32.f32 %v847
  %v912 = vcvt.s32.f32 %v848
  %v913 = vcvt.s32.f32 %v849
  %v914 = vcvt.s32.f32 %v850
  %v915 = vcvt.s32.f32 %v851
  %v916 = vcvt.s32.f32 %v852
  %v917 = vcvt.s32.f32 %v853
  %v918 = vcvt.s32.f32 %v854
  %v919 = vcvt.s32.f32 %v855
  %v920 = vcvt.s32.f32 %v856
  %v921 = vcvt.s32.f32 %v857
  %v922 = vcvt.s32.f32 %v858
  %v923 = vcvt.s32.f32 %v859
  %v924 = vcvt.s32.f32 %v860
  %v925 = vcvt.s32.f32 %v861
  %v926 = vcvt.s32.f32 %v862
  %v927 = vcvt.s32.f32 %v863
  %v928 = vcvt.s32.f32 %v864
  %v929 = vcvt.s32.f32 %v865
  %v930 = vcvt.s32.f32 %v866
  %v931 = vcvt.s32.f32 %v867
  %v932 = vcvt.s32.f32 %v868
  %v933 = vcvt.s32.f32 %v869
  %v934 = vcvt.s32.f32 %v870
  %v935 = vcvt.s32.f32 %v871
  %v936 = vcvt.s32.f32 %v872
  %v937 = vcvt.s32.f32 %v873
  %v938 = vcvt.s32.f32 %v874
  %v939 = vcvt.s32.f32 %v875
  %v940 = vcvt.s32.f32 %v876
  %v941 = vcvt.s32.f32 %v877
  %v942 = vcvt.s32.f32 %v878
  %v943 = vpack.c.bf16 %v880, %v879
  %v944 = vpack.c.bf16 %v882, %v881
  %v945 = vpack.c.bf16 %v884, %v883
  %v946 = vpack.c.bf16 %v886, %v885
  %v947 = vpack.c.bf16 %v888, %v887
  %v948 = vpack.c.bf16 %v890, %v889
  %v949 = vpack.c.bf16 %v892, %v891
  %v950 = vpack.c.bf16 %v894, %v893
  %v951 = vpack.c.bf16 %v896, %v895
  %v952 = vpack.c.bf16 %v898, %v897
  %v953 = vpack.c.bf16 %v900, %v899
  %v954 = vpack.c.bf16 %v902, %v901
  %v955 = vpack.c.bf16 %v904, %v903
  %v956 = vpack.c.bf16 %v906, %v905
  %v957 = vpack.c.bf16 %v908, %v907
  %v958 = vpack.c.bf16 %v910, %v909
  %v959 = vpack.c.bf16 %v912, %v911
  %v960 = vpack.c.bf16 %v914, %v913
  %v961 = vpack.c.bf16 %v916, %v915
  %v962 = vpack.c.bf16 %v918, %v917
  %v963 = vpack.c.bf16 %v920, %v919
  %v964 = vpack.c.bf16 %v922, %v921
  %v965 = vpack.c.bf16 %v924, %v923
  %v966 = vpack.c.bf16 %v926, %v925
  %v967 = vpack.c.bf16 %v928, %v927
  %v968 = vpack.c.bf16 %v930, %v929
  %v969 = vpack.c.bf16 %v932, %v931
  %v970 = vpack.c.bf16 %v934, %v933
  %v971 = vpack.c.bf16 %v936, %v935
  %v972 = vpack.c.bf16 %v938, %v937
  %v973 = vpack.c.bf16 %v940, %v939
  %v974 = vpack.c.bf16 %v942, %v941
  %v975 = vld [vmem:[%s0] sm:$0xf]
  %v976 = vld [vmem:[%s0 + $0x4] sm:$0xf]
  %v977 = vld [vmem:[%s0 + $0x8] sm:$0xf]
  %v978 = vld [vmem:[%s0 + $0xc] sm:$0xf]
  %v979 = vld [vmem:[%s0 + $0x10] sm:$0xf]
  %v980 = vld [vmem:[%s0 + $0x14] sm:$0xf]
  %v981 = vld [vmem:[%s0 + $0x18] sm:$0xf]
  %v982 = vld [vmem:[%s0 + $0x1c] sm:$0xf]
  %v983 = vld [vmem:[%s0 + $0x20] sm:$0xf]
  %v984 = vld [vmem:[%s0 + $0x24] sm:$0xf]
  %v985 = vld [vmem:[%s0 + $0x28] sm:$0xf]
  %v986 = vld [vmem:[%s0 + $0x2c] sm:$0xf]
  %v987 = vld [vmem:[%s0 + $0x30] sm:$0xf]
  %v988 = vld [vmem:[%s0 + $0x34] sm:$0xf]
  %v989 = vld [vmem:[%s0 + $0x38] sm:$0xf]
  %v990 = vld [vmem:[%s0 + $0x3c] sm:$0xf]
  %v1007 = vunpack.c.l.b16 %v975
  %v1008 = vunpack.c.l.b16 %v976
  %v1009 = vunpack.c.l.b16 %v977
  %v1010 = vunpack.c.l.b16 %v978
  %v1011 = vunpack.c.l.b16 %v979
  %v1012 = vunpack.c.l.b16 %v980
  %v1013 = vunpack.c.l.b16 %v981
  %v1014 = vunpack.c.l.b16 %v982
  %v1015 = vunpack.c.l.b16 %v983
  %v1016 = vunpack.c.l.b16 %v984
  %v1017 = vunpack.c.l.b16 %v985
  %v1018 = vunpack.c.l.b16 %v986
  %v1019 = vunpack.c.l.b16 %v987
  %v1020 = vunpack.c.l.b16 %v988
  %v1021 = vunpack.c.l.b16 %v989
  %v1022 = vunpack.c.l.b16 %v990
  %v1023 = vpack.c.b16 %v1008, %v1007
  %v1024 = vpack.c.b16 %v1010, %v1009
  %v1025 = vpack.c.b16 %v1012, %v1011
  %v1026 = vpack.c.b16 %v1014, %v1013
  %v1027 = vpack.c.b16 %v1016, %v1015
  %v1028 = vpack.c.b16 %v1018, %v1017
  %v1029 = vpack.c.b16 %v1020, %v1019
  %v1030 = vpack.c.b16 %v1022, %v1021
  %1039 = vmatprep.subr.bf16.mxu0 0
  %1040 = vmatpush1.bf16.msra.mxu0 %v1030
  %1041 = vmatprep.subr.bf16.mxu0 0
  %1042 = vmatpush1.bf16.msra.mxu0 %v1029
  %1043 = vmatprep.subr.bf16.mxu0 0
  %1044 = vmatpush1.bf16.msra.mxu0 %v1028
  %1045 = vmatprep.subr.bf16.mxu0 0
  %1046 = vmatpush1.bf16.msra.mxu0 %v1027
  %1047 = vmatprep.subr.bf16.mxu0 0
  %1048 = vmatpush1.bf16.msra.mxu0 %v1026
  %1049 = vmatprep.subr.bf16.mxu0 0
  %1050 = vmatpush1.bf16.msra.mxu0 %v1025
  %1051 = vmatprep.subr.bf16.mxu0 0
  %1052 = vmatpush1.bf16.msra.mxu0 %v1024
  %1053 = vmatprep.subr.bf16.mxu0 0
  %1054 = vmatpush1.bf16.msra.mxu0 %v1023
  %1055 = vmatprep.subr.bf16.mxu0 0
  %1056 = vmatpush2.bf16.msra.mxu0 0
  %1057 = vmatprep.subr.bf16.mxu0 0
  %1058 = vmatpush2.bf16.msra.mxu0 0
  %1059 = vmatprep.subr.bf16.mxu0 0
  %1060 = vmatpush2.bf16.msra.mxu0 0
  %1061 = vmatprep.subr.bf16.mxu0 0
  %1062 = vmatpush2.bf16.msra.mxu0 0
  %1063 = vmatprep.subr.bf16.mxu0 0
  %1064 = vmatpush2.bf16.msra.mxu0 0
  %1065 = vmatprep.subr.bf16.mxu0 0
  %1066 = vmatpush2.bf16.msra.mxu0 0
  %1067 = vmatprep.subr.bf16.mxu0 0
  %1068 = vmatpush2.bf16.msra.mxu0 0
  %1069 = vmatprep.subr.bf16.mxu0 0
  %1070 = vmatpush2.bf16.msra.mxu0 0
  %1071 = vmatprep.mubr.bf16.mxu0 0
  %1072 = vmatmul.mubr.bf16.gmra.mxu0 %v943
  %v1073 = vpop.f32.mrf.mxu0
  %v1074 = vadd.f32 %v175, %v1073
  %v1075 = vpop.f32.mrf.mxu0
  %v1076 = vpop.f32.mrf.mxu0
  %v1077 = vadd.f32 %v180, %v1076
  %v1078 = vpop.f32.mrf.mxu0
  %1079 = vmatprep.mubr.bf16.mxu0 0
  %1080 = vmatmul.mubr.bf16.gmra.mxu0 %v944
  %v1081 = vpop.f32.mrf.mxu0
  %v1082 = vadd.f32 %v185, %v1081
  %v1083 = vpop.f32.mrf.mxu0
  %v1084 = vpop.f32.mrf.mxu0
  %v1085 = vadd.f32 %v190, %v1084
  %v1086 = vpop.f32.mrf.mxu0
  %1087 = vmatprep.mubr.bf16.mxu0 0
  %1088 = vmatmul.mubr.bf16.gmra.mxu0 %v945
  %v1089 = vpop.f32.mrf.mxu0
  %v1090 = vadd.f32 %v195, %v1089
  %v1091 = vpop.f32.mrf.mxu0
  %v1092 = vpop.f32.mrf.mxu0
  %v1093 = vadd.f32 %v200, %v1092
  %v1094 = vpop.f32.mrf.mxu0
  %1095 = vmatprep.mubr.bf16.mxu0 0
  %1096 = vmatmul.mubr.bf16.gmra.mxu0 %v946
  %v1097 = vpop.f32.mrf.mxu0
  %v1098 = vadd.f32 %v205, %v1097
  %v1099 = vpop.f32.mrf.mxu0
  %v1100 = vpop.f32.mrf.mxu0
  %v1101 = vadd.f32 %v210, %v1100
  %v1102 = vpop.f32.mrf.mxu0
  %1103 = vmatprep.mubr.bf16.mxu0 0
  %1104 = vmatmul.mubr.bf16.gmra.mxu0 %v947
  %v1105 = vpop.f32.mrf.mxu0
  %v1106 = vadd.f32 %v215, %v1105
  %v1107 = vpop.f32.mrf.mxu0
  %v1108 = vpop.f32.mrf.mxu0
  %v1109 = vadd.f32 %v220, %v1108
  %v1110 = vpop.f32.mrf.mxu0
  %1111 = vmatprep.mubr.bf16.mxu0 0
  %1112 = vmatmul.mubr.bf16.gmra.mxu0 %v948
  %v1113 = vpop.f32.mrf.mxu0
  %v1114 = vadd.f32 %v225, %v1113
  %v1115 = vpop.f32.mrf.mxu0
  %v1116 = vpop.f32.mrf.mxu0
  %v1117 = vadd.f32 %v230, %v1116
  %v1118 = vpop.f32.mrf.mxu0
  %1119 = vmatprep.mubr.bf16.mxu0 0
  %1120 = vmatmul.mubr.bf16.gmra.mxu0 %v949
  %v1121 = vpop.f32.mrf.mxu0
  %v1122 = vadd.f32 %v235, %v1121
  %v1123 = vpop.f32.mrf.mxu0
  %v1124 = vpop.f32.mrf.mxu0
  %v1125 = vadd.f32 %v240, %v1124
  %v1126 = vpop.f32.mrf.mxu0
  %1127 = vmatprep.mubr.bf16.mxu0 0
  %1128 = vmatmul.mubr.bf16.gmra.mxu0 %v950
  %v1129 = vpop.f32.mrf.mxu0
  %v1130 = vadd.f32 %v245, %v1129
  %v1131 = vpop.f32.mrf.mxu0
  %v1132 = vpop.f32.mrf.mxu0
  %v1133 = vadd.f32 %v250, %v1132
  %v1134 = vpop.f32.mrf.mxu0
  %1135 = vmatprep.mubr.bf16.mxu0 0
  %1136 = vmatmul.mubr.bf16.gmra.mxu0 %v951
  %v1137 = vpop.f32.mrf.mxu0
  %v1138 = vadd.f32 %v255, %v1137
  %v1139 = vpop.f32.mrf.mxu0
  %v1140 = vpop.f32.mrf.mxu0
  %v1141 = vadd.f32 %v260, %v1140
  %v1142 = vpop.f32.mrf.mxu0
  %1143 = vmatprep.mubr.bf16.mxu0 0
  %1144 = vmatmul.mubr.bf16.gmra.mxu0 %v952
  %v1145 = vpop.f32.mrf.mxu0
  %v1146 = vadd.f32 %v265, %v1145
  %v1147 = vpop.f32.mrf.mxu0
  %v1148 = vpop.f32.mrf.mxu0
  %v1149 = vadd.f32 %v270, %v1148
  %v1150 = vpop.f32.mrf.mxu0
  %1151 = vmatprep.mubr.bf16.mxu0 0
  %1152 = vmatmul.mubr.bf16.gmra.mxu0 %v953
  %v1153 = vpop.f32.mrf.mxu0
  %v1154 = vadd.f32 %v275, %v1153
  %v1155 = vpop.f32.mrf.mxu0
  %v1156 = vpop.f32.mrf.mxu0
  %v1157 = vadd.f32 %v280, %v1156
  %v1158 = vpop.f32.mrf.mxu0
  %1159 = vmatprep.mubr.bf16.mxu0 0
  %1160 = vmatmul.mubr.bf16.gmra.mxu0 %v954
  %v1161 = vpop.f32.mrf.mxu0
  %v1162 = vadd.f32 %v285, %v1161
  %v1163 = vpop.f32.mrf.mxu0
  %v1164 = vpop.f32.mrf.mxu0
  %v1165 = vadd.f32 %v290, %v1164
  %v1166 = vpop.f32.mrf.mxu0
  %1167 = vmatprep.mubr.bf16.mxu0 0
  %1168 = vmatmul.mubr.bf16.gmra.mxu0 %v955
  %v1169 = vpop.f32.mrf.mxu0
  %v1170 = vadd.f32 %v295, %v1169
  %v1171 = vpop.f32.mrf.mxu0
  %v1172 = vpop.f32.mrf.mxu0
  %v1173 = vadd.f32 %v300, %v1172
  %v1174 = vpop.f32.mrf.mxu0
  %1175 = vmatprep.mubr.bf16.mxu0 0
  %1176 = vmatmul.mubr.bf16.gmra.mxu0 %v956
  %v1177 = vpop.f32.mrf.mxu0
  %v1178 = vadd.f32 %v305, %v1177
  %v1179 = vpop.f32.mrf.mxu0
  %v1180 = vpop.f32.mrf.mxu0
  %v1181 = vadd.f32 %v310, %v1180
  %v1182 = vpop.f32.mrf.mxu0
  %1183 = vmatprep.mubr.bf16.mxu0 0
  %1184 = vmatmul.mubr.bf16.gmra.mxu0 %v957
  %v1185 = vpop.f32.mrf.mxu0
  %v1186 = vadd.f32 %v315, %v1185
  %v1187 = vpop.f32.mrf.mxu0
  %v1188 = vpop.f32.mrf.mxu0
  %v1189 = vadd.f32 %v320, %v1188
  %v1190 = vpop.f32.mrf.mxu0
  %1191 = vmatprep.mubr.bf16.mxu0 0
  %1192 = vmatmul.mubr.bf16.gmra.mxu0 %v958
  %v1193 = vpop.f32.mrf.mxu0
  %v1194 = vadd.f32 %v325, %v1193
  %v1195 = vpop.f32.mrf.mxu0
  %v1196 = vpop.f32.mrf.mxu0
  %v1197 = vadd.f32 %v330, %v1196
  %v1198 = vpop.f32.mrf.mxu0
  %1199 = vmatprep.mubr.bf16.mxu0 0
  %1200 = vmatmul.mubr.bf16.gmra.mxu0 %v959
  %v1201 = vpop.f32.mrf.mxu0
  %v1202 = vadd.f32 %v335, %v1201
  %v1203 = vpop.f32.mrf.mxu0
  %v1204 = vpop.f32.mrf.mxu0
  %v1205 = vadd.f32 %v340, %v1204
  %v1206 = vpop.f32.mrf.mxu0
  %1207 = vmatprep.mubr.bf16.mxu0 0
  %1208 = vmatmul.mubr.bf16.gmra.mxu0 %v960
  %v1209 = vpop.f32.mrf.mxu0
  %v1210 = vadd.f32 %v345, %v1209
  %v1211 = vpop.f32.mrf.mxu0
  %v1212 = vpop.f32.mrf.mxu0
  %v1213 = vadd.f32 %v350, %v1212
  %v1214 = vpop.f32.mrf.mxu0
  %1215 = vmatprep.mubr.bf16.mxu0 0
  %1216 = vmatmul.mubr.bf16.gmra.mxu0 %v961
  %v1217 = vpop.f32.mrf.mxu0
  %v1218 = vadd.f32 %v355, %v1217
  %v1219 = vpop.f32.mrf.mxu0
  %v1220 = vpop.f32.mrf.mxu0
  %v1221 = vadd.f32 %v360, %v1220
  %v1222 = vpop.f32.mrf.mxu0
  %1223 = vmatprep.mubr.bf16.mxu0 0
  %1224 = vmatmul.mubr.bf16.gmra.mxu0 %v962
  %v1225 = vpop.f32.mrf.mxu0
  %v1226 = vadd.f32 %v365, %v1225
  %v1227 = vpop.f32.mrf.mxu0
  %v1228 = vpop.f32.mrf.mxu0
  %v1229 = vadd.f32 %v370, %v1228
  %v1230 = vpop.f32.mrf.mxu0
  %1231 = vmatprep.mubr.bf16.mxu0 0
  %1232 = vmatmul.mubr.bf16.gmra.mxu0 %v963
  %v1233 = vpop.f32.mrf.mxu0
  %v1234 = vadd.f32 %v375, %v1233
  %v1235 = vpop.f32.mrf.mxu0
  %v1236 = vpop.f32.mrf.mxu0
  %v1237 = vadd.f32 %v380, %v1236
  %v1238 = vpop.f32.mrf.mxu0
  %1239 = vmatprep.mubr.bf16.mxu0 0
  %1240 = vmatmul.mubr.bf16.gmra.mxu0 %v964
  %v1241 = vpop.f32.mrf.mxu0
  %v1242 = vadd.f32 %v385, %v1241
  %v1243 = vpop.f32.mrf.mxu0
  %v1244 = vpop.f32.mrf.mxu0
  %v1245 = vadd.f32 %v390, %v1244
  %v1246 = vpop.f32.mrf.mxu0
  %1247 = vmatprep.mubr.bf16.mxu0 0
  %1248 = vmatmul.mubr.bf16.gmra.mxu0 %v965
  %v1249 = vpop.f32.mrf.mxu0
  %v1250 = vadd.f32 %v395, %v1249
  %v1251 = vpop.f32.mrf.mxu0
  %v1252 = vpop.f32.mrf.mxu0
  %v1253 = vadd.f32 %v400, %v1252
  %v1254 = vpop.f32.mrf.mxu0
  %1255 = vmatprep.mubr.bf16.mxu0 0
  %1256 = vmatmul.mubr.bf16.gmra.mxu0 %v966
  %v1257 = vpop.f32.mrf.mxu0
  %v1258 = vadd.f32 %v405, %v1257
  %v1259 = vpop.f32.mrf.mxu0
  %v1260 = vpop.f32.mrf.mxu0
  %v1261 = vadd.f32 %v410, %v1260
  %v1262 = vpop.f32.mrf.mxu0
  %1263 = vmatprep.mubr.bf16.mxu0 0
  %1264 = vmatmul.mubr.bf16.gmra.mxu0 %v967
  %v1265 = vpop.f32.mrf.mxu0
  %v1266 = vadd.f32 %v415, %v1265
  %v1267 = vpop.f32.mrf.mxu0
  %v1268 = vpop.f32.mrf.mxu0
  %v1269 = vadd.f32 %v420, %v1268
  %v1270 = vpop.f32.mrf.mxu0
  %1271 = vmatprep.mubr.bf16.mxu0 0
  %1272 = vmatmul.mubr.bf16.gmra.mxu0 %v968
  %v1273 = vpop.f32.mrf.mxu0
  %v1274 = vadd.f32 %v425, %v1273
  %v1275 = vpop.f32.mrf.mxu0
  %v1276 = vpop.f32.mrf.mxu0
  %v1277 = vadd.f32 %v430, %v1276
  %v1278 = vpop.f32.mrf.mxu0
  %1279 = vmatprep.mubr.bf16.mxu0 0
  %1280 = vmatmul.mubr.bf16.gmra.mxu0 %v969
  %v1281 = vpop.f32.mrf.mxu0
  %v1282 = vadd.f32 %v435, %v1281
  %v1283 = vpop.f32.mrf.mxu0
  %v1284 = vpop.f32.mrf.mxu0
  %v1285 = vadd.f32 %v440, %v1284
  %v1286 = vpop.f32.mrf.mxu0
  %1287 = vmatprep.mubr.bf16.mxu0 0
  %1288 = vmatmul.mubr.bf16.gmra.mxu0 %v970
  %v1289 = vpop.f32.mrf.mxu0
  %v1290 = vadd.f32 %v445, %v1289
  %v1291 = vpop.f32.mrf.mxu0
  %v1292 = vpop.f32.mrf.mxu0
  %v1293 = vadd.f32 %v450, %v1292
  %v1294 = vpop.f32.mrf.mxu0
  %1295 = vmatprep.mubr.bf16.mxu0 0
  %1296 = vmatmul.mubr.bf16.gmra.mxu0 %v971
  %v1297 = vpop.f32.mrf.mxu0
  %v1298 = vadd.f32 %v455, %v1297
  %v1299 = vpop.f32.mrf.mxu0
  %v1300 = vpop.f32.mrf.mxu0
  %v1301 = vadd.f32 %v460, %v1300
  %v1302 = vpop.f32.mrf.mxu0
  %1303 = vmatprep.mubr.bf16.mxu0 0
  %1304 = vmatmul.mubr.bf16.gmra.mxu0 %v972
  %v1305 = vpop.f32.mrf.mxu0
  %v1306 = vadd.f32 %v465, %v1305
  %v1307 = vpop.f32.mrf.mxu0
  %v1308 = vpop.f32.mrf.mxu0
  %v1309 = vadd.f32 %v470, %v1308
  %v1310 = vpop.f32.mrf.mxu0
  %1311 = vmatprep.mubr.bf16.mxu0 0
  %1312 = vmatmul.mubr.bf16.gmra.mxu0 %v973
  %v1313 = vpop.f32.mrf.mxu0
  %v1314 = vadd.f32 %v475, %v1313
  %v1315 = vpop.f32.mrf.mxu0
  %v1316 = vpop.f32.mrf.mxu0
  %v1317 = vadd.f32 %v480, %v1316
  %v1318 = vpop.f32.mrf.mxu0
  %1319 = vmatprep.mubr.bf16.mxu0 0
  %1320 = vmatmul.mubr.bf16.gmra.mxu0 %v974
  %v1321 = vpop.f32.mrf.mxu0
  %v1322 = vadd.f32 %v485, %v1321
  %v1323 = vpop.f32.mrf.mxu0
  %v1324 = vpop.f32.mrf.mxu0
  %v1325 = vadd.f32 %v490, %v1324
  %v1326 = vpop.f32.mrf.mxu0
  %1327 = vdwg.mxu0
  %v1328 = vmax.f32 %v1074, 0.0
  %v1329 = vmax.f32 %v1077, 0.0
  %v1330 = vmax.f32 %v1082, 0.0
  %v1331 = vmax.f32 %v1085, 0.0
  %v1332 = vmax.f32 %v1090, 0.0
  %v1333 = vmax.f32 %v1093, 0.0
  %v1334 = vmax.f32 %v1098, 0.0
  %v1335 = vmax.f32 %v1101, 0.0
  %v1336 = vmax.f32 %v1106, 0.0
  %v1337 = vmax.f32 %v1109, 0.0
  %v1338 = vmax.f32 %v1114, 0.0
  %v1339 = vmax.f32 %v1117, 0.0
  %v1340 = vmax.f32 %v1122, 0.0
  %v1341 = vmax.f32 %v1125, 0.0
  %v1342 = vmax.f32 %v1130, 0.0
  %v1343 = vmax.f32 %v1133, 0.0
  %v1344 = vmax.f32 %v1138, 0.0
  %v1345 = vmax.f32 %v1141, 0.0
  %v1346 = vmax.f32 %v1146, 0.0
  %v1347 = vmax.f32 %v1149, 0.0
  %v1348 = vmax.f32 %v1154, 0.0
  %v1349 = vmax.f32 %v1157, 0.0
  %v1350 = vmax.f32 %v1162, 0.0
  %v1351 = vmax.f32 %v1165, 0.0
  %v1352 = vmax.f32 %v1170, 0.0
  %v1353 = vmax.f32 %v1173, 0.0
  %v1354 = vmax.f32 %v1178, 0.0
  %v1355 = vmax.f32 %v1181, 0.0
  %v1356 = vmax.f32 %v1186, 0.0
  %v1357 = vmax.f32 %v1189, 0.0
  %v1358 = vmax.f32 %v1194, 0.0
  %v1359 = vmax.f32 %v1197, 0.0
  %v1360 = vmax.f32 %v1202, 0.0
  %v1361 = vmax.f32 %v1205, 0.0
  %v1362 = vmax.f32 %v1210, 0.0
  %v1363 = vmax.f32 %v1213, 0.0
  %v1364 = vmax.f32 %v1218, 0.0
  %v1365 = vmax.f32 %v1221, 0.0
  %v1366 = vmax.f32 %v1226, 0.0
  %v1367 = vmax.f32 %v1229, 0.0
  %v1368 = vmax.f32 %v1234, 0.0
  %v1369 = vmax.f32 %v1237, 0.0
  %v1370 = vmax.f32 %v1242, 0.0
  %v1371 = vmax.f32 %v1245, 0.0
  %v1372 = vmax.f32 %v1250, 0.0
  %v1373 = vmax.f32 %v1253, 0.0
  %v1374 = vmax.f32 %v1258, 0.0
  %v1375 = vmax.f32 %v1261, 0.0
  %v1376 = vmax.f32 %v1266, 0.0
  %v1377 = vmax.f32 %v1269, 0.0
  %v1378 = vmax.f32 %v1274, 0.0
  %v1379 = vmax.f32 %v1277, 0.0
  %v1380 = vmax.f32 %v1282, 0.0
  %v1381 = vmax.f32 %v1285, 0.0
  %v1382 = vmax.f32 %v1290, 0.0
  %v1383 = vmax.f32 %v1293, 0.0
  %v1384 = vmax.f32 %v1298, 0.0
  %v1385 = vmax.f32 %v1301, 0.0
  %v1386 = vmax.f32 %v1306, 0.0
  %v1387 = vmax.f32 %v1309, 0.0
  %v1388 = vmax.f32 %v1314, 0.0
  %v1389 = vmax.f32 %v1317, 0.0
  %v1390 = vmax.f32 %v1322, 0.0
  %v1391 = vmax.f32 %v1325, 0.0
  %v1392 = vpack.c.bf16 %v1329, %v1328
  %v1393 = vpack.c.bf16 %v1331, %v1330
  %v1394 = vpack.c.bf16 %v1333, %v1332
  %v1395 = vpack.c.bf16 %v1335, %v1334
  %v1396 = vpack.c.bf16 %v1337, %v1336
  %v1397 = vpack.c.bf16 %v1339, %v1338
  %v1398 = vpack.c.bf16 %v1341, %v1340
  %v1399 = vpack.c.bf16 %v1343, %v1342
  %v1400 = vpack.c.bf16 %v1345, %v1344
  %v1401 = vpack.c.bf16 %v1347, %v1346
  %v1402 = vpack.c.bf16 %v1349, %v1348
  %v1403 = vpack.c.bf16 %v1351, %v1350
  %v1404 = vpack.c.bf16 %v1353, %v1352
  %v1405 = vpack.c.bf16 %v1355, %v1354
  %v1406 = vpack.c.bf16 %v1357, %v1356
  %v1407 = vpack.c.bf16 %v1359, %v1358
  %v1408 = vpack.c.bf16 %v1361, %v1360
  %v1409 = vpack.c.bf16 %v1363, %v1362
  %v1410 = vpack.c.bf16 %v1365, %v1364
  %v1411 = vpack.c.bf16 %v1367, %v1366
  %v1412 = vpack.c.bf16 %v1369, %v1368
  %v1413 = vpack.c.bf16 %v1371, %v1370
  %v1414 = vpack.c.bf16 %v1373, %v1372
  %v1415 = vpack.c.bf16 %v1375, %v1374
  %v1416 = vpack.c.bf16 %v1377, %v1376
  %v1417 = vpack.c.bf16 %v1379, %v1378
  %v1418 = vpack.c.bf16 %v1381, %v1380
  %v1419 = vpack.c.bf16 %v1383, %v1382
  %v1420 = vpack.c.bf16 %v1385, %v1384
  %v1421 = vpack.c.bf16 %v1387, %v1386
  %v1422 = vpack.c.bf16 %v1389, %v1388
  %v1423 = vpack.c.bf16 %v1391, %v1390
  %v1456 = vunpack.c.l.b16 %v1392
  %v1457 = vunpack.c.h.b16 %v1392
  %v1458 = vunpack.c.l.b16 %v1393
  %v1459 = vunpack.c.h.b16 %v1393
  %v1460 = vunpack.c.l.b16 %v1394
  %v1461 = vunpack.c.h.b16 %v1394
  %v1462 = vunpack.c.l.b16 %v1395
  %v1463 = vunpack.c.h.b16 %v1395
  %v1464 = vunpack.c.l.b16 %v1396
  %v1465 = vunpack.c.h.b16 %v1396
  %v1466 = vunpack.c.l.b16 %v1397
  %v1467 = vunpack.c.h.b16 %v1397
  %v1468 = vunpack.c.l.b16 %v1398
  %v1469 = vunpack.c.h.b16 %v1398
  %v1470 = vunpack.c.l.b16 %v1399
  %v1471 = vunpack.c.h.b16 %v1399
  %v1472 = vunpack.c.l.b16 %v1400
  %v1473 = vunpack.c.h.b16 %v1400
  %v1474 = vunpack.c.l.b16 %v1401
  %v1475 = vunpack.c.h.b16 %v1401
  %v1476 = vunpack.c.l.b16 %v1402
  %v1477 = vunpack.c.h.b16 %v1402
  %v1478 = vunpack.c.l.b16 %v1403
  %v1479 = vunpack.c.h.b16 %v1403
  %v1480 = vunpack.c.l.b16 %v1404
  %v1481 = vunpack.c.h.b16 %v1404
  %v1482 = vunpack.c.l.b16 %v1405
  %v1483 = vunpack.c.h.b16 %v1405
  %v1484 = vunpack.c.l.b16 %v1406
  %v1485 = vunpack.c.h.b16 %v1406
  %v1486 = vunpack.c.l.b16 %v1407
  %v1487 = vunpack.c.h.b16 %v1407
  %v1488 = vunpack.c.l.b16 %v1408
  %v1489 = vunpack.c.h.b16 %v1408
  %v1490 = vunpack.c.l.b16 %v1409
  %v1491 = vunpack.c.h.b16 %v1409
  %v1492 = vunpack.c.l.b16 %v1410
  %v1493 = vunpack.c.h.b16 %v1410
  %v1494 = vunpack.c.l.b16 %v1411
  %v1495 = vunpack.c.h.b16 %v1411
  %v1496 = vunpack.c.l.b16 %v1412
  %v1497 = vunpack.c.h.b16 %v1412
  %v1498 = vunpack.c.l.b16 %v1413
  %v1499 = vunpack.c.h.b16 %v1413
  %v1500 = vunpack.c.l.b16 %v1414
  %v1501 = vunpack.c.h.b16 %v1414
  %v1502 = vunpack.c.l.b16 %v1415
  %v1503 = vunpack.c.h.b16 %v1415
  %v1504 = vunpack.c.l.b16 %v1416
  %v1505 = vunpack.c.h.b16 %v1416
  %v1506 = vunpack.c.l.b16 %v1417
  %v1507 = vunpack.c.h.b16 %v1417
  %v1508 = vunpack.c.l.b16 %v1418
  %v1509 = vunpack.c.h.b16 %v1418
  %v1510 = vunpack.c.l.b16 %v1419
  %v1511 = vunpack.c.h.b16 %v1419
  %v1512 = vunpack.c.l.b16 %v1420
  %v1513 = vunpack.c.h.b16 %v1420
  %v1514 = vunpack.c.l.b16 %v1421
  %v1515 = vunpack.c.h.b16 %v1421
  %v1516 = vunpack.c.l.b16 %v1422
  %v1517 = vunpack.c.h.b16 %v1422
  %v1518 = vunpack.c.l.b16 %v1423
  %v1519 = vunpack.c.h.b16 %v1423
  %v1520 = vpack.c.b16 %v1456, %v1456
  %v1521 = vpack.c.b16 %v1457, %v1457
  %v1522 = vpack.c.b16 %v1458, %v1458
  %v1523 = vpack.c.b16 %v1459, %v1459
  %v1524 = vpack.c.b16 %v1460, %v1460
  %v1525 = vpack.c.b16 %v1461, %v1461
  %v1526 = vpack.c.b16 %v1462, %v1462
  %v1527 = vpack.c.b16 %v1463, %v1463
  %v1528 = vpack.c.b16 %v1464, %v1464
  %v1529 = vpack.c.b16 %v1465, %v1465
  %v1530 = vpack.c.b16 %v1466, %v1466
  %v1531 = vpack.c.b16 %v1467, %v1467
  %v1532 = vpack.c.b16 %v1468, %v1468
  %v1533 = vpack.c.b16 %v1469, %v1469
  %v1534 = vpack.c.b16 %v1470, %v1470
  %v1535 = vpack.c.b16 %v1471, %v1471
  %v1536 = vpack.c.b16 %v1472, %v1472
  %v1537 = vpack.c.b16 %v1473, %v1473
  %v1538 = vpack.c.b16 %v1474, %v1474
  %v1539 = vpack.c.b16 %v1475, %v1475
  %v1540 = vpack.c.b16 %v1476, %v1476
  %v1541 = vpack.c.b16 %v1477, %v1477
  %v1542 = vpack.c.b16 %v1478, %v1478
  %v1543 = vpack.c.b16 %v1479, %v1479
  %v1544 = vpack.c.b16 %v1480, %v1480
  %v1545 = vpack.c.b16 %v1481, %v1481
  %v1546 = vpack.c.b16 %v1482, %v1482
  %v1547 = vpack.c.b16 %v1483, %v1483
  %v1548 = vpack.c.b16 %v1484, %v1484
  %v1549 = vpack.c.b16 %v1485, %v1485
  %v1550 = vpack.c.b16 %v1486, %v1486
  %v1551 = vpack.c.b16 %v1487, %v1487
  %v1552 = vpack.c.b16 %v1488, %v1488
  %v1553 = vpack.c.b16 %v1489, %v1489
  %v1554 = vpack.c.b16 %v1490, %v1490
  %v1555 = vpack.c.b16 %v1491, %v1491
  %v1556 = vpack.c.b16 %v1492, %v1492
  %v1557 = vpack.c.b16 %v1493, %v1493
  %v1558 = vpack.c.b16 %v1494, %v1494
  %v1559 = vpack.c.b16 %v1495, %v1495
  %v1560 = vpack.c.b16 %v1496, %v1496
  %v1561 = vpack.c.b16 %v1497, %v1497
  %v1562 = vpack.c.b16 %v1498, %v1498
  %v1563 = vpack.c.b16 %v1499, %v1499
  %v1564 = vpack.c.b16 %v1500, %v1500
  %v1565 = vpack.c.b16 %v1501, %v1501
  %v1566 = vpack.c.b16 %v1502, %v1502
  %v1567 = vpack.c.b16 %v1503, %v1503
  %v1568 = vpack.c.b16 %v1504, %v1504
  %v1569 = vpack.c.b16 %v1505, %v1505
  %v1570 = vpack.c.b16 %v1506, %v1506
  %v1571 = vpack.c.b16 %v1507, %v1507
  %v1572 = vpack.c.b16 %v1508, %v1508
  %v1573 = vpack.c.b16 %v1509, %v1509
  %v1574 = vpack.c.b16 %v1510, %v1510
  %v1575 = vpack.c.b16 %v1511, %v1511
  %v1576 = vpack.c.b16 %v1512, %v1512
  %v1577 = vpack.c.b16 %v1513, %v1513
  %v1578 = vpack.c.b16 %v1514, %v1514
  %v1579 = vpack.c.b16 %v1515, %v1515
  %v1580 = vpack.c.b16 %v1516, %v1516
  %v1581 = vpack.c.b16 %v1517, %v1517
  %v1582 = vpack.c.b16 %v1518, %v1518
  %v1583 = vpack.c.b16 %v1519, %v1519
  %1648 = vst [vmem:[%s5] sm:$0xf] %v1520
  %1649 = vst [vmem:[%s5 + $0x4] sm:$0xf] %v1521
  %1650 = vst [vmem:[%s5 + $0x8] sm:$0xf] %v1522
  %1651 = vst [vmem:[%s5 + $0xc] sm:$0xf] %v1523
  %1652 = vst [vmem:[%s5 + $0x10] sm:$0xf] %v1524
  %1653 = vst [vmem:[%s5 + $0x14] sm:$0xf] %v1525
  %1654 = vst [vmem:[%s5 + $0x18] sm:$0xf] %v1526
  %1655 = vst [vmem:[%s5 + $0x1c] sm:$0xf] %v1527
  %1656 = vst [vmem:[%s5 + $0x20] sm:$0xf] %v1528
  %1657 = vst [vmem:[%s5 + $0x24] sm:$0xf] %v1529
  %1658 = vst [vmem:[%s5 + $0x28] sm:$0xf] %v1530
  %1659 = vst [vmem:[%s5 + $0x2c] sm:$0xf] %v1531
  %1660 = vst [vmem:[%s5 + $0x30] sm:$0xf] %v1532
  %1661 = vst [vmem:[%s5 + $0x34] sm:$0xf] %v1533
  %1662 = vst [vmem:[%s5 + $0x38] sm:$0xf] %v1534
  %1663 = vst [vmem:[%s5 + $0x3c] sm:$0xf] %v1535
  %1664 = vst [vmem:[%s5 + $0x40] sm:$0xf] %v1536
  %1665 = vst [vmem:[%s5 + $0x44] sm:$0xf] %v1537
  %1666 = vst [vmem:[%s5 + $0x48] sm:$0xf] %v1538
  %1667 = vst [vmem:[%s5 + $0x4c] sm:$0xf] %v1539
  %1668 = vst [vmem:[%s5 + $0x50] sm:$0xf] %v1540
  %1669 = vst [vmem:[%s5 + $0x54] sm:$0xf] %v1541
  %1670 = vst [vmem:[%s5 + $0x58] sm:$0xf] %v1542
  %1671 = vst [vmem:[%s5 + $0x5c] sm:$0xf] %v1543
  %1672 = vst [vmem:[%s5 + $0x60] sm:$0xf] %v1544
  %1673 = vst [vmem:[%s5 + $0x64] sm:$0xf] %v1545
  %1674 = vst [vmem:[%s5 + $0x68] sm:$0xf] %v1546
  %1675 = vst [vmem:[%s5 + $0x6c] sm:$0xf] %v1547
  %1676 = vst [vmem:[%s5 + $0x70] sm:$0xf] %v1548
  %1677 = vst [vmem:[%s5 + $0x74] sm:$0xf] %v1549
  %1678 = vst [vmem:[%s5 + $0x78] sm:$0xf] %v1550
  %1679 = vst [vmem:[%s5 + $0x7c] sm:$0xf] %v1551
  %1680 = vst [vmem:[%s5 + $0x80] sm:$0xf] %v1552
  %1681 = vst [vmem:[%s5 + $0x84] sm:$0xf] %v1553
  %1682 = vst [vmem:[%s5 + $0x88] sm:$0xf] %v1554
  %1683 = vst [vmem:[%s5 + $0x8c] sm:$0xf] %v1555
  %1684 = vst [vmem:[%s5 + $0x90] sm:$0xf] %v1556
  %1685 = vst [vmem:[%s5 + $0x94] sm:$0xf] %v1557
  %1686 = vst [vmem:[%s5 + $0x98] sm:$0xf] %v1558
  %1687 = vst [vmem:[%s5 + $0x9c] sm:$0xf] %v1559
  %1688 = vst [vmem:[%s5 + $0xa0] sm:$0xf] %v1560
  %1689 = vst [vmem:[%s5 + $0xa4] sm:$0xf] %v1561
  %1690 = vst [vmem:[%s5 + $0xa8] sm:$0xf] %v1562
  %1691 = vst [vmem:[%s5 + $0xac] sm:$0xf] %v1563
  %1692 = vst [vmem:[%s5 + $0xb0] sm:$0xf] %v1564
  %1693 = vst [vmem:[%s5 + $0xb4] sm:$0xf] %v1565
  %1694 = vst [vmem:[%s5 + $0xb8] sm:$0xf] %v1566
  %1695 = vst [vmem:[%s5 + $0xbc] sm:$0xf] %v1567
  %1696 = vst [vmem:[%s5 + $0xc0] sm:$0xf] %v1568
  %1697 = vst [vmem:[%s5 + $0xc4] sm:$0xf] %v1569
  %1698 = vst [vmem:[%s5 + $0xc8] sm:$0xf] %v1570
  %1699 = vst [vmem:[%s5 + $0xcc] sm:$0xf] %v1571
  %1700 = vst [vmem:[%s5 + $0xd0] sm:$0xf] %v1572
  %1701 = vst [vmem:[%s5 + $0xd4] sm:$0xf] %v1573
  %1702 = vst [vmem:[%s5 + $0xd8] sm:$0xf] %v1574
  %1703 = vst [vmem:[%s5 + $0xdc] sm:$0xf] %v1575
  %1704 = vst [vmem:[%s5 + $0xe0] sm:$0xf] %v1576
  %1705 = vst [vmem:[%s5 + $0xe4] sm:$0xf] %v1577
  %1706 = vst [vmem:[%s5 + $0xe8] sm:$0xf] %v1578
  %1707 = vst [vmem:[%s5 + $0xec] sm:$0xf] %v1579
  %1708 = vst [vmem:[%s5 + $0xf0] sm:$0xf] %v1580
  %1709 = vst [vmem:[%s5 + $0xf4] sm:$0xf] %v1581
  %1710 = vst [vmem:[%s5 + $0xf8] sm:$0xf] %v1582
  %1711 = vst [vmem:[%s5 + $0xfc] sm:$0xf] %v1583
  // Predicated region
  $region22: #{_lambda_.9} parent=0 // pred_check
    _
  $region23: #{_lambda_.9} parent=0 // pred_check_branch
    %1713 = sbr.rel (0) target = $region25
  $region24: #{_lambda_.9} parent=0 // pred_region
    _
  $region25: #{_lambda_.9} parent=0 // pred_fallthru
    _
  // Predicated region
  $region26: #{_lambda_.9} parent=0 // pred_check
    _
  $region27: #{_lambda_.9} parent=0 // pred_check_branch
    %1715 = sbr.rel (0) target = $region29
  $region28: #{_lambda_.9} parent=0 // pred_region
    _
  $region29: #{_lambda_.9} parent=0 // pred_fallthru
    _

// kernel: _lambda_.13
$region0: #{_lambda_.13}
  #allocation0 [shape = 'u32[]', space=smem, size = 0x4, offset = 0x4, fixed_abs, tag = 'smem constant byte address 0x4 - core index']
  #allocation1 [shape = 'u32[144,128]{1,0:T(1,128)}', space=vmem, size = 0x12000, scoped, tag = 'internal scratch']
  #allocation2 [shape = 'f32[8,384]{1,0:T(8,128)}', space=vmem, size = 0x3000, scoped, tag = 'scratch operand']
  %s0 = inlined_call_operand.vmem [shape: s32[1,128], index: 0, kind: input, shape index: {}]
  %s1 = inlined_call_operand.vmem [shape: bf16[128,128], index: 1, kind: input, shape index: {}]
  %s2 = inlined_call_operand.vmem [shape: bf16[128,128], index: 2, kind: input, shape index: {}]
  %s3 = inlined_call_operand.vmem [shape: bf16[128,128], index: 3, kind: input, shape index: {}]
  %s4 = inlined_call_operand.vmem [shape: f32[384,128], index: 4, kind: input, shape index: {}]
  %s5 = inlined_call_operand.vmem [shape: f32[1,128], index: 5, kind: input, shape index: {}]
  %s6 = inlined_call_operand.vmem [shape: f32[128,128], index: 6, kind: input, shape index: {}]
  %s7 = inlined_call_operand.vmem [shape: f32[1,128], index: 7, kind: input, shape index: {}]
  %s8 = inlined_call_operand.vmem [shape: f32[8,128], index: 8, kind: output, shape index: {}]
  %s9 = sld [smem:[#allocation0]]
  $region50: #{_lambda_.13} parent=0
    _
  %s11 = ssub.s32 1, %s9
  %s12 = scalar_select 0, %s11, %s9
  // Predicated region
  $region2: #{_lambda_.13} parent=0 // pred_check
    _
  $region3: #{_lambda_.13} parent=0 // pred_check_branch
    %14 = sbr.rel (0) target = $region5
  $region4: #{_lambda_.13} parent=0 // pred_region
    _
  $region5: #{_lambda_.13} parent=0 // pred_fallthru
    _
  // Predicated region
  $region6: #{_lambda_.13} parent=0 // pred_check
    _
  $region7: #{_lambda_.13} parent=0 // pred_check_branch
    %16 = sbr.rel (0) target = $region9
  $region8: #{_lambda_.13} parent=0 // pred_region
    _
  $region9: #{_lambda_.13} parent=0 // pred_fallthru
    _
  // Predicated region
  $region10: #{_lambda_.13} parent=0 // pred_check
    _
  $region11: #{_lambda_.13} parent=0 // pred_check_branch
    %18 = sbr.rel (0) target = $region13
  $region12: #{_lambda_.13} parent=0 // pred_region
    _
  $region13: #{_lambda_.13} parent=0 // pred_fallthru
    _
  // Predicated region
  $region14: #{_lambda_.13} parent=0 // pred_check
    _
  $region15: #{_lambda_.13} parent=0 // pred_check_branch
    %20 = sbr.rel (0) target = $region17
  $region16: #{_lambda_.13} parent=0 // pred_region
    _
  $region17: #{_lambda_.13} parent=0 // pred_fallthru
    _
  // Predicated region
  $region18: #{_lambda_.13} parent=0 // pred_check
    _
  $region19: #{_lambda_.13} parent=0 // pred_check_branch
    %22 = sbr.rel (0) target = $region21
  $region20: #{_lambda_.13} parent=0 // pred_region
    _
  $region21: #{_lambda_.13} parent=0 // pred_fallthru
    _
  // Predicated region
  $region22: #{_lambda_.13} parent=0 // pred_check
    _
  $region23: #{_lambda_.13} parent=0 // pred_check_branch
    %24 = sbr.rel (0) target = $region25
  $region24: #{_lambda_.13} parent=0 // pred_region
    _
  $region25: #{_lambda_.13} parent=0 // pred_fallthru
    _
  // Predicated region
  $region26: #{_lambda_.13} parent=0 // pred_check
    _
  $region27: #{_lambda_.13} parent=0 // pred_check_branch
    %26 = sbr.rel (0) target = $region29
  $region28: #{_lambda_.13} parent=0 // pred_region
    _
  $region29: #{_lambda_.13} parent=0 // pred_fallthru
    _
  // Predicated region
  $region30: #{_lambda_.13} parent=0 // pred_check
    _
  $region31: #{_lambda_.13} parent=0 // pred_check_branch
    %28 = sbr.rel (0) target = $region33
  $region32: #{_lambda_.13} parent=0 // pred_region
    _
  $region33: #{_lambda_.13} parent=0 // pred_fallthru
    _
  %p30 = scmp.eq.s32.totalorder 0, 0
  // Predicated region
  $region34: #{_lambda_.13} parent=0 // pred_check
    %p31 = pneg %p30
  $region35: #{_lambda_.13} parent=0 // pred_check_branch
    %33 = sbr.rel (%p31) target = $region37
  $region36: #{_lambda_.13} parent=0 // pred_region
    %34 = vst [vmem:[#allocation2] sm:$0xff] 0.0
    %35 = vst [vmem:[#allocation2 + $0x8] sm:$0xff] 0.0
    %36 = vst [vmem:[#allocation2 + $0x10] sm:$0xff] 0.0
  $region37: #{_lambda_.13} parent=0 // pred_fallthru
    _
  %v37 = vld [vmem:[%s0] sm:$0x1]
  %v38 = vlaneseq
  %v39 = vshrl.u32 %v38, 7
  %v40 = vlaneseq
  %v41 = vshrl.u32 %v40, 7
  %v42 = vsub.s32 0, %v41
  %v43 = vrot.slane %v37, %v42
  %vm44 = vcmp.eq.s32.totalorder %v39, %v43
  %v45 = vsel %vm44, 1, 0
  %v46 = vcvt.s32.f32 %v45
  %v47 = vpack.c.bf16 %v46, %v46
  %v48 = vld [vmem:[%s1] sm:$0xf]
  %v49 = vld [vmem:[%s1 + $0x4] sm:$0xf]
  %v50 = vld [vmem:[%s1 + $0x8] sm:$0xf]
  %v51 = vld [vmem:[%s1 + $0xc] sm:$0xf]
  %v52 = vld [vmem:[%s1 + $0x10] sm:$0xf]
  %v53 = vld [vmem:[%s1 + $0x14] sm:$0xf]
  %v54 = vld [vmem:[%s1 + $0x18] sm:$0xf]
  %v55 = vld [vmem:[%s1 + $0x1c] sm:$0xf]
  %v56 = vld [vmem:[%s1 + $0x20] sm:$0xf]
  %v57 = vld [vmem:[%s1 + $0x24] sm:$0xf]
  %v58 = vld [vmem:[%s1 + $0x28] sm:$0xf]
  %v59 = vld [vmem:[%s1 + $0x2c] sm:$0xf]
  %v60 = vld [vmem:[%s1 + $0x30] sm:$0xf]
  %v61 = vld [vmem:[%s1 + $0x34] sm:$0xf]
  %v62 = vld [vmem:[%s1 + $0x38] sm:$0xf]
  %v63 = vld [vmem:[%s1 + $0x3c] sm:$0xf]
  %v64 = vld [vmem:[%s2] sm:$0xf]
  %v65 = vld [vmem:[%s2 + $0x4] sm:$0xf]
  %v66 = vld [vmem:[%s2 + $0x8] sm:$0xf]
  %v67 = vld [vmem:[%s2 + $0xc] sm:$0xf]
  %v68 = vld [vmem:[%s2 + $0x10] sm:$0xf]
  %v69 = vld [vmem:[%s2 + $0x14] sm:$0xf]
  %v70 = vld [vmem:[%s2 + $0x18] sm:$0xf]
  %v71 = vld [vmem:[%s2 + $0x1c] sm:$0xf]
  %v72 = vld [vmem:[%s2 + $0x20] sm:$0xf]
  %v73 = vld [vmem:[%s2 + $0x24] sm:$0xf]
  %v74 = vld [vmem:[%s2 + $0x28] sm:$0xf]
  %v75 = vld [vmem:[%s2 + $0x2c] sm:$0xf]
  %v76 = vld [vmem:[%s2 + $0x30] sm:$0xf]
  %v77 = vld [vmem:[%s2 + $0x34] sm:$0xf]
  %v78 = vld [vmem:[%s2 + $0x38] sm:$0xf]
  %v79 = vld [vmem:[%s2 + $0x3c] sm:$0xf]
  %v80 = vld [vmem:[%s3] sm:$0xf]
  %v81 = vld [vmem:[%s3 + $0x4] sm:$0xf]
  %v82 = vld [vmem:[%s3 + $0x8] sm:$0xf]
  %v83 = vld [vmem:[%s3 + $0xc] sm:$0xf]
  %v84 = vld [vmem:[%s3 + $0x10] sm:$0xf]
  %v85 = vld [vmem:[%s3 + $0x14] sm:$0xf]
  %v86 = vld [vmem:[%s3 + $0x18] sm:$0xf]
  %v87 = vld [vmem:[%s3 + $0x1c] sm:$0xf]
  %v88 = vld [vmem:[%s3 + $0x20] sm:$0xf]
  %v89 = vld [vmem:[%s3 + $0x24] sm:$0xf]
  %v90 = vld [vmem:[%s3 + $0x28] sm:$0xf]
  %v91 = vld [vmem:[%s3 + $0x2c] sm:$0xf]
  %v92 = vld [vmem:[%s3 + $0x30] sm:$0xf]
  %v93 = vld [vmem:[%s3 + $0x34] sm:$0xf]
  %v94 = vld [vmem:[%s3 + $0x38] sm:$0xf]
  %v95 = vld [vmem:[%s3 + $0x3c] sm:$0xf]
  %v112 = vunpack.c.l.b16 %v48
  %v113 = vunpack.c.l.b16 %v49
  %v114 = vunpack.c.l.b16 %v50
  %v115 = vunpack.c.l.b16 %v51
  %v116 = vunpack.c.l.b16 %v52
  %v117 = vunpack.c.l.b16 %v53
  %v118 = vunpack.c.l.b16 %v54
  %v119 = vunpack.c.l.b16 %v55
  %v120 = vunpack.c.l.b16 %v56
  %v121 = vunpack.c.l.b16 %v57
  %v122 = vunpack.c.l.b16 %v58
  %v123 = vunpack.c.l.b16 %v59
  %v124 = vunpack.c.l.b16 %v60
  %v125 = vunpack.c.l.b16 %v61
  %v126 = vunpack.c.l.b16 %v62
  %v127 = vunpack.c.l.b16 %v63
  %v128 = vpack.c.b16 %v113, %v112
  %v129 = vpack.c.b16 %v115, %v114
  %v130 = vpack.c.b16 %v117, %v116
  %v131 = vpack.c.b16 %v119, %v118
  %v132 = vpack.c.b16 %v121, %v120
  %v133 = vpack.c.b16 %v123, %v122
  %v134 = vpack.c.b16 %v125, %v124
  %v135 = vpack.c.b16 %v127, %v126
  %v160 = vunpack.c.l.b16 %v64
  %v161 = vunpack.c.l.b16 %v65
  %v162 = vunpack.c.l.b16 %v66
  %v163 = vunpack.c.l.b16 %v67
  %v164 = vunpack.c.l.b16 %v68
  %v165 = vunpack.c.l.b16 %v69
  %v166 = vunpack.c.l.b16 %v70
  %v167 = vunpack.c.l.b16 %v71
  %v168 = vunpack.c.l.b16 %v72
  %v169 = vunpack.c.l.b16 %v73
  %v170 = vunpack.c.l.b16 %v74
  %v171 = vunpack.c.l.b16 %v75
  %v172 = vunpack.c.l.b16 %v76
  %v173 = vunpack.c.l.b16 %v77
  %v174 = vunpack.c.l.b16 %v78
  %v175 = vunpack.c.l.b16 %v79
  %v176 = vpack.c.b16 %v161, %v160
  %v177 = vpack.c.b16 %v163, %v162
  %v178 = vpack.c.b16 %v165, %v164
  %v179 = vpack.c.b16 %v167, %v166
  %v180 = vpack.c.b16 %v169, %v168
  %v181 = vpack.c.b16 %v171, %v170
  %v182 = vpack.c.b16 %v173, %v172
  %v183 = vpack.c.b16 %v175, %v174
  %v208 = vunpack.c.l.b16 %v80
  %v209 = vunpack.c.l.b16 %v81
  %v210 = vunpack.c.l.b16 %v82
  %v211 = vunpack.c.l.b16 %v83
  %v212 = vunpack.c.l.b16 %v84
  %v213 = vunpack.c.l.b16 %v85
  %v214 = vunpack.c.l.b16 %v86
  %v215 = vunpack.c.l.b16 %v87
  %v216 = vunpack.c.l.b16 %v88
  %v217 = vunpack.c.l.b16 %v89
  %v218 = vunpack.c.l.b16 %v90
  %v219 = vunpack.c.l.b16 %v91
  %v220 = vunpack.c.l.b16 %v92
  %v221 = vunpack.c.l.b16 %v93
  %v222 = vunpack.c.l.b16 %v94
  %v223 = vunpack.c.l.b16 %v95
  %v224 = vpack.c.b16 %v209, %v208
  %v225 = vpack.c.b16 %v211, %v210
  %v226 = vpack.c.b16 %v213, %v212
  %v227 = vpack.c.b16 %v215, %v214
  %v228 = vpack.c.b16 %v217, %v216
  %v229 = vpack.c.b16 %v219, %v218
  %v230 = vpack.c.b16 %v221, %v220
  %v231 = vpack.c.b16 %v223, %v222
  %v240 = vld [vmem:[#allocation2] sm:$0xff]
  %v241 = vld [vmem:[#allocation2 + $0x8] sm:$0xff]
  %v242 = vld [vmem:[#allocation2 + $0x10] sm:$0xff]
  %243 = vmatprep.subr.bf16.mxu0 %v183
  %244 = vmatpush1.bf16.msra.mxu0 %v135
  %245 = vmatprep.subr.bf16.mxu0 %v182
  %246 = vmatpush1.bf16.msra.mxu0 %v134
  %247 = vmatprep.subr.bf16.mxu0 %v181
  %248 = vmatpush1.bf16.msra.mxu0 %v133
  %249 = vmatprep.subr.bf16.mxu0 %v180
  %250 = vmatpush1.bf16.msra.mxu0 %v132
  %251 = vmatprep.subr.bf16.mxu0 %v179
  %252 = vmatpush1.bf16.msra.mxu0 %v131
  %253 = vmatprep.subr.bf16.mxu0 %v178
  %254 = vmatpush1.bf16.msra.mxu0 %v130
  %255 = vmatprep.subr.bf16.mxu0 %v177
  %256 = vmatpush1.bf16.msra.mxu0 %v129
  %257 = vmatprep.subr.bf16.mxu0 %v176
  %258 = vmatpush1.bf16.msra.mxu0 %v128
  %259 = vmatprep.subr.bf16.mxu0 0
  %260 = vmatpush2.bf16.msra.mxu0 0
  %261 = vmatprep.subr.bf16.mxu0 0
  %262 = vmatpush2.bf16.msra.mxu0 0
  %263 = vmatprep.subr.bf16.mxu0 0
  %264 = vmatpush2.bf16.msra.mxu0 0
  %265 = vmatprep.subr.bf16.mxu0 0
  %266 = vmatpush2.bf16.msra.mxu0 0
  %267 = vmatprep.subr.bf16.mxu0 0
  %268 = vmatpush2.bf16.msra.mxu0 0
  %269 = vmatprep.subr.bf16.mxu0 0
  %270 = vmatpush2.bf16.msra.mxu0 0
  %271 = vmatprep.subr.bf16.mxu0 0
  %272 = vmatpush2.bf16.msra.mxu0 0
  %273 = vmatprep.subr.bf16.mxu0 0
  %274 = vmatpush2.bf16.msra.mxu0 0
  %275 = vmatprep.mubr.bf16.mxu0 0
  %276 = vmatmul.mubr.bf16.gmra.mxu0 %v47
  %v277 = vpop.f32.mrf.mxu0
  %v278 = vadd.f32 0.0, %v277
  %v279 = vpop.f32.mrf.mxu0
  %v280 = vadd.f32 0.0, %v279
  %v281 = vpop.f32.mrf.mxu0
  %v282 = vpop.f32.mrf.mxu0
  %283 = vdwg.mxu0
  %284 = vmatprep.subr.bf16.mxu0 0
  %285 = vmatpush1.bf16.msra.mxu0 %v231
  %286 = vmatprep.subr.bf16.mxu0 0
  %287 = vmatpush1.bf16.msra.mxu0 %v230
  %288 = vmatprep.subr.bf16.mxu0 0
  %289 = vmatpush1.bf16.msra.mxu0 %v229
  %290 = vmatprep.subr.bf16.mxu0 0
  %291 = vmatpush1.bf16.msra.mxu0 %v228
  %292 = vmatprep.subr.bf16.mxu0 0
  %293 = vmatpush1.bf16.msra.mxu0 %v227
  %294 = vmatprep.subr.bf16.mxu0 0
  %295 = vmatpush1.bf16.msra.mxu0 %v226
  %296 = vmatprep.subr.bf16.mxu0 0
  %297 = vmatpush1.bf16.msra.mxu0 %v225
  %298 = vmatprep.subr.bf16.mxu0 0
  %299 = vmatpush1.bf16.msra.mxu0 %v224
  %300 = vmatprep.subr.bf16.mxu0 0
  %301 = vmatpush2.bf16.msra.mxu0 0
  %302 = vmatprep.subr.bf16.mxu0 0
  %303 = vmatpush2.bf16.msra.mxu0 0
  %304 = vmatprep.subr.bf16.mxu0 0
  %305 = vmatpush2.bf16.msra.mxu0 0
  %306 = vmatprep.subr.bf16.mxu0 0
  %307 = vmatpush2.bf16.msra.mxu0 0
  %308 = vmatprep.subr.bf16.mxu0 0
  %309 = vmatpush2.bf16.msra.mxu0 0
  %310 = vmatprep.subr.bf16.mxu0 0
  %311 = vmatpush2.bf16.msra.mxu0 0
  %312 = vmatprep.subr.bf16.mxu0 0
  %313 = vmatpush2.bf16.msra.mxu0 0
  %314 = vmatprep.subr.bf16.mxu0 0
  %315 = vmatpush2.bf16.msra.mxu0 0
  %316 = vmatprep.mubr.bf16.mxu0 0
  %317 = vmatmul.mubr.bf16.gmra.mxu0 %v47
  %v318 = vpop.f32.mrf.mxu0
  %v319 = vadd.f32 0.0, %v318
  %v320 = vpop.f32.mrf.mxu0
  %v321 = vpop.f32.mrf.mxu0
  %v322 = vpop.f32.mrf.mxu0
  %323 = vdwg.mxu0
  %v324 = vadd.f32 %v240, %v278
  %v325 = vadd.f32 %v241, %v280
  %v326 = vadd.f32 %v242, %v319
  %327 = vst [vmem:[#allocation2] sm:$0xff] %v324
  %328 = vst [vmem:[#allocation2 + $0x8] sm:$0xff] %v325
  %329 = vst [vmem:[#allocation2 + $0x10] sm:$0xff] %v326
  // Predicated region
  $region38: #{_lambda_.13} parent=0 // pred_check
    %p330 = pneg %p30
  $region39: #{_lambda_.13} parent=0 // pred_check_branch
    %332 = sbr.rel (%p330) target = $region41
  $region40: #{_lambda_.13} parent=0 // pred_region
    %v333 = vld [vmem:[#allocation2] sm:$0xff]
    %v334 = vld [vmem:[#allocation2 + $0x8] sm:$0xff]
    %v335 = vld [vmem:[#allocation2 + $0x10] sm:$0xff]
    %v336 = vld [vmem:[%s4] sm:$0xff]
    %v337 = vld [vmem:[%s4 + $0x8] sm:$0xff]
    %v338 = vld [vmem:[%s4 + $0x10] sm:$0xff]
    %v339 = vld [vmem:[%s4 + $0x18] sm:$0xff]
    %v340 = vld [vmem:[%s4 + $0x20] sm:$0xff]
    %v341 = vld [vmem:[%s4 + $0x28] sm:$0xff]
    %v342 = vld [vmem:[%s4 + $0x30] sm:$0xff]
    %v343 = vld [vmem:[%s4 + $0x38] sm:$0xff]
    %v344 = vld [vmem:[%s4 + $0x40] sm:$0xff]
    %v345 = vld [vmem:[%s4 + $0x48] sm:$0xff]
    %v346 = vld [vmem:[%s4 + $0x50] sm:$0xff]
    %v347 = vld [vmem:[%s4 + $0x58] sm:$0xff]
    %v348 = vld [vmem:[%s4 + $0x60] sm:$0xff]
    %v349 = vld [vmem:[%s4 + $0x68] sm:$0xff]
    %v350 = vld [vmem:[%s4 + $0x70] sm:$0xff]
    %v351 = vld [vmem:[%s4 + $0x78] sm:$0xff]
    %v352 = vld [vmem:[%s4 + $0x80] sm:$0xff]
    %v353 = vld [vmem:[%s4 + $0x88] sm:$0xff]
    %v354 = vld [vmem:[%s4 + $0x90] sm:$0xff]
    %v355 = vld [vmem:[%s4 + $0x98] sm:$0xff]
    %v356 = vld [vmem:[%s4 + $0xa0] sm:$0xff]
    %v357 = vld [vmem:[%s4 + $0xa8] sm:$0xff]
    %v358 = vld [vmem:[%s4 + $0xb0] sm:$0xff]
    %v359 = vld [vmem:[%s4 + $0xb8] sm:$0xff]
    %v360 = vld [vmem:[%s4 + $0xc0] sm:$0xff]
    %v361 = vld [vmem:[%s4 + $0xc8] sm:$0xff]
    %v362 = vld [vmem:[%s4 + $0xd0] sm:$0xff]
    %v363 = vld [vmem:[%s4 + $0xd8] sm:$0xff]
    %v364 = vld [vmem:[%s4 + $0xe0] sm:$0xff]
    %v365 = vld [vmem:[%s4 + $0xe8] sm:$0xff]
    %v366 = vld [vmem:[%s4 + $0xf0] sm:$0xff]
    %v367 = vld [vmem:[%s4 + $0xf8] sm:$0xff]
    %v368 = vld [vmem:[%s4 + $0x100] sm:$0xff]
    %v369 = vld [vmem:[%s4 + $0x108] sm:$0xff]
    %v370 = vld [vmem:[%s4 + $0x110] sm:$0xff]
    %v371 = vld [vmem:[%s4 + $0x118] sm:$0xff]
    %v372 = vld [vmem:[%s4 + $0x120] sm:$0xff]
    %v373 = vld [vmem:[%s4 + $0x128] sm:$0xff]
    %v374 = vld [vmem:[%s4 + $0x130] sm:$0xff]
    %v375 = vld [vmem:[%s4 + $0x138] sm:$0xff]
    %v376 = vld [vmem:[%s4 + $0x140] sm:$0xff]
    %v377 = vld [vmem:[%s4 + $0x148] sm:$0xff]
    %v378 = vld [vmem:[%s4 + $0x150] sm:$0xff]
    %v379 = vld [vmem:[%s4 + $0x158] sm:$0xff]
    %v380 = vld [vmem:[%s4 + $0x160] sm:$0xff]
    %v381 = vld [vmem:[%s4 + $0x168] sm:$0xff]
    %v382 = vld [vmem:[%s4 + $0x170] sm:$0xff]
    %v383 = vld [vmem:[%s4 + $0x178] sm:$0xff]
    %v384 = vld [vmem:[%s5] sm:$0x1]
    %v386 = vlaneseq
    %v387 = vshrl.u32 %v386, 7
    %v388 = vsub.s32 0, %v387
    %v389 = vrot.slane %v384, %v388
    %391 = vmatprep.subr.mxu0 0.0
    %392 = vmatpush1.msra.mxu0 %v351
    %393 = vmatprep.subr.mxu0 0.0
    %394 = vmatpush1.msra.mxu0 %v350
    %395 = vmatprep.subr.mxu0 0.0
    %396 = vmatpush1.msra.mxu0 %v349
    %397 = vmatprep.subr.mxu0 0.0
    %398 = vmatpush1.msra.mxu0 %v348
    %399 = vmatprep.subr.mxu0 0.0
    %400 = vmatpush1.msra.mxu0 %v347
    %401 = vmatprep.subr.mxu0 0.0
    %402 = vmatpush1.msra.mxu0 %v346
    %403 = vmatprep.subr.mxu0 0.0
    %404 = vmatpush1.msra.mxu0 %v345
    %405 = vmatprep.subr.mxu0 0.0
    %406 = vmatpush1.msra.mxu0 %v344
    %407 = vmatprep.subr.mxu0 0.0
    %408 = vmatpush1.msra.mxu0 %v343
    %409 = vmatprep.subr.mxu0 0.0
    %410 = vmatpush1.msra.mxu0 %v342
    %411 = vmatprep.subr.mxu0 0.0
    %412 = vmatpush1.msra.mxu0 %v341
    %413 = vmatprep.subr.mxu0 0.0
    %414 = vmatpush1.msra.mxu0 %v340
    %415 = vmatprep.subr.mxu0 0.0
    %416 = vmatpush1.msra.mxu0 %v339
    %417 = vmatprep.subr.mxu0 0.0
    %418 = vmatpush1.msra.mxu0 %v338
    %419 = vmatprep.subr.mxu0 0.0
    %420 = vmatpush1.msra.mxu0 %v337
    %421 = vmatprep.subr.mxu0 0.0
    %422 = vmatpush1.msra.mxu0 %v336
    %423 = vmatprep.subr.mxu0 0.0
    %424 = vmatpush2.msra.mxu0 %v367
    %425 = vmatprep.subr.mxu0 0.0
    %426 = vmatpush2.msra.mxu0 %v366
    %427 = vmatprep.subr.mxu0 0.0
    %428 = vmatpush2.msra.mxu0 %v365
    %429 = vmatprep.subr.mxu0 0.0
    %430 = vmatpush2.msra.mxu0 %v364
    %431 = vmatprep.subr.mxu0 0.0
    %432 = vmatpush2.msra.mxu0 %v363
    %433 = vmatprep.subr.mxu0 0.0
    %434 = vmatpush2.msra.mxu0 %v362
    %435 = vmatprep.subr.mxu0 0.0
    %436 = vmatpush2.msra.mxu0 %v361
    %437 = vmatprep.subr.mxu0 0.0
    %438 = vmatpush2.msra.mxu0 %v360
    %439 = vmatprep.subr.mxu0 0.0
    %440 = vmatpush2.msra.mxu0 %v359
    %441 = vmatprep.subr.mxu0 0.0
    %442 = vmatpush2.msra.mxu0 %v358
    %443 = vmatprep.subr.mxu0 0.0
    %444 = vmatpush2.msra.mxu0 %v357
    %445 = vmatprep.subr.mxu0 0.0
    %446 = vmatpush2.msra.mxu0 %v356
    %447 = vmatprep.subr.mxu0 0.0
    %448 = vmatpush2.msra.mxu0 %v355
    %449 = vmatprep.subr.mxu0 0.0
    %450 = vmatpush2.msra.mxu0 %v354
    %451 = vmatprep.subr.mxu0 0.0
    %452 = vmatpush2.msra.mxu0 %v353
    %453 = vmatprep.subr.mxu0 0.0
    %454 = vmatpush2.msra.mxu0 %v352
    %455 = vmatprep.mubr.f32.mxu0 %v334
    %456 = vmatmul.mubr.f32.gmra.mxu0 %v333
    %v457 = vpop.f32.mrf.mxu0
    %v458 = vadd.f32 %v389, %v457
    %v459 = vpop.f32.mrf.mxu0
    %460 = vdwg.mxu0
    %461 = vmatprep.subr.mxu0 0.0
    %462 = vmatpush1.msra.mxu0 %v383
    %463 = vmatprep.subr.mxu0 0.0
    %464 = vmatpush1.msra.mxu0 %v382
    %465 = vmatprep.subr.mxu0 0.0
    %466 = vmatpush1.msra.mxu0 %v381
    %467 = vmatprep.subr.mxu0 0.0
    %468 = vmatpush1.msra.mxu0 %v380
    %469 = vmatprep.subr.mxu0 0.0
    %470 = vmatpush1.msra.mxu0 %v379
    %471 = vmatprep.subr.mxu0 0.0
    %472 = vmatpush1.msra.mxu0 %v378
    %473 = vmatprep.subr.mxu0 0.0
    %474 = vmatpush1.msra.mxu0 %v377
    %475 = vmatprep.subr.mxu0 0.0
    %476 = vmatpush1.msra.mxu0 %v376
    %477 = vmatprep.subr.mxu0 0.0
    %478 = vmatpush1.msra.mxu0 %v375
    %479 = vmatprep.subr.mxu0 0.0
    %480 = vmatpush1.msra.mxu0 %v374
    %481 = vmatprep.subr.mxu0 0.0
    %482 = vmatpush1.msra.mxu0 %v373
    %483 = vmatprep.subr.mxu0 0.0
    %484 = vmatpush1.msra.mxu0 %v372
    %485 = vmatprep.subr.mxu0 0.0
    %486 = vmatpush1.msra.mxu0 %v371
    %487 = vmatprep.subr.mxu0 0.0
    %488 = vmatpush1.msra.mxu0 %v370
    %489 = vmatprep.subr.mxu0 0.0
    %490 = vmatpush1.msra.mxu0 %v369
    %491 = vmatprep.subr.mxu0 0.0
    %492 = vmatpush1.msra.mxu0 %v368
    %493 = vmatprep.subr.mxu0 0.0
    %494 = vmatpush2.msra.mxu0 0.0
    %495 = vmatprep.subr.mxu0 0.0
    %496 = vmatpush2.msra.mxu0 0.0
    %497 = vmatprep.subr.mxu0 0.0
    %498 = vmatpush2.msra.mxu0 0.0
    %499 = vmatprep.subr.mxu0 0.0
    %500 = vmatpush2.msra.mxu0 0.0
    %501 = vmatprep.subr.mxu0 0.0
    %502 = vmatpush2.msra.mxu0 0.0
    %503 = vmatprep.subr.mxu0 0.0
    %504 = vmatpush2.msra.mxu0 0.0
    %505 = vmatprep.subr.mxu0 0.0
    %506 = vmatpush2.msra.mxu0 0.0
    %507 = vmatprep.subr.mxu0 0.0
    %508 = vmatpush2.msra.mxu0 0.0
    %509 = vmatprep.subr.mxu0 0.0
    %510 = vmatpush2.msra.mxu0 0.0
    %511 = vmatprep.subr.mxu0 0.0
    %512 = vmatpush2.msra.mxu0 0.0
    %513 = vmatprep.subr.mxu0 0.0
    %514 = vmatpush2.msra.mxu0 0.0
    %515 = vmatprep.subr.mxu0 0.0
    %516 = vmatpush2.msra.mxu0 0.0
    %517 = vmatprep.subr.mxu0 0.0
    %518 = vmatpush2.msra.mxu0 0.0
    %519 = vmatprep.subr.mxu0 0.0
    %520 = vmatpush2.msra.mxu0 0.0
    %521 = vmatprep.subr.mxu0 0.0
    %522 = vmatpush2.msra.mxu0 0.0
    %523 = vmatprep.subr.mxu0 0.0
    %524 = vmatpush2.msra.mxu0 0.0
    %525 = vmatprep.mubr.f32.mxu0 0.0
    %526 = vmatmul.mubr.f32.gmra.mxu0 %v335
    %v527 = vpop.f32.mrf.mxu0
    %v528 = vadd.f32 %v458, %v527
    %v529 = vpop.f32.mrf.mxu0
    %530 = vdwg.mxu0
    %vm531 = vcmp.gt.f32.partialorder %v528, 0.0
    %v532 = vmul.f32 %v528, 0.01
    %v533 = vsel %vm531, %v528, %v532
    %v534 = vld [vmem:[%s6] sm:$0xff]
    %v535 = vld [vmem:[%s6 + $0x8] sm:$0xff]
    %v536 = vld [vmem:[%s6 + $0x10] sm:$0xff]
    %v537 = vld [vmem:[%s6 + $0x18] sm:$0xff]
    %v538 = vld [vmem:[%s6 + $0x20] sm:$0xff]
    %v539 = vld [vmem:[%s6 + $0x28] sm:$0xff]
    %v540 = vld [vmem:[%s6 + $0x30] sm:$0xff]
    %v541 = vld [vmem:[%s6 + $0x38] sm:$0xff]
    %v542 = vld [vmem:[%s6 + $0x40] sm:$0xff]
    %v543 = vld [vmem:[%s6 + $0x48] sm:$0xff]
    %v544 = vld [vmem:[%s6 + $0x50] sm:$0xff]
    %v545 = vld [vmem:[%s6 + $0x58] sm:$0xff]
    %v546 = vld [vmem:[%s6 + $0x60] sm:$0xff]
    %v547 = vld [vmem:[%s6 + $0x68] sm:$0xff]
    %v548 = vld [vmem:[%s6 + $0x70] sm:$0xff]
    %v549 = vld [vmem:[%s6 + $0x78] sm:$0xff]
    %v550 = vld [vmem:[%s7] sm:$0x1]
    %v552 = vlaneseq
    %v553 = vshrl.u32 %v552, 7
    %v554 = vsub.s32 0, %v553
    %v555 = vrot.slane %v550, %v554
    %557 = vmatprep.subr.mxu0 0.0
    %558 = vmatpush1.msra.mxu0 %v549
    %559 = vmatprep.subr.mxu0 0.0
    %560 = vmatpush1.msra.mxu0 %v548
    %561 = vmatprep.subr.mxu0 0.0
    %562 = vmatpush1.msra.mxu0 %v547
    %563 = vmatprep.subr.mxu0 0.0
    %564 = vmatpush1.msra.mxu0 %v546
    %565 = vmatprep.subr.mxu0 0.0
    %566 = vmatpush1.msra.mxu0 %v545
    %567 = vmatprep.subr.mxu0 0.0
    %568 = vmatpush1.msra.mxu0 %v544
    %569 = vmatprep.subr.mxu0 0.0
    %570 = vmatpush1.msra.mxu0 %v543
    %571 = vmatprep.subr.mxu0 0.0
    %572 = vmatpush1.msra.mxu0 %v542
    %573 = vmatprep.subr.mxu0 0.0
    %574 = vmatpush1.msra.mxu0 %v541
    %575 = vmatprep.subr.mxu0 0.0
    %576 = vmatpush1.msra.mxu0 %v540
    %577 = vmatprep.subr.mxu0 0.0
    %578 = vmatpush1.msra.mxu0 %v539
    %579 = vmatprep.subr.mxu0 0.0
    %580 = vmatpush1.msra.mxu0 %v538
    %581 = vmatprep.subr.mxu0 0.0
    %582 = vmatpush1.msra.mxu0 %v537
    %583 = vmatprep.subr.mxu0 0.0
    %584 = vmatpush1.msra.mxu0 %v536
    %585 = vmatprep.subr.mxu0 0.0
    %586 = vmatpush1.msra.mxu0 %v535
    %587 = vmatprep.subr.mxu0 0.0
    %588 = vmatpush1.msra.mxu0 %v534
    %589 = vmatprep.subr.mxu0 0.0
    %590 = vmatpush2.msra.mxu0 0.0
    %591 = vmatprep.subr.mxu0 0.0
    %592 = vmatpush2.msra.mxu0 0.0
    %593 = vmatprep.subr.mxu0 0.0
    %594 = vmatpush2.msra.mxu0 0.0
    %595 = vmatprep.subr.mxu0 0.0
    %596 = vmatpush2.msra.mxu0 0.0
    %597 = vmatprep.subr.mxu0 0.0
    %598 = vmatpush2.msra.mxu0 0.0
    %599 = vmatprep.subr.mxu0 0.0
    %600 = vmatpush2.msra.mxu0 0.0
    %601 = vmatprep.subr.mxu0 0.0
    %602 = vmatpush2.msra.mxu0 0.0
    %603 = vmatprep.subr.mxu0 0.0
    %604 = vmatpush2.msra.mxu0 0.0
    %605 = vmatprep.subr.mxu0 0.0
    %606 = vmatpush2.msra.mxu0 0.0
    %607 = vmatprep.subr.mxu0 0.0
    %608 = vmatpush2.msra.mxu0 0.0
    %609 = vmatprep.subr.mxu0 0.0
    %610 = vmatpush2.msra.mxu0 0.0
    %611 = vmatprep.subr.mxu0 0.0
    %612 = vmatpush2.msra.mxu0 0.0
    %613 = vmatprep.subr.mxu0 0.0
    %614 = vmatpush2.msra.mxu0 0.0
    %615 = vmatprep.subr.mxu0 0.0
    %616 = vmatpush2.msra.mxu0 0.0
    %617 = vmatprep.subr.mxu0 0.0
    %618 = vmatpush2.msra.mxu0 0.0
    %619 = vmatprep.subr.mxu0 0.0
    %620 = vmatpush2.msra.mxu0 0.0
    %621 = vmatprep.mubr.f32.mxu0 0.0
    %622 = vmatmul.mubr.f32.gmra.mxu0 %v533
    %v623 = vpop.f32.mrf.mxu0
    %v624 = vadd.f32 %v555, %v623
    %v625 = vpop.f32.mrf.mxu0
    %626 = vdwg.mxu0
    %627 = vst [vmem:[%s8] sm:$0xff] %v624
  $region41: #{_lambda_.13} parent=0 // pred_fallthru
    _
  // Predicated region
  $region42: #{_lambda_.13} parent=0 // pred_check
    _
  $region43: #{_lambda_.13} parent=0 // pred_check_branch
    %629 = sbr.rel (0) target = $region45
  $region44: #{_lambda_.13} parent=0 // pred_region
    _
  $region45: #{_lambda_.13} parent=0 // pred_fallthru
    _
  // Predicated region
  $region46: #{_lambda_.13} parent=0 // pred_check
    _
  $region47: #{_lambda_.13} parent=0 // pred_check_branch
    %631 = sbr.rel (0) target = $region49
  $region48: #{_lambda_.13} parent=0 // pred_region
    _
  $region49: #{_lambda_.13} parent=0 // pred_fallthru
    _

// kernel: _lambda_.7
$region0: #{_lambda_.7}
  #allocation0 [shape = 'u32[]', space=smem, size = 0x4, offset = 0x4, fixed_abs, tag = 'smem constant byte address 0x4 - core index']
  #allocation1 [shape = 'u32[144,128]{1,0:T(1,128)}', space=vmem, size = 0x12000, scoped, tag = 'internal scratch']
  %s0 = inlined_call_operand.vmem [shape: bf16[128,128], index: 0, kind: input, shape index: {}]
  %s1 = inlined_call_operand.vmem [shape: f32[512,128], index: 1, kind: input, shape index: {}]
  %s2 = inlined_call_operand.vmem [shape: s32[512,1], index: 2, kind: input, shape index: {}]
  %s3 = inlined_call_operand.hbm [shape: f32[128,128], index: 3, kind: input, shape index: {}]
  %s4 = inlined_call_operand.vmem [shape: f32[1,128], index: 4, kind: input, shape index: {}]
  %s5 = inlined_call_operand.vmem [shape: bf16[512,128], index: 5, kind: output, shape index: {}]
  %s6 = sld [smem:[#allocation0]]
  $region34: #{_lambda_.7} parent=0
    _
  %s8 = ssub.s32 1, %s6
  %s9 = scalar_select 0, %s8, %s6
  $region1: #{_lambda_.7} parent=0
    #allocation2 [shape = 'u8[65536]{0}', space=vmem, size = 0x10000, scoped, tag = 'input window, operand 3, single buffered']
    #allocation3 [shape = 's32[1]{0}', space=sflag, size = 0x4, scoped, tag = 'scoped memory for _lambda_.7']
    %10 = vsyncpa [#allocation3], 0
    // Predicated region
    $region2: #{_lambda_.7} parent=1 // pred_check
      _
    $region3: #{_lambda_.7} parent=1 // pred_check_branch
      %12 = sbr.rel (0) target = $region5
    $region4: #{_lambda_.7} parent=1 // pred_region
      _
    $region5: #{_lambda_.7} parent=1 // pred_fallthru
      _
    // Predicated region
    $region6: #{_lambda_.7} parent=1 // pred_check
      _
    $region7: #{_lambda_.7} parent=1 // pred_check_branch
      %14 = sbr.rel (0) target = $region9
    $region8: #{_lambda_.7} parent=1 // pred_region
      _
    $region9: #{_lambda_.7} parent=1 // pred_fallthru
      _
    // Predicated region
    $region10: #{_lambda_.7} parent=1 // pred_check
      _
    $region11: #{_lambda_.7} parent=1 // pred_check_branch
      %16 = sbr.rel (0) target = $region13
    $region12: #{_lambda_.7} parent=1 // pred_region
      _
    $region13: #{_lambda_.7} parent=1 // pred_fallthru
      _
    // Predicated region
    $region14: #{_lambda_.7} parent=1 // pred_check
      _
    $region15: #{_lambda_.7} parent=1 // pred_check_branch
      %18 = sbr.rel (0) target = $region17
    $region16: #{_lambda_.7} parent=1 // pred_region
      %s20 = ssub.s32 2048, 2048
      %21 = vsyncadd [#allocation3], %s20
      %s22 = sshll.u32 [#allocation2], 4
      %s23 = int_to_ptr.vmem [resolvable:$true] %s22
      %28 = dma.hbm_to_vmem [thread:$0]  %s3, 2048, %s23, [#allocation3], 128, 128, 8
    $region17: #{_lambda_.7} parent=1 // pred_fallthru
      _
    // Predicated region
    $region18: #{_lambda_.7} parent=1 // pred_check
      _
    $region19: #{_lambda_.7} parent=1 // pred_check_branch
      %30 = sbr.rel (0) target = $region21
    $region20: #{_lambda_.7} parent=1 // pred_region
      _
    $region21: #{_lambda_.7} parent=1 // pred_fallthru
      _
    // Predicated region
    $region22: #{_lambda_.7} parent=1 // pred_check
      _
    $region23: #{_lambda_.7} parent=1 // pred_check_branch
      %32 = sbr.rel (0) target = $region25
    $region24: #{_lambda_.7} parent=1 // pred_region
      %33 = dma.done [#allocation3], 2048
    $region25: #{_lambda_.7} parent=1 // pred_fallthru
      _
    %v35 = vld [vmem:[%s1] sm:$0xff]
    %v36 = vld [vmem:[%s1 + $0x8] sm:$0xff]
    %v37 = vld [vmem:[%s1 + $0x10] sm:$0xff]
    %v38 = vld [vmem:[%s1 + $0x18] sm:$0xff]
    %v39 = vld [vmem:[%s1 + $0x20] sm:$0xff]
    %v40 = vld [vmem:[%s1 + $0x28] sm:$0xff]
    %v41 = vld [vmem:[%s1 + $0x30] sm:$0xff]
    %v42 = vld [vmem:[%s1 + $0x38] sm:$0xff]
    %v43 = vld [vmem:[%s1 + $0x40] sm:$0xff]
    %v44 = vld [vmem:[%s1 + $0x48] sm:$0xff]
    %v45 = vld [vmem:[%s1 + $0x50] sm:$0xff]
    %v46 = vld [vmem:[%s1 + $0x58] sm:$0xff]
    %v47 = vld [vmem:[%s1 + $0x60] sm:$0xff]
    %v48 = vld [vmem:[%s1 + $0x68] sm:$0xff]
    %v49 = vld [vmem:[%s1 + $0x70] sm:$0xff]
    %v50 = vld [vmem:[%s1 + $0x78] sm:$0xff]
    %v51 = vld [vmem:[%s1 + $0x80] sm:$0xff]
    %v52 = vld [vmem:[%s1 + $0x88] sm:$0xff]
    %v53 = vld [vmem:[%s1 + $0x90] sm:$0xff]
    %v54 = vld [vmem:[%s1 + $0x98] sm:$0xff]
    %v55 = vld [vmem:[%s1 + $0xa0] sm:$0xff]
    %v56 = vld [vmem:[%s1 + $0xa8] sm:$0xff]
    %v57 = vld [vmem:[%s1 + $0xb0] sm:$0xff]
    %v58 = vld [vmem:[%s1 + $0xb8] sm:$0xff]
    %v59 = vld [vmem:[%s1 + $0xc0] sm:$0xff]
    %v60 = vld [vmem:[%s1 + $0xc8] sm:$0xff]
    %v61 = vld [vmem:[%s1 + $0xd0] sm:$0xff]
    %v62 = vld [vmem:[%s1 + $0xd8] sm:$0xff]
    %v63 = vld [vmem:[%s1 + $0xe0] sm:$0xff]
    %v64 = vld [vmem:[%s1 + $0xe8] sm:$0xff]
    %v65 = vld [vmem:[%s1 + $0xf0] sm:$0xff]
    %v66 = vld [vmem:[%s1 + $0xf8] sm:$0xff]
    %v67 = vld [vmem:[%s1 + $0x100] sm:$0xff]
    %v68 = vld [vmem:[%s1 + $0x108] sm:$0xff]
    %v69 = vld [vmem:[%s1 + $0x110] sm:$0xff]
    %v70 = vld [vmem:[%s1 + $0x118] sm:$0xff]
    %v71 = vld [vmem:[%s1 + $0x120] sm:$0xff]
    %v72 = vld [vmem:[%s1 + $0x128] sm:$0xff]
    %v73 = vld [vmem:[%s1 + $0x130] sm:$0xff]
    %v74 = vld [vmem:[%s1 + $0x138] sm:$0xff]
    %v75 = vld [vmem:[%s1 + $0x140] sm:$0xff]
    %v76 = vld [vmem:[%s1 + $0x148] sm:$0xff]
    %v77 = vld [vmem:[%s1 + $0x150] sm:$0xff]
    %v78 = vld [vmem:[%s1 + $0x158] sm:$0xff]
    %v79 = vld [vmem:[%s1 + $0x160] sm:$0xff]
    %v80 = vld [vmem:[%s1 + $0x168] sm:$0xff]
    %v81 = vld [vmem:[%s1 + $0x170] sm:$0xff]
    %v82 = vld [vmem:[%s1 + $0x178] sm:$0xff]
    %v83 = vld [vmem:[%s1 + $0x180] sm:$0xff]
    %v84 = vld [vmem:[%s1 + $0x188] sm:$0xff]
    %v85 = vld [vmem:[%s1 + $0x190] sm:$0xff]
    %v86 = vld [vmem:[%s1 + $0x198] sm:$0xff]
    %v87 = vld [vmem:[%s1 + $0x1a0] sm:$0xff]
    %v88 = vld [vmem:[%s1 + $0x1a8] sm:$0xff]
    %v89 = vld [vmem:[%s1 + $0x1b0] sm:$0xff]
    %v90 = vld [vmem:[%s1 + $0x1b8] sm:$0xff]
    %v91 = vld [vmem:[%s1 + $0x1c0] sm:$0xff]
    %v92 = vld [vmem:[%s1 + $0x1c8] sm:$0xff]
    %v93 = vld [vmem:[%s1 + $0x1d0] sm:$0xff]
    %v94 = vld [vmem:[%s1 + $0x1d8] sm:$0xff]
    %v95 = vld [vmem:[%s1 + $0x1e0] sm:$0xff]
    %v96 = vld [vmem:[%s1 + $0x1e8] sm:$0xff]
    %v97 = vld [vmem:[%s1 + $0x1f0] sm:$0xff]
    %v98 = vld [vmem:[%s1 + $0x1f8] sm:$0xff]
    %v99 = vld [vmem:[#allocation2] sm:$0xff]
    %v100 = vld [vmem:[#allocation2 + $0x8] sm:$0xff]
    %v101 = vld [vmem:[#allocation2 + $0x10] sm:$0xff]
    %v102 = vld [vmem:[#allocation2 + $0x18] sm:$0xff]
    %v103 = vld [vmem:[#allocation2 + $0x20] sm:$0xff]
    %v104 = vld [vmem:[#allocation2 + $0x28] sm:$0xff]
    %v105 = vld [vmem:[#allocation2 + $0x30] sm:$0xff]
    %v106 = vld [vmem:[#allocation2 + $0x38] sm:$0xff]
    %v107 = vld [vmem:[#allocation2 + $0x40] sm:$0xff]
    %v108 = vld [vmem:[#allocation2 + $0x48] sm:$0xff]
    %v109 = vld [vmem:[#allocation2 + $0x50] sm:$0xff]
    %v110 = vld [vmem:[#allocation2 + $0x58] sm:$0xff]
    %v111 = vld [vmem:[#allocation2 + $0x60] sm:$0xff]
    %v112 = vld [vmem:[#allocation2 + $0x68] sm:$0xff]
    %v113 = vld [vmem:[#allocation2 + $0x70] sm:$0xff]
    %v114 = vld [vmem:[#allocation2 + $0x78] sm:$0xff]
    %v115 = vld [vmem:[%s4] sm:$0x1]
    %v117 = vlaneseq
    %v118 = vshrl.u32 %v117, 7
    %v119 = vsub.s32 0, %v118
    %v120 = vrot.slane %v115, %v119
    %122 = vmatprep.subr.mxu0 0.0
    %123 = vmatpush1.msra.mxu0 %v114
    %124 = vmatprep.subr.mxu0 0.0
    %125 = vmatpush1.msra.mxu0 %v113
    %126 = vmatprep.subr.mxu0 0.0
    %127 = vmatpush1.msra.mxu0 %v112
    %128 = vmatprep.subr.mxu0 0.0
    %129 = vmatpush1.msra.mxu0 %v111
    %130 = vmatprep.subr.mxu0 0.0
    %131 = vmatpush1.msra.mxu0 %v110
    %132 = vmatprep.subr.mxu0 0.0
    %133 = vmatpush1.msra.mxu0 %v109
    %134 = vmatprep.subr.mxu0 0.0
    %135 = vmatpush1.msra.mxu0 %v108
    %136 = vmatprep.subr.mxu0 0.0
    %137 = vmatpush1.msra.mxu0 %v107
    %138 = vmatprep.subr.mxu0 0.0
    %139 = vmatpush1.msra.mxu0 %v106
    %140 = vmatprep.subr.mxu0 0.0
    %141 = vmatpush1.msra.mxu0 %v105
    %142 = vmatprep.subr.mxu0 0.0
    %143 = vmatpush1.msra.mxu0 %v104
    %144 = vmatprep.subr.mxu0 0.0
    %145 = vmatpush1.msra.mxu0 %v103
    %146 = vmatprep.subr.mxu0 0.0
    %147 = vmatpush1.msra.mxu0 %v102
    %148 = vmatprep.subr.mxu0 0.0
    %149 = vmatpush1.msra.mxu0 %v101
    %150 = vmatprep.subr.mxu0 0.0
    %151 = vmatpush1.msra.mxu0 %v100
    %152 = vmatprep.subr.mxu0 0.0
    %153 = vmatpush1.msra.mxu0 %v99
    %154 = vmatprep.subr.mxu0 0.0
    %155 = vmatpush2.msra.mxu0 0.0
    %156 = vmatprep.subr.mxu0 0.0
    %157 = vmatpush2.msra.mxu0 0.0
    %158 = vmatprep.subr.mxu0 0.0
    %159 = vmatpush2.msra.mxu0 0.0
    %160 = vmatprep.subr.mxu0 0.0
    %161 = vmatpush2.msra.mxu0 0.0
    %162 = vmatprep.subr.mxu0 0.0
    %163 = vmatpush2.msra.mxu0 0.0
    %164 = vmatprep.subr.mxu0 0.0
    %165 = vmatpush2.msra.mxu0 0.0
    %166 = vmatprep.subr.mxu0 0.0
    %167 = vmatpush2.msra.mxu0 0.0
    %168 = vmatprep.subr.mxu0 0.0
    %169 = vmatpush2.msra.mxu0 0.0
    %170 = vmatprep.subr.mxu0 0.0
    %171 = vmatpush2.msra.mxu0 0.0
    %172 = vmatprep.subr.mxu0 0.0
    %173 = vmatpush2.msra.mxu0 0.0
    %174 = vmatprep.subr.mxu0 0.0
    %175 = vmatpush2.msra.mxu0 0.0
    %176 = vmatprep.subr.mxu0 0.0
    %177 = vmatpush2.msra.mxu0 0.0
    %178 = vmatprep.subr.mxu0 0.0
    %179 = vmatpush2.msra.mxu0 0.0
    %180 = vmatprep.subr.mxu0 0.0
    %181 = vmatpush2.msra.mxu0 0.0
    %182 = vmatprep.subr.mxu0 0.0
    %183 = vmatpush2.msra.mxu0 0.0
    %184 = vmatprep.subr.mxu0 0.0
    %185 = vmatpush2.msra.mxu0 0.0
    %186 = vmatprep.mubr.f32.mxu0 0.0
    %187 = vmatmul.mubr.f32.gmra.mxu0 %v35
    %v188 = vpop.f32.mrf.mxu0
    %v189 = vadd.f32 %v120, %v188
    %v190 = vpop.f32.mrf.mxu0
    %191 = vmatprep.mubr.f32.mxu0 0.0
    %192 = vmatmul.mubr.f32.gmra.mxu0 %v36
    %v193 = vpop.f32.mrf.mxu0
    %v194 = vadd.f32 %v120, %v193
    %v195 = vpop.f32.mrf.mxu0
    %196 = vmatprep.mubr.f32.mxu0 0.0
    %197 = vmatmul.mubr.f32.gmra.mxu0 %v37
    %v198 = vpop.f32.mrf.mxu0
    %v199 = vadd.f32 %v120, %v198
    %v200 = vpop.f32.mrf.mxu0
    %201 = vmatprep.mubr.f32.mxu0 0.0
    %202 = vmatmul.mubr.f32.gmra.mxu0 %v38
    %v203 = vpop.f32.mrf.mxu0
    %v204 = vadd.f32 %v120, %v203
    %v205 = vpop.f32.mrf.mxu0
    %206 = vmatprep.mubr.f32.mxu0 0.0
    %207 = vmatmul.mubr.f32.gmra.mxu0 %v39
    %v208 = vpop.f32.mrf.mxu0
    %v209 = vadd.f32 %v120, %v208
    %v210 = vpop.f32.mrf.mxu0
    %211 = vmatprep.mubr.f32.mxu0 0.0
    %212 = vmatmul.mubr.f32.gmra.mxu0 %v40
    %v213 = vpop.f32.mrf.mxu0
    %v214 = vadd.f32 %v120, %v213
    %v215 = vpop.f32.mrf.mxu0
    %216 = vmatprep.mubr.f32.mxu0 0.0
    %217 = vmatmul.mubr.f32.gmra.mxu0 %v41
    %v218 = vpop.f32.mrf.mxu0
    %v219 = vadd.f32 %v120, %v218
    %v220 = vpop.f32.mrf.mxu0
    %221 = vmatprep.mubr.f32.mxu0 0.0
    %222 = vmatmul.mubr.f32.gmra.mxu0 %v42
    %v223 = vpop.f32.mrf.mxu0
    %v224 = vadd.f32 %v120, %v223
    %v225 = vpop.f32.mrf.mxu0
    %226 = vmatprep.mubr.f32.mxu0 0.0
    %227 = vmatmul.mubr.f32.gmra.mxu0 %v43
    %v228 = vpop.f32.mrf.mxu0
    %v229 = vadd.f32 %v120, %v228
    %v230 = vpop.f32.mrf.mxu0
    %231 = vmatprep.mubr.f32.mxu0 0.0
    %232 = vmatmul.mubr.f32.gmra.mxu0 %v44
    %v233 = vpop.f32.mrf.mxu0
    %v234 = vadd.f32 %v120, %v233
    %v235 = vpop.f32.mrf.mxu0
    %236 = vmatprep.mubr.f32.mxu0 0.0
    %237 = vmatmul.mubr.f32.gmra.mxu0 %v45
    %v238 = vpop.f32.mrf.mxu0
    %v239 = vadd.f32 %v120, %v238
    %v240 = vpop.f32.mrf.mxu0
    %241 = vmatprep.mubr.f32.mxu0 0.0
    %242 = vmatmul.mubr.f32.gmra.mxu0 %v46
    %v243 = vpop.f32.mrf.mxu0
    %v244 = vadd.f32 %v120, %v243
    %v245 = vpop.f32.mrf.mxu0
    %246 = vmatprep.mubr.f32.mxu0 0.0
    %247 = vmatmul.mubr.f32.gmra.mxu0 %v47
    %v248 = vpop.f32.mrf.mxu0
    %v249 = vadd.f32 %v120, %v248
    %v250 = vpop.f32.mrf.mxu0
    %251 = vmatprep.mubr.f32.mxu0 0.0
    %252 = vmatmul.mubr.f32.gmra.mxu0 %v48
    %v253 = vpop.f32.mrf.mxu0
    %v254 = vadd.f32 %v120, %v253
    %v255 = vpop.f32.mrf.mxu0
    %256 = vmatprep.mubr.f32.mxu0 0.0
    %257 = vmatmul.mubr.f32.gmra.mxu0 %v49
    %v258 = vpop.f32.mrf.mxu0
    %v259 = vadd.f32 %v120, %v258
    %v260 = vpop.f32.mrf.mxu0
    %261 = vmatprep.mubr.f32.mxu0 0.0
    %262 = vmatmul.mubr.f32.gmra.mxu0 %v50
    %v263 = vpop.f32.mrf.mxu0
    %v264 = vadd.f32 %v120, %v263
    %v265 = vpop.f32.mrf.mxu0
    %266 = vmatprep.mubr.f32.mxu0 0.0
    %267 = vmatmul.mubr.f32.gmra.mxu0 %v51
    %v268 = vpop.f32.mrf.mxu0
    %v269 = vadd.f32 %v120, %v268
    %v270 = vpop.f32.mrf.mxu0
    %271 = vmatprep.mubr.f32.mxu0 0.0
    %272 = vmatmul.mubr.f32.gmra.mxu0 %v52
    %v273 = vpop.f32.mrf.mxu0
    %v274 = vadd.f32 %v120, %v273
    %v275 = vpop.f32.mrf.mxu0
    %276 = vmatprep.mubr.f32.mxu0 0.0
    %277 = vmatmul.mubr.f32.gmra.mxu0 %v53
    %v278 = vpop.f32.mrf.mxu0
    %v279 = vadd.f32 %v120, %v278
    %v280 = vpop.f32.mrf.mxu0
    %281 = vmatprep.mubr.f32.mxu0 0.0
    %282 = vmatmul.mubr.f32.gmra.mxu0 %v54
    %v283 = vpop.f32.mrf.mxu0
    %v284 = vadd.f32 %v120, %v283
    %v285 = vpop.f32.mrf.mxu0
    %286 = vmatprep.mubr.f32.mxu0 0.0
    %287 = vmatmul.mubr.f32.gmra.mxu0 %v55
    %v288 = vpop.f32.mrf.mxu0
    %v289 = vadd.f32 %v120, %v288
    %v290 = vpop.f32.mrf.mxu0
    %291 = vmatprep.mubr.f32.mxu0 0.0
    %292 = vmatmul.mubr.f32.gmra.mxu0 %v56
    %v293 = vpop.f32.mrf.mxu0
    %v294 = vadd.f32 %v120, %v293
    %v295 = vpop.f32.mrf.mxu0
    %296 = vmatprep.mubr.f32.mxu0 0.0
    %297 = vmatmul.mubr.f32.gmra.mxu0 %v57
    %v298 = vpop.f32.mrf.mxu0
    %v299 = vadd.f32 %v120, %v298
    %v300 = vpop.f32.mrf.mxu0
    %301 = vmatprep.mubr.f32.mxu0 0.0
    %302 = vmatmul.mubr.f32.gmra.mxu0 %v58
    %v303 = vpop.f32.mrf.mxu0
    %v304 = vadd.f32 %v120, %v303
    %v305 = vpop.f32.mrf.mxu0
    %306 = vmatprep.mubr.f32.mxu0 0.0
    %307 = vmatmul.mubr.f32.gmra.mxu0 %v59
    %v308 = vpop.f32.mrf.mxu0
    %v309 = vadd.f32 %v120, %v308
    %v310 = vpop.f32.mrf.mxu0
    %311 = vmatprep.mubr.f32.mxu0 0.0
    %312 = vmatmul.mubr.f32.gmra.mxu0 %v60
    %v313 = vpop.f32.mrf.mxu0
    %v314 = vadd.f32 %v120, %v313
    %v315 = vpop.f32.mrf.mxu0
    %316 = vmatprep.mubr.f32.mxu0 0.0
    %317 = vmatmul.mubr.f32.gmra.mxu0 %v61
    %v318 = vpop.f32.mrf.mxu0
    %v319 = vadd.f32 %v120, %v318
    %v320 = vpop.f32.mrf.mxu0
    %321 = vmatprep.mubr.f32.mxu0 0.0
    %322 = vmatmul.mubr.f32.gmra.mxu0 %v62
    %v323 = vpop.f32.mrf.mxu0
    %v324 = vadd.f32 %v120, %v323
    %v325 = vpop.f32.mrf.mxu0
    %326 = vmatprep.mubr.f32.mxu0 0.0
    %327 = vmatmul.mubr.f32.gmra.mxu0 %v63
    %v328 = vpop.f32.mrf.mxu0
    %v329 = vadd.f32 %v120, %v328
    %v330 = vpop.f32.mrf.mxu0
    %331 = vmatprep.mubr.f32.mxu0 0.0
    %332 = vmatmul.mubr.f32.gmra.mxu0 %v64
    %v333 = vpop.f32.mrf.mxu0
    %v334 = vadd.f32 %v120, %v333
    %v335 = vpop.f32.mrf.mxu0
    %336 = vmatprep.mubr.f32.mxu0 0.0
    %337 = vmatmul.mubr.f32.gmra.mxu0 %v65
    %v338 = vpop.f32.mrf.mxu0
    %v339 = vadd.f32 %v120, %v338
    %v340 = vpop.f32.mrf.mxu0
    %341 = vmatprep.mubr.f32.mxu0 0.0
    %342 = vmatmul.mubr.f32.gmra.mxu0 %v66
    %v343 = vpop.f32.mrf.mxu0
    %v344 = vadd.f32 %v120, %v343
    %v345 = vpop.f32.mrf.mxu0
    %346 = vmatprep.mubr.f32.mxu0 0.0
    %347 = vmatmul.mubr.f32.gmra.mxu0 %v67
    %v348 = vpop.f32.mrf.mxu0
    %v349 = vadd.f32 %v120, %v348
    %v350 = vpop.f32.mrf.mxu0
    %351 = vmatprep.mubr.f32.mxu0 0.0
    %352 = vmatmul.mubr.f32.gmra.mxu0 %v68
    %v353 = vpop.f32.mrf.mxu0
    %v354 = vadd.f32 %v120, %v353
    %v355 = vpop.f32.mrf.mxu0
    %356 = vmatprep.mubr.f32.mxu0 0.0
    %357 = vmatmul.mubr.f32.gmra.mxu0 %v69
    %v358 = vpop.f32.mrf.mxu0
    %v359 = vadd.f32 %v120, %v358
    %v360 = vpop.f32.mrf.mxu0
    %361 = vmatprep.mubr.f32.mxu0 0.0
    %362 = vmatmul.mubr.f32.gmra.mxu0 %v70
    %v363 = vpop.f32.mrf.mxu0
    %v364 = vadd.f32 %v120, %v363
    %v365 = vpop.f32.mrf.mxu0
    %366 = vmatprep.mubr.f32.mxu0 0.0
    %367 = vmatmul.mubr.f32.gmra.mxu0 %v71
    %v368 = vpop.f32.mrf.mxu0
    %v369 = vadd.f32 %v120, %v368
    %v370 = vpop.f32.mrf.mxu0
    %371 = vmatprep.mubr.f32.mxu0 0.0
    %372 = vmatmul.mubr.f32.gmra.mxu0 %v72
    %v373 = vpop.f32.mrf.mxu0
    %v374 = vadd.f32 %v120, %v373
    %v375 = vpop.f32.mrf.mxu0
    %376 = vmatprep.mubr.f32.mxu0 0.0
    %377 = vmatmul.mubr.f32.gmra.mxu0 %v73
    %v378 = vpop.f32.mrf.mxu0
    %v379 = vadd.f32 %v120, %v378
    %v380 = vpop.f32.mrf.mxu0
    %381 = vmatprep.mubr.f32.mxu0 0.0
    %382 = vmatmul.mubr.f32.gmra.mxu0 %v74
    %v383 = vpop.f32.mrf.mxu0
    %v384 = vadd.f32 %v120, %v383
    %v385 = vpop.f32.mrf.mxu0
    %386 = vmatprep.mubr.f32.mxu0 0.0
    %387 = vmatmul.mubr.f32.gmra.mxu0 %v75
    %v388 = vpop.f32.mrf.mxu0
    %v389 = vadd.f32 %v120, %v388
    %v390 = vpop.f32.mrf.mxu0
    %391 = vmatprep.mubr.f32.mxu0 0.0
    %392 = vmatmul.mubr.f32.gmra.mxu0 %v76
    %v393 = vpop.f32.mrf.mxu0
    %v394 = vadd.f32 %v120, %v393
    %v395 = vpop.f32.mrf.mxu0
    %396 = vmatprep.mubr.f32.mxu0 0.0
    %397 = vmatmul.mubr.f32.gmra.mxu0 %v77
    %v398 = vpop.f32.mrf.mxu0
    %v399 = vadd.f32 %v120, %v398
    %v400 = vpop.f32.mrf.mxu0
    %401 = vmatprep.mubr.f32.mxu0 0.0
    %402 = vmatmul.mubr.f32.gmra.mxu0 %v78
    %v403 = vpop.f32.mrf.mxu0
    %v404 = vadd.f32 %v120, %v403
    %v405 = vpop.f32.mrf.mxu0
    %406 = vmatprep.mubr.f32.mxu0 0.0
    %407 = vmatmul.mubr.f32.gmra.mxu0 %v79
    %v408 = vpop.f32.mrf.mxu0
    %v409 = vadd.f32 %v120, %v408
    %v410 = vpop.f32.mrf.mxu0
    %411 = vmatprep.mubr.f32.mxu0 0.0
    %412 = vmatmul.mubr.f32.gmra.mxu0 %v80
    %v413 = vpop.f32.mrf.mxu0
    %v414 = vadd.f32 %v120, %v413
    %v415 = vpop.f32.mrf.mxu0
    %416 = vmatprep.mubr.f32.mxu0 0.0
    %417 = vmatmul.mubr.f32.gmra.mxu0 %v81
    %v418 = vpop.f32.mrf.mxu0
    %v419 = vadd.f32 %v120, %v418
    %v420 = vpop.f32.mrf.mxu0
    %421 = vmatprep.mubr.f32.mxu0 0.0
    %422 = vmatmul.mubr.f32.gmra.mxu0 %v82
    %v423 = vpop.f32.mrf.mxu0
    %v424 = vadd.f32 %v120, %v423
    %v425 = vpop.f32.mrf.mxu0
    %426 = vmatprep.mubr.f32.mxu0 0.0
    %427 = vmatmul.mubr.f32.gmra.mxu0 %v83
    %v428 = vpop.f32.mrf.mxu0
    %v429 = vadd.f32 %v120, %v428
    %v430 = vpop.f32.mrf.mxu0
    %431 = vmatprep.mubr.f32.mxu0 0.0
    %432 = vmatmul.mubr.f32.gmra.mxu0 %v84
    %v433 = vpop.f32.mrf.mxu0
    %v434 = vadd.f32 %v120, %v433
    %v435 = vpop.f32.mrf.mxu0
    %436 = vmatprep.mubr.f32.mxu0 0.0
    %437 = vmatmul.mubr.f32.gmra.mxu0 %v85
    %v438 = vpop.f32.mrf.mxu0
    %v439 = vadd.f32 %v120, %v438
    %v440 = vpop.f32.mrf.mxu0
    %441 = vmatprep.mubr.f32.mxu0 0.0
    %442 = vmatmul.mubr.f32.gmra.mxu0 %v86
    %v443 = vpop.f32.mrf.mxu0
    %v444 = vadd.f32 %v120, %v443
    %v445 = vpop.f32.mrf.mxu0
    %446 = vmatprep.mubr.f32.mxu0 0.0
    %447 = vmatmul.mubr.f32.gmra.mxu0 %v87
    %v448 = vpop.f32.mrf.mxu0
    %v449 = vadd.f32 %v120, %v448
    %v450 = vpop.f32.mrf.mxu0
    %451 = vmatprep.mubr.f32.mxu0 0.0
    %452 = vmatmul.mubr.f32.gmra.mxu0 %v88
    %v453 = vpop.f32.mrf.mxu0
    %v454 = vadd.f32 %v120, %v453
    %v455 = vpop.f32.mrf.mxu0
    %456 = vmatprep.mubr.f32.mxu0 0.0
    %457 = vmatmul.mubr.f32.gmra.mxu0 %v89
    %v458 = vpop.f32.mrf.mxu0
    %v459 = vadd.f32 %v120, %v458
    %v460 = vpop.f32.mrf.mxu0
    %461 = vmatprep.mubr.f32.mxu0 0.0
    %462 = vmatmul.mubr.f32.gmra.mxu0 %v90
    %v463 = vpop.f32.mrf.mxu0
    %v464 = vadd.f32 %v120, %v463
    %v465 = vpop.f32.mrf.mxu0
    %466 = vmatprep.mubr.f32.mxu0 0.0
    %467 = vmatmul.mubr.f32.gmra.mxu0 %v91
    %v468 = vpop.f32.mrf.mxu0
    %v469 = vadd.f32 %v120, %v468
    %v470 = vpop.f32.mrf.mxu0
    %471 = vmatprep.mubr.f32.mxu0 0.0
    %472 = vmatmul.mubr.f32.gmra.mxu0 %v92
    %v473 = vpop.f32.mrf.mxu0
    %v474 = vadd.f32 %v120, %v473
    %v475 = vpop.f32.mrf.mxu0
    %476 = vmatprep.mubr.f32.mxu0 0.0
    %477 = vmatmul.mubr.f32.gmra.mxu0 %v93
    %v478 = vpop.f32.mrf.mxu0
    %v479 = vadd.f32 %v120, %v478
    %v480 = vpop.f32.mrf.mxu0
    %481 = vmatprep.mubr.f32.mxu0 0.0
    %482 = vmatmul.mubr.f32.gmra.mxu0 %v94
    %v483 = vpop.f32.mrf.mxu0
    %v484 = vadd.f32 %v120, %v483
    %v485 = vpop.f32.mrf.mxu0
    %486 = vmatprep.mubr.f32.mxu0 0.0
    %487 = vmatmul.mubr.f32.gmra.mxu0 %v95
    %v488 = vpop.f32.mrf.mxu0
    %v489 = vadd.f32 %v120, %v488
    %v490 = vpop.f32.mrf.mxu0
    %491 = vmatprep.mubr.f32.mxu0 0.0
    %492 = vmatmul.mubr.f32.gmra.mxu0 %v96
    %v493 = vpop.f32.mrf.mxu0
    %v494 = vadd.f32 %v120, %v493
    %v495 = vpop.f32.mrf.mxu0
    %496 = vmatprep.mubr.f32.mxu0 0.0
    %497 = vmatmul.mubr.f32.gmra.mxu0 %v97
    %v498 = vpop.f32.mrf.mxu0
    %v499 = vadd.f32 %v120, %v498
    %v500 = vpop.f32.mrf.mxu0
    %501 = vmatprep.mubr.f32.mxu0 0.0
    %502 = vmatmul.mubr.f32.gmra.mxu0 %v98
    %v503 = vpop.f32.mrf.mxu0
    %v504 = vadd.f32 %v120, %v503
    %v505 = vpop.f32.mrf.mxu0
    %506 = vdwg.mxu0
    %v507 = vld [vmem:[%s2] sm:$0xff]
    %v508 = vld [vmem:[%s2 + $0x8] sm:$0xff]
    %v509 = vld [vmem:[%s2 + $0x10] sm:$0xff]
    %v510 = vld [vmem:[%s2 + $0x18] sm:$0xff]
    %v511 = vld [vmem:[%s2 + $0x20] sm:$0xff]
    %v512 = vld [vmem:[%s2 + $0x28] sm:$0xff]
    %v513 = vld [vmem:[%s2 + $0x30] sm:$0xff]
    %v514 = vld [vmem:[%s2 + $0x38] sm:$0xff]
    %v515 = vld [vmem:[%s2 + $0x40] sm:$0xff]
    %v516 = vld [vmem:[%s2 + $0x48] sm:$0xff]
    %v517 = vld [vmem:[%s2 + $0x50] sm:$0xff]
    %v518 = vld [vmem:[%s2 + $0x58] sm:$0xff]
    %v519 = vld [vmem:[%s2 + $0x60] sm:$0xff]
    %v520 = vld [vmem:[%s2 + $0x68] sm:$0xff]
    %v521 = vld [vmem:[%s2 + $0x70] sm:$0xff]
    %v522 = vld [vmem:[%s2 + $0x78] sm:$0xff]
    %v523 = vld [vmem:[%s2 + $0x80] sm:$0xff]
    %v524 = vld [vmem:[%s2 + $0x88] sm:$0xff]
    %v525 = vld [vmem:[%s2 + $0x90] sm:$0xff]
    %v526 = vld [vmem:[%s2 + $0x98] sm:$0xff]
    %v527 = vld [vmem:[%s2 + $0xa0] sm:$0xff]
    %v528 = vld [vmem:[%s2 + $0xa8] sm:$0xff]
    %v529 = vld [vmem:[%s2 + $0xb0] sm:$0xff]
    %v530 = vld [vmem:[%s2 + $0xb8] sm:$0xff]
    %v531 = vld [vmem:[%s2 + $0xc0] sm:$0xff]
    %v532 = vld [vmem:[%s2 + $0xc8] sm:$0xff]
    %v533 = vld [vmem:[%s2 + $0xd0] sm:$0xff]
    %v534 = vld [vmem:[%s2 + $0xd8] sm:$0xff]
    %v535 = vld [vmem:[%s2 + $0xe0] sm:$0xff]
    %v536 = vld [vmem:[%s2 + $0xe8] sm:$0xff]
    %v537 = vld [vmem:[%s2 + $0xf0] sm:$0xff]
    %v538 = vld [vmem:[%s2 + $0xf8] sm:$0xff]
    %v539 = vld [vmem:[%s2 + $0x100] sm:$0xff]
    %v540 = vld [vmem:[%s2 + $0x108] sm:$0xff]
    %v541 = vld [vmem:[%s2 + $0x110] sm:$0xff]
    %v542 = vld [vmem:[%s2 + $0x118] sm:$0xff]
    %v543 = vld [vmem:[%s2 + $0x120] sm:$0xff]
    %v544 = vld [vmem:[%s2 + $0x128] sm:$0xff]
    %v545 = vld [vmem:[%s2 + $0x130] sm:$0xff]
    %v546 = vld [vmem:[%s2 + $0x138] sm:$0xff]
    %v547 = vld [vmem:[%s2 + $0x140] sm:$0xff]
    %v548 = vld [vmem:[%s2 + $0x148] sm:$0xff]
    %v549 = vld [vmem:[%s2 + $0x150] sm:$0xff]
    %v550 = vld [vmem:[%s2 + $0x158] sm:$0xff]
    %v551 = vld [vmem:[%s2 + $0x160] sm:$0xff]
    %v552 = vld [vmem:[%s2 + $0x168] sm:$0xff]
    %v553 = vld [vmem:[%s2 + $0x170] sm:$0xff]
    %v554 = vld [vmem:[%s2 + $0x178] sm:$0xff]
    %v555 = vld [vmem:[%s2 + $0x180] sm:$0xff]
    %v556 = vld [vmem:[%s2 + $0x188] sm:$0xff]
    %v557 = vld [vmem:[%s2 + $0x190] sm:$0xff]
    %v558 = vld [vmem:[%s2 + $0x198] sm:$0xff]
    %v559 = vld [vmem:[%s2 + $0x1a0] sm:$0xff]
    %v560 = vld [vmem:[%s2 + $0x1a8] sm:$0xff]
    %v561 = vld [vmem:[%s2 + $0x1b0] sm:$0xff]
    %v562 = vld [vmem:[%s2 + $0x1b8] sm:$0xff]
    %v563 = vld [vmem:[%s2 + $0x1c0] sm:$0xff]
    %v564 = vld [vmem:[%s2 + $0x1c8] sm:$0xff]
    %v565 = vld [vmem:[%s2 + $0x1d0] sm:$0xff]
    %v566 = vld [vmem:[%s2 + $0x1d8] sm:$0xff]
    %v567 = vld [vmem:[%s2 + $0x1e0] sm:$0xff]
    %v568 = vld [vmem:[%s2 + $0x1e8] sm:$0xff]
    %v569 = vld [vmem:[%s2 + $0x1f0] sm:$0xff]
    %v570 = vld [vmem:[%s2 + $0x1f8] sm:$0xff]
    %v571 = vlaneseq
    %v572 = vand.u32 %v571, 127
    %573 = vset.pattern.permute.xlu0 0
    %574 = vperm.xlu0 %573, %v507
    %v575 = vpop.permute.xlu0 %574
    %576 = vset.pattern.permute.xlu0 0
    %577 = vperm.xlu0 %576, %v508
    %v578 = vpop.permute.xlu0 %577
    %579 = vset.pattern.permute.xlu0 0
    %580 = vperm.xlu0 %579, %v509
    %v581 = vpop.permute.xlu0 %580
    %582 = vset.pattern.permute.xlu0 0
    %583 = vperm.xlu0 %582, %v510
    %v584 = vpop.permute.xlu0 %583
    %585 = vset.pattern.permute.xlu0 0
    %586 = vperm.xlu0 %585, %v511
    %v587 = vpop.permute.xlu0 %586
    %588 = vset.pattern.permute.xlu0 0
    %589 = vperm.xlu0 %588, %v512
    %v590 = vpop.permute.xlu0 %589
    %591 = vset.pattern.permute.xlu0 0
    %592 = vperm.xlu0 %591, %v513
    %v593 = vpop.permute.xlu0 %592
    %594 = vset.pattern.permute.xlu0 0
    %595 = vperm.xlu0 %594, %v514
    %v596 = vpop.permute.xlu0 %595
    %597 = vset.pattern.permute.xlu0 0
    %598 = vperm.xlu0 %597, %v515
    %v599 = vpop.permute.xlu0 %598
    %600 = vset.pattern.permute.xlu0 0
    %601 = vperm.xlu0 %600, %v516
    %v602 = vpop.permute.xlu0 %601
    %603 = vset.pattern.permute.xlu0 0
    %604 = vperm.xlu0 %603, %v517
    %v605 = vpop.permute.xlu0 %604
    %606 = vset.pattern.permute.xlu0 0
    %607 = vperm.xlu0 %606, %v518
    %v608 = vpop.permute.xlu0 %607
    %609 = vset.pattern.permute.xlu0 0
    %610 = vperm.xlu0 %609, %v519
    %v611 = vpop.permute.xlu0 %610
    %612 = vset.pattern.permute.xlu0 0
    %613 = vperm.xlu0 %612, %v520
    %v614 = vpop.permute.xlu0 %613
    %615 = vset.pattern.permute.xlu0 0
    %616 = vperm.xlu0 %615, %v521
    %v617 = vpop.permute.xlu0 %616
    %618 = vset.pattern.permute.xlu0 0
    %619 = vperm.xlu0 %618, %v522
    %v620 = vpop.permute.xlu0 %619
    %621 = vset.pattern.permute.xlu0 0
    %622 = vperm.xlu0 %621, %v523
    %v623 = vpop.permute.xlu0 %622
    %624 = vset.pattern.permute.xlu0 0
    %625 = vperm.xlu0 %624, %v524
    %v626 = vpop.permute.xlu0 %625
    %627 = vset.pattern.permute.xlu0 0
    %628 = vperm.xlu0 %627, %v525
    %v629 = vpop.permute.xlu0 %628
    %630 = vset.pattern.permute.xlu0 0
    %631 = vperm.xlu0 %630, %v526
    %v632 = vpop.permute.xlu0 %631
    %633 = vset.pattern.permute.xlu0 0
    %634 = vperm.xlu0 %633, %v527
    %v635 = vpop.permute.xlu0 %634
    %636 = vset.pattern.permute.xlu0 0
    %637 = vperm.xlu0 %636, %v528
    %v638 = vpop.permute.xlu0 %637
    %639 = vset.pattern.permute.xlu0 0
    %640 = vperm.xlu0 %639, %v529
    %v641 = vpop.permute.xlu0 %640
    %642 = vset.pattern.permute.xlu0 0
    %643 = vperm.xlu0 %642, %v530
    %v644 = vpop.permute.xlu0 %643
    %645 = vset.pattern.permute.xlu0 0
    %646 = vperm.xlu0 %645, %v531
    %v647 = vpop.permute.xlu0 %646
    %648 = vset.pattern.permute.xlu0 0
    %649 = vperm.xlu0 %648, %v532
    %v650 = vpop.permute.xlu0 %649
    %651 = vset.pattern.permute.xlu0 0
    %652 = vperm.xlu0 %651, %v533
    %v653 = vpop.permute.xlu0 %652
    %654 = vset.pattern.permute.xlu0 0
    %655 = vperm.xlu0 %654, %v534
    %v656 = vpop.permute.xlu0 %655
    %657 = vset.pattern.permute.xlu0 0
    %658 = vperm.xlu0 %657, %v535
    %v659 = vpop.permute.xlu0 %658
    %660 = vset.pattern.permute.xlu0 0
    %661 = vperm.xlu0 %660, %v536
    %v662 = vpop.permute.xlu0 %661
    %663 = vset.pattern.permute.xlu0 0
    %664 = vperm.xlu0 %663, %v537
    %v665 = vpop.permute.xlu0 %664
    %666 = vset.pattern.permute.xlu0 0
    %667 = vperm.xlu0 %666, %v538
    %v668 = vpop.permute.xlu0 %667
    %669 = vset.pattern.permute.xlu0 0
    %670 = vperm.xlu0 %669, %v539
    %v671 = vpop.permute.xlu0 %670
    %672 = vset.pattern.permute.xlu0 0
    %673 = vperm.xlu0 %672, %v540
    %v674 = vpop.permute.xlu0 %673
    %675 = vset.pattern.permute.xlu0 0
    %676 = vperm.xlu0 %675, %v541
    %v677 = vpop.permute.xlu0 %676
    %678 = vset.pattern.permute.xlu0 0
    %679 = vperm.xlu0 %678, %v542
    %v680 = vpop.permute.xlu0 %679
    %681 = vset.pattern.permute.xlu0 0
    %682 = vperm.xlu0 %681, %v543
    %v683 = vpop.permute.xlu0 %682
    %684 = vset.pattern.permute.xlu0 0
    %685 = vperm.xlu0 %684, %v544
    %v686 = vpop.permute.xlu0 %685
    %687 = vset.pattern.permute.xlu0 0
    %688 = vperm.xlu0 %687, %v545
    %v689 = vpop.permute.xlu0 %688
    %690 = vset.pattern.permute.xlu0 0
    %691 = vperm.xlu0 %690, %v546
    %v692 = vpop.permute.xlu0 %691
    %693 = vset.pattern.permute.xlu0 0
    %694 = vperm.xlu0 %693, %v547
    %v695 = vpop.permute.xlu0 %694
    %696 = vset.pattern.permute.xlu0 0
    %697 = vperm.xlu0 %696, %v548
    %v698 = vpop.permute.xlu0 %697
    %699 = vset.pattern.permute.xlu0 0
    %700 = vperm.xlu0 %699, %v549
    %v701 = vpop.permute.xlu0 %700
    %702 = vset.pattern.permute.xlu0 0
    %703 = vperm.xlu0 %702, %v550
    %v704 = vpop.permute.xlu0 %703
    %705 = vset.pattern.permute.xlu0 0
    %706 = vperm.xlu0 %705, %v551
    %v707 = vpop.permute.xlu0 %706
    %708 = vset.pattern.permute.xlu0 0
    %709 = vperm.xlu0 %708, %v552
    %v710 = vpop.permute.xlu0 %709
    %711 = vset.pattern.permute.xlu0 0
    %712 = vperm.xlu0 %711, %v553
    %v713 = vpop.permute.xlu0 %712
    %714 = vset.pattern.permute.xlu0 0
    %715 = vperm.xlu0 %714, %v554
    %v716 = vpop.permute.xlu0 %715
    %717 = vset.pattern.permute.xlu0 0
    %718 = vperm.xlu0 %717, %v555
    %v719 = vpop.permute.xlu0 %718
    %720 = vset.pattern.permute.xlu0 0
    %721 = vperm.xlu0 %720, %v556
    %v722 = vpop.permute.xlu0 %721
    %723 = vset.pattern.permute.xlu0 0
    %724 = vperm.xlu0 %723, %v557
    %v725 = vpop.permute.xlu0 %724
    %726 = vset.pattern.permute.xlu0 0
    %727 = vperm.xlu0 %726, %v558
    %v728 = vpop.permute.xlu0 %727
    %729 = vset.pattern.permute.xlu0 0
    %730 = vperm.xlu0 %729, %v559
    %v731 = vpop.permute.xlu0 %730
    %732 = vset.pattern.permute.xlu0 0
    %733 = vperm.xlu0 %732, %v560
    %v734 = vpop.permute.xlu0 %733
    %735 = vset.pattern.permute.xlu0 0
    %736 = vperm.xlu0 %735, %v561
    %v737 = vpop.permute.xlu0 %736
    %738 = vset.pattern.permute.xlu0 0
    %739 = vperm.xlu0 %738, %v562
    %v740 = vpop.permute.xlu0 %739
    %741 = vset.pattern.permute.xlu0 0
    %742 = vperm.xlu0 %741, %v563
    %v743 = vpop.permute.xlu0 %742
    %744 = vset.pattern.permute.xlu0 0
    %745 = vperm.xlu0 %744, %v564
    %v746 = vpop.permute.xlu0 %745
    %747 = vset.pattern.permute.xlu0 0
    %748 = vperm.xlu0 %747, %v565
    %v749 = vpop.permute.xlu0 %748
    %750 = vset.pattern.permute.xlu0 0
    %751 = vperm.xlu0 %750, %v566
    %v752 = vpop.permute.xlu0 %751
    %753 = vset.pattern.permute.xlu0 0
    %754 = vperm.xlu0 %753, %v567
    %v755 = vpop.permute.xlu0 %754
    %756 = vset.pattern.permute.xlu0 0
    %757 = vperm.xlu0 %756, %v568
    %v758 = vpop.permute.xlu0 %757
    %759 = vset.pattern.permute.xlu0 0
    %760 = vperm.xlu0 %759, %v569
    %v761 = vpop.permute.xlu0 %760
    %762 = vset.pattern.permute.xlu0 0
    %763 = vperm.xlu0 %762, %v570
    %v764 = vpop.permute.xlu0 %763
    %vm765 = vcmp.eq.s32.totalorder %v572, %v575
    %vm766 = vcmp.eq.s32.totalorder %v572, %v578
    %vm767 = vcmp.eq.s32.totalorder %v572, %v581
    %vm768 = vcmp.eq.s32.totalorder %v572, %v584
    %vm769 = vcmp.eq.s32.totalorder %v572, %v587
    %vm770 = vcmp.eq.s32.totalorder %v572, %v590
    %vm771 = vcmp.eq.s32.totalorder %v572, %v593
    %vm772 = vcmp.eq.s32.totalorder %v572, %v596
    %vm773 = vcmp.eq.s32.totalorder %v572, %v599
    %vm774 = vcmp.eq.s32.totalorder %v572, %v602
    %vm775 = vcmp.eq.s32.totalorder %v572, %v605
    %vm776 = vcmp.eq.s32.totalorder %v572, %v608
    %vm777 = vcmp.eq.s32.totalorder %v572, %v611
    %vm778 = vcmp.eq.s32.totalorder %v572, %v614
    %vm779 = vcmp.eq.s32.totalorder %v572, %v617
    %vm780 = vcmp.eq.s32.totalorder %v572, %v620
    %vm781 = vcmp.eq.s32.totalorder %v572, %v623
    %vm782 = vcmp.eq.s32.totalorder %v572, %v626
    %vm783 = vcmp.eq.s32.totalorder %v572, %v629
    %vm784 = vcmp.eq.s32.totalorder %v572, %v632
    %vm785 = vcmp.eq.s32.totalorder %v572, %v635
    %vm786 = vcmp.eq.s32.totalorder %v572, %v638
    %vm787 = vcmp.eq.s32.totalorder %v572, %v641
    %vm788 = vcmp.eq.s32.totalorder %v572, %v644
    %vm789 = vcmp.eq.s32.totalorder %v572, %v647
    %vm790 = vcmp.eq.s32.totalorder %v572, %v650
    %vm791 = vcmp.eq.s32.totalorder %v572, %v653
    %vm792 = vcmp.eq.s32.totalorder %v572, %v656
    %vm793 = vcmp.eq.s32.totalorder %v572, %v659
    %vm794 = vcmp.eq.s32.totalorder %v572, %v662
    %vm795 = vcmp.eq.s32.totalorder %v572, %v665
    %vm796 = vcmp.eq.s32.totalorder %v572, %v668
    %vm797 = vcmp.eq.s32.totalorder %v572, %v671
    %vm798 = vcmp.eq.s32.totalorder %v572, %v674
    %vm799 = vcmp.eq.s32.totalorder %v572, %v677
    %vm800 = vcmp.eq.s32.totalorder %v572, %v680
    %vm801 = vcmp.eq.s32.totalorder %v572, %v683
    %vm802 = vcmp.eq.s32.totalorder %v572, %v686
    %vm803 = vcmp.eq.s32.totalorder %v572, %v689
    %vm804 = vcmp.eq.s32.totalorder %v572, %v692
    %vm805 = vcmp.eq.s32.totalorder %v572, %v695
    %vm806 = vcmp.eq.s32.totalorder %v572, %v698
    %vm807 = vcmp.eq.s32.totalorder %v572, %v701
    %vm808 = vcmp.eq.s32.totalorder %v572, %v704
    %vm809 = vcmp.eq.s32.totalorder %v572, %v707
    %vm810 = vcmp.eq.s32.totalorder %v572, %v710
    %vm811 = vcmp.eq.s32.totalorder %v572, %v713
    %vm812 = vcmp.eq.s32.totalorder %v572, %v716
    %vm813 = vcmp.eq.s32.totalorder %v572, %v719
    %vm814 = vcmp.eq.s32.totalorder %v572, %v722
    %vm815 = vcmp.eq.s32.totalorder %v572, %v725
    %vm816 = vcmp.eq.s32.totalorder %v572, %v728
    %vm817 = vcmp.eq.s32.totalorder %v572, %v731
    %vm818 = vcmp.eq.s32.totalorder %v572, %v734
    %vm819 = vcmp.eq.s32.totalorder %v572, %v737
    %vm820 = vcmp.eq.s32.totalorder %v572, %v740
    %vm821 = vcmp.eq.s32.totalorder %v572, %v743
    %vm822 = vcmp.eq.s32.totalorder %v572, %v746
    %vm823 = vcmp.eq.s32.totalorder %v572, %v749
    %vm824 = vcmp.eq.s32.totalorder %v572, %v752
    %vm825 = vcmp.eq.s32.totalorder %v572, %v755
    %vm826 = vcmp.eq.s32.totalorder %v572, %v758
    %vm827 = vcmp.eq.s32.totalorder %v572, %v761
    %vm828 = vcmp.eq.s32.totalorder %v572, %v764
    %v829 = vsel %vm765, 1, 0
    %v830 = vsel %vm766, 1, 0
    %v831 = vsel %vm767, 1, 0
    %v832 = vsel %vm768, 1, 0
    %v833 = vsel %vm769, 1, 0
    %v834 = vsel %vm770, 1, 0
    %v835 = vsel %vm771, 1, 0
    %v836 = vsel %vm772, 1, 0
    %v837 = vsel %vm773, 1, 0
    %v838 = vsel %vm774, 1, 0
    %v839 = vsel %vm775, 1, 0
    %v840 = vsel %vm776, 1, 0
    %v841 = vsel %vm777, 1, 0
    %v842 = vsel %vm778, 1, 0
    %v843 = vsel %vm779, 1, 0
    %v844 = vsel %vm780, 1, 0
    %v845 = vsel %vm781, 1, 0
    %v846 = vsel %vm782, 1, 0
    %v847 = vsel %vm783, 1, 0
    %v848 = vsel %vm784, 1, 0
    %v849 = vsel %vm785, 1, 0
    %v850 = vsel %vm786, 1, 0
    %v851 = vsel %vm787, 1, 0
    %v852 = vsel %vm788, 1, 0
    %v853 = vsel %vm789, 1, 0
    %v854 = vsel %vm790, 1, 0
    %v855 = vsel %vm791, 1, 0
    %v856 = vsel %vm792, 1, 0
    %v857 = vsel %vm793, 1, 0
    %v858 = vsel %vm794, 1, 0
    %v859 = vsel %vm795, 1, 0
    %v860 = vsel %vm796, 1, 0
    %v861 = vsel %vm797, 1, 0
    %v862 = vsel %vm798, 1, 0
    %v863 = vsel %vm799, 1, 0
    %v864 = vsel %vm800, 1, 0
    %v865 = vsel %vm801, 1, 0
    %v866 = vsel %vm802, 1, 0
    %v867 = vsel %vm803, 1, 0
    %v868 = vsel %vm804, 1, 0
    %v869 = vsel %vm805, 1, 0
    %v870 = vsel %vm806, 1, 0
    %v871 = vsel %vm807, 1, 0
    %v872 = vsel %vm808, 1, 0
    %v873 = vsel %vm809, 1, 0
    %v874 = vsel %vm810, 1, 0
    %v875 = vsel %vm811, 1, 0
    %v876 = vsel %vm812, 1, 0
    %v877 = vsel %vm813, 1, 0
    %v878 = vsel %vm814, 1, 0
    %v879 = vsel %vm815, 1, 0
    %v880 = vsel %vm816, 1, 0
    %v881 = vsel %vm817, 1, 0
    %v882 = vsel %vm818, 1, 0
    %v883 = vsel %vm819, 1, 0
    %v884 = vsel %vm820, 1, 0
    %v885 = vsel %vm821, 1, 0
    %v886 = vsel %vm822, 1, 0
    %v887 = vsel %vm823, 1, 0
    %v888 = vsel %vm824, 1, 0
    %v889 = vsel %vm825, 1, 0
    %v890 = vsel %vm826, 1, 0
    %v891 = vsel %vm827, 1, 0
    %v892 = vsel %vm828, 1, 0
    %v893 = vcvt.s32.f32 %v829
    %v894 = vcvt.s32.f32 %v830
    %v895 = vcvt.s32.f32 %v831
    %v896 = vcvt.s32.f32 %v832
    %v897 = vcvt.s32.f32 %v833
    %v898 = vcvt.s32.f32 %v834
    %v899 = vcvt.s32.f32 %v835
    %v900 = vcvt.s32.f32 %v836
    %v901 = vcvt.s32.f32 %v837
    %v902 = vcvt.s32.f32 %v838
    %v903 = vcvt.s32.f32 %v839
    %v904 = vcvt.s32.f32 %v840
    %v905 = vcvt.s32.f32 %v841
    %v906 = vcvt.s32.f32 %v842
    %v907 = vcvt.s32.f32 %v843
    %v908 = vcvt.s32.f32 %v844
    %v909 = vcvt.s32.f32 %v845
    %v910 = vcvt.s32.f32 %v846
    %v911 = vcvt.s32.f32 %v847
    %v912 = vcvt.s32.f32 %v848
    %v913 = vcvt.s32.f32 %v849
    %v914 = vcvt.s32.f32 %v850
    %v915 = vcvt.s32.f32 %v851
    %v916 = vcvt.s32.f32 %v852
    %v917 = vcvt.s32.f32 %v853
    %v918 = vcvt.s32.f32 %v854
    %v919 = vcvt.s32.f32 %v855
    %v920 = vcvt.s32.f32 %v856
    %v921 = vcvt.s32.f32 %v857
    %v922 = vcvt.s32.f32 %v858
    %v923 = vcvt.s32.f32 %v859
    %v924 = vcvt.s32.f32 %v860
    %v925 = vcvt.s32.f32 %v861
    %v926 = vcvt.s32.f32 %v862
    %v927 = vcvt.s32.f32 %v863
    %v928 = vcvt.s32.f32 %v864
    %v929 = vcvt.s32.f32 %v865
    %v930 = vcvt.s32.f32 %v866
    %v931 = vcvt.s32.f32 %v867
    %v932 = vcvt.s32.f32 %v868
    %v933 = vcvt.s32.f32 %v869
    %v934 = vcvt.s32.f32 %v870
    %v935 = vcvt.s32.f32 %v871
    %v936 = vcvt.s32.f32 %v872
    %v937 = vcvt.s32.f32 %v873
    %v938 = vcvt.s32.f32 %v874
    %v939 = vcvt.s32.f32 %v875
    %v940 = vcvt.s32.f32 %v876
    %v941 = vcvt.s32.f32 %v877
    %v942 = vcvt.s32.f32 %v878
    %v943 = vcvt.s32.f32 %v879
    %v944 = vcvt.s32.f32 %v880
    %v945 = vcvt.s32.f32 %v881
    %v946 = vcvt.s32.f32 %v882
    %v947 = vcvt.s32.f32 %v883
    %v948 = vcvt.s32.f32 %v884
    %v949 = vcvt.s32.f32 %v885
    %v950 = vcvt.s32.f32 %v886
    %v951 = vcvt.s32.f32 %v887
    %v952 = vcvt.s32.f32 %v888
    %v953 = vcvt.s32.f32 %v889
    %v954 = vcvt.s32.f32 %v890
    %v955 = vcvt.s32.f32 %v891
    %v956 = vcvt.s32.f32 %v892
    %v957 = vpack.c.bf16 %v894, %v893
    %v958 = vpack.c.bf16 %v896, %v895
    %v959 = vpack.c.bf16 %v898, %v897
    %v960 = vpack.c.bf16 %v900, %v899
    %v961 = vpack.c.bf16 %v902, %v901
    %v962 = vpack.c.bf16 %v904, %v903
    %v963 = vpack.c.bf16 %v906, %v905
    %v964 = vpack.c.bf16 %v908, %v907
    %v965 = vpack.c.bf16 %v910, %v909
    %v966 = vpack.c.bf16 %v912, %v911
    %v967 = vpack.c.bf16 %v914, %v913
    %v968 = vpack.c.bf16 %v916, %v915
    %v969 = vpack.c.bf16 %v918, %v917
    %v970 = vpack.c.bf16 %v920, %v919
    %v971 = vpack.c.bf16 %v922, %v921
    %v972 = vpack.c.bf16 %v924, %v923
    %v973 = vpack.c.bf16 %v926, %v925
    %v974 = vpack.c.bf16 %v928, %v927
    %v975 = vpack.c.bf16 %v930, %v929
    %v976 = vpack.c.bf16 %v932, %v931
    %v977 = vpack.c.bf16 %v934, %v933
    %v978 = vpack.c.bf16 %v936, %v935
    %v979 = vpack.c.bf16 %v938, %v937
    %v980 = vpack.c.bf16 %v940, %v939
    %v981 = vpack.c.bf16 %v942, %v941
    %v982 = vpack.c.bf16 %v944, %v943
    %v983 = vpack.c.bf16 %v946, %v945
    %v984 = vpack.c.bf16 %v948, %v947
    %v985 = vpack.c.bf16 %v950, %v949
    %v986 = vpack.c.bf16 %v952, %v951
    %v987 = vpack.c.bf16 %v954, %v953
    %v988 = vpack.c.bf16 %v956, %v955
    %v989 = vld [vmem:[%s0] sm:$0xf]
    %v990 = vld [vmem:[%s0 + $0x4] sm:$0xf]
    %v991 = vld [vmem:[%s0 + $0x8] sm:$0xf]
    %v992 = vld [vmem:[%s0 + $0xc] sm:$0xf]
    %v993 = vld [vmem:[%s0 + $0x10] sm:$0xf]
    %v994 = vld [vmem:[%s0 + $0x14] sm:$0xf]
    %v995 = vld [vmem:[%s0 + $0x18] sm:$0xf]
    %v996 = vld [vmem:[%s0 + $0x1c] sm:$0xf]
    %v997 = vld [vmem:[%s0 + $0x20] sm:$0xf]
    %v998 = vld [vmem:[%s0 + $0x24] sm:$0xf]
    %v999 = vld [vmem:[%s0 + $0x28] sm:$0xf]
    %v1000 = vld [vmem:[%s0 + $0x2c] sm:$0xf]
    %v1001 = vld [vmem:[%s0 + $0x30] sm:$0xf]
    %v1002 = vld [vmem:[%s0 + $0x34] sm:$0xf]
    %v1003 = vld [vmem:[%s0 + $0x38] sm:$0xf]
    %v1004 = vld [vmem:[%s0 + $0x3c] sm:$0xf]
    %v1021 = vunpack.c.l.b16 %v989
    %v1022 = vunpack.c.l.b16 %v990
    %v1023 = vunpack.c.l.b16 %v991
    %v1024 = vunpack.c.l.b16 %v992
    %v1025 = vunpack.c.l.b16 %v993
    %v1026 = vunpack.c.l.b16 %v994
    %v1027 = vunpack.c.l.b16 %v995
    %v1028 = vunpack.c.l.b16 %v996
    %v1029 = vunpack.c.l.b16 %v997
    %v1030 = vunpack.c.l.b16 %v998
    %v1031 = vunpack.c.l.b16 %v999
    %v1032 = vunpack.c.l.b16 %v1000
    %v1033 = vunpack.c.l.b16 %v1001
    %v1034 = vunpack.c.l.b16 %v1002
    %v1035 = vunpack.c.l.b16 %v1003
    %v1036 = vunpack.c.l.b16 %v1004
    %v1037 = vpack.c.b16 %v1022, %v1021
    %v1038 = vpack.c.b16 %v1024, %v1023
    %v1039 = vpack.c.b16 %v1026, %v1025
    %v1040 = vpack.c.b16 %v1028, %v1027
    %v1041 = vpack.c.b16 %v1030, %v1029
    %v1042 = vpack.c.b16 %v1032, %v1031
    %v1043 = vpack.c.b16 %v1034, %v1033
    %v1044 = vpack.c.b16 %v1036, %v1035
    %1053 = vmatprep.subr.bf16.mxu0 0
    %1054 = vmatpush1.bf16.msra.mxu0 %v1044
    %1055 = vmatprep.subr.bf16.mxu0 0
    %1056 = vmatpush1.bf16.msra.mxu0 %v1043
    %1057 = vmatprep.subr.bf16.mxu0 0
    %1058 = vmatpush1.bf16.msra.mxu0 %v1042
    %1059 = vmatprep.subr.bf16.mxu0 0
    %1060 = vmatpush1.bf16.msra.mxu0 %v1041
    %1061 = vmatprep.subr.bf16.mxu0 0
    %1062 = vmatpush1.bf16.msra.mxu0 %v1040
    %1063 = vmatprep.subr.bf16.mxu0 0
    %1064 = vmatpush1.bf16.msra.mxu0 %v1039
    %1065 = vmatprep.subr.bf16.mxu0 0
    %1066 = vmatpush1.bf16.msra.mxu0 %v1038
    %1067 = vmatprep.subr.bf16.mxu0 0
    %1068 = vmatpush1.bf16.msra.mxu0 %v1037
    %1069 = vmatprep.subr.bf16.mxu0 0
    %1070 = vmatpush2.bf16.msra.mxu0 0
    %1071 = vmatprep.subr.bf16.mxu0 0
    %1072 = vmatpush2.bf16.msra.mxu0 0
    %1073 = vmatprep.subr.bf16.mxu0 0
    %1074 = vmatpush2.bf16.msra.mxu0 0
    %1075 = vmatprep.subr.bf16.mxu0 0
    %1076 = vmatpush2.bf16.msra.mxu0 0
    %1077 = vmatprep.subr.bf16.mxu0 0
    %1078 = vmatpush2.bf16.msra.mxu0 0
    %1079 = vmatprep.subr.bf16.mxu0 0
    %1080 = vmatpush2.bf16.msra.mxu0 0
    %1081 = vmatprep.subr.bf16.mxu0 0
    %1082 = vmatpush2.bf16.msra.mxu0 0
    %1083 = vmatprep.subr.bf16.mxu0 0
    %1084 = vmatpush2.bf16.msra.mxu0 0
    %1085 = vmatprep.mubr.bf16.mxu0 0
    %1086 = vmatmul.mubr.bf16.gmra.mxu0 %v957
    %v1087 = vpop.f32.mrf.mxu0
    %v1088 = vadd.f32 %v189, %v1087
    %v1089 = vpop.f32.mrf.mxu0
    %v1090 = vpop.f32.mrf.mxu0
    %v1091 = vadd.f32 %v194, %v1090
    %v1092 = vpop.f32.mrf.mxu0
    %1093 = vmatprep.mubr.bf16.mxu0 0
    %1094 = vmatmul.mubr.bf16.gmra.mxu0 %v958
    %v1095 = vpop.f32.mrf.mxu0
    %v1096 = vadd.f32 %v199, %v1095
    %v1097 = vpop.f32.mrf.mxu0
    %v1098 = vpop.f32.mrf.mxu0
    %v1099 = vadd.f32 %v204, %v1098
    %v1100 = vpop.f32.mrf.mxu0
    %1101 = vmatprep.mubr.bf16.mxu0 0
    %1102 = vmatmul.mubr.bf16.gmra.mxu0 %v959
    %v1103 = vpop.f32.mrf.mxu0
    %v1104 = vadd.f32 %v209, %v1103
    %v1105 = vpop.f32.mrf.mxu0
    %v1106 = vpop.f32.mrf.mxu0
    %v1107 = vadd.f32 %v214, %v1106
    %v1108 = vpop.f32.mrf.mxu0
    %1109 = vmatprep.mubr.bf16.mxu0 0
    %1110 = vmatmul.mubr.bf16.gmra.mxu0 %v960
    %v1111 = vpop.f32.mrf.mxu0
    %v1112 = vadd.f32 %v219, %v1111
    %v1113 = vpop.f32.mrf.mxu0
    %v1114 = vpop.f32.mrf.mxu0
    %v1115 = vadd.f32 %v224, %v1114
    %v1116 = vpop.f32.mrf.mxu0
    %1117 = vmatprep.mubr.bf16.mxu0 0
    %1118 = vmatmul.mubr.bf16.gmra.mxu0 %v961
    %v1119 = vpop.f32.mrf.mxu0
    %v1120 = vadd.f32 %v229, %v1119
    %v1121 = vpop.f32.mrf.mxu0
    %v1122 = vpop.f32.mrf.mxu0
    %v1123 = vadd.f32 %v234, %v1122
    %v1124 = vpop.f32.mrf.mxu0
    %1125 = vmatprep.mubr.bf16.mxu0 0
    %1126 = vmatmul.mubr.bf16.gmra.mxu0 %v962
    %v1127 = vpop.f32.mrf.mxu0
    %v1128 = vadd.f32 %v239, %v1127
    %v1129 = vpop.f32.mrf.mxu0
    %v1130 = vpop.f32.mrf.mxu0
    %v1131 = vadd.f32 %v244, %v1130
    %v1132 = vpop.f32.mrf.mxu0
    %1133 = vmatprep.mubr.bf16.mxu0 0
    %1134 = vmatmul.mubr.bf16.gmra.mxu0 %v963
    %v1135 = vpop.f32.mrf.mxu0
    %v1136 = vadd.f32 %v249, %v1135
    %v1137 = vpop.f32.mrf.mxu0
    %v1138 = vpop.f32.mrf.mxu0
    %v1139 = vadd.f32 %v254, %v1138
    %v1140 = vpop.f32.mrf.mxu0
    %1141 = vmatprep.mubr.bf16.mxu0 0
    %1142 = vmatmul.mubr.bf16.gmra.mxu0 %v964
    %v1143 = vpop.f32.mrf.mxu0
    %v1144 = vadd.f32 %v259, %v1143
    %v1145 = vpop.f32.mrf.mxu0
    %v1146 = vpop.f32.mrf.mxu0
    %v1147 = vadd.f32 %v264, %v1146
    %v1148 = vpop.f32.mrf.mxu0
    %1149 = vmatprep.mubr.bf16.mxu0 0
    %1150 = vmatmul.mubr.bf16.gmra.mxu0 %v965
    %v1151 = vpop.f32.mrf.mxu0
    %v1152 = vadd.f32 %v269, %v1151
    %v1153 = vpop.f32.mrf.mxu0
    %v1154 = vpop.f32.mrf.mxu0
    %v1155 = vadd.f32 %v274, %v1154
    %v1156 = vpop.f32.mrf.mxu0
    %1157 = vmatprep.mubr.bf16.mxu0 0
    %1158 = vmatmul.mubr.bf16.gmra.mxu0 %v966
    %v1159 = vpop.f32.mrf.mxu0
    %v1160 = vadd.f32 %v279, %v1159
    %v1161 = vpop.f32.mrf.mxu0
    %v1162 = vpop.f32.mrf.mxu0
    %v1163 = vadd.f32 %v284, %v1162
    %v1164 = vpop.f32.mrf.mxu0
    %1165 = vmatprep.mubr.bf16.mxu0 0
    %1166 = vmatmul.mubr.bf16.gmra.mxu0 %v967
    %v1167 = vpop.f32.mrf.mxu0
    %v1168 = vadd.f32 %v289, %v1167
    %v1169 = vpop.f32.mrf.mxu0
    %v1170 = vpop.f32.mrf.mxu0
    %v1171 = vadd.f32 %v294, %v1170
    %v1172 = vpop.f32.mrf.mxu0
    %1173 = vmatprep.mubr.bf16.mxu0 0
    %1174 = vmatmul.mubr.bf16.gmra.mxu0 %v968
    %v1175 = vpop.f32.mrf.mxu0
    %v1176 = vadd.f32 %v299, %v1175
    %v1177 = vpop.f32.mrf.mxu0
    %v1178 = vpop.f32.mrf.mxu0
    %v1179 = vadd.f32 %v304, %v1178
    %v1180 = vpop.f32.mrf.mxu0
    %1181 = vmatprep.mubr.bf16.mxu0 0
    %1182 = vmatmul.mubr.bf16.gmra.mxu0 %v969
    %v1183 = vpop.f32.mrf.mxu0
    %v1184 = vadd.f32 %v309, %v1183
    %v1185 = vpop.f32.mrf.mxu0
    %v1186 = vpop.f32.mrf.mxu0
    %v1187 = vadd.f32 %v314, %v1186
    %v1188 = vpop.f32.mrf.mxu0
    %1189 = vmatprep.mubr.bf16.mxu0 0
    %1190 = vmatmul.mubr.bf16.gmra.mxu0 %v970
    %v1191 = vpop.f32.mrf.mxu0
    %v1192 = vadd.f32 %v319, %v1191
    %v1193 = vpop.f32.mrf.mxu0
    %v1194 = vpop.f32.mrf.mxu0
    %v1195 = vadd.f32 %v324, %v1194
    %v1196 = vpop.f32.mrf.mxu0
    %1197 = vmatprep.mubr.bf16.mxu0 0
    %1198 = vmatmul.mubr.bf16.gmra.mxu0 %v971
    %v1199 = vpop.f32.mrf.mxu0
    %v1200 = vadd.f32 %v329, %v1199
    %v1201 = vpop.f32.mrf.mxu0
    %v1202 = vpop.f32.mrf.mxu0
    %v1203 = vadd.f32 %v334, %v1202
    %v1204 = vpop.f32.mrf.mxu0
    %1205 = vmatprep.mubr.bf16.mxu0 0
    %1206 = vmatmul.mubr.bf16.gmra.mxu0 %v972
    %v1207 = vpop.f32.mrf.mxu0
    %v1208 = vadd.f32 %v339, %v1207
    %v1209 = vpop.f32.mrf.mxu0
    %v1210 = vpop.f32.mrf.mxu0
    %v1211 = vadd.f32 %v344, %v1210
    %v1212 = vpop.f32.mrf.mxu0
    %1213 = vmatprep.mubr.bf16.mxu0 0
    %1214 = vmatmul.mubr.bf16.gmra.mxu0 %v973
    %v1215 = vpop.f32.mrf.mxu0
    %v1216 = vadd.f32 %v349, %v1215
    %v1217 = vpop.f32.mrf.mxu0
    %v1218 = vpop.f32.mrf.mxu0
    %v1219 = vadd.f32 %v354, %v1218
    %v1220 = vpop.f32.mrf.mxu0
    %1221 = vmatprep.mubr.bf16.mxu0 0
    %1222 = vmatmul.mubr.bf16.gmra.mxu0 %v974
    %v1223 = vpop.f32.mrf.mxu0
    %v1224 = vadd.f32 %v359, %v1223
    %v1225 = vpop.f32.mrf.mxu0
    %v1226 = vpop.f32.mrf.mxu0
    %v1227 = vadd.f32 %v364, %v1226
    %v1228 = vpop.f32.mrf.mxu0
    %1229 = vmatprep.mubr.bf16.mxu0 0
    %1230 = vmatmul.mubr.bf16.gmra.mxu0 %v975
    %v1231 = vpop.f32.mrf.mxu0
    %v1232 = vadd.f32 %v369, %v1231
    %v1233 = vpop.f32.mrf.mxu0
    %v1234 = vpop.f32.mrf.mxu0
    %v1235 = vadd.f32 %v374, %v1234
    %v1236 = vpop.f32.mrf.mxu0
    %1237 = vmatprep.mubr.bf16.mxu0 0
    %1238 = vmatmul.mubr.bf16.gmra.mxu0 %v976
    %v1239 = vpop.f32.mrf.mxu0
    %v1240 = vadd.f32 %v379, %v1239
    %v1241 = vpop.f32.mrf.mxu0
    %v1242 = vpop.f32.mrf.mxu0
    %v1243 = vadd.f32 %v384, %v1242
    %v1244 = vpop.f32.mrf.mxu0
    %1245 = vmatprep.mubr.bf16.mxu0 0
    %1246 = vmatmul.mubr.bf16.gmra.mxu0 %v977
    %v1247 = vpop.f32.mrf.mxu0
    %v1248 = vadd.f32 %v389, %v1247
    %v1249 = vpop.f32.mrf.mxu0
    %v1250 = vpop.f32.mrf.mxu0
    %v1251 = vadd.f32 %v394, %v1250
    %v1252 = vpop.f32.mrf.mxu0
    %1253 = vmatprep.mubr.bf16.mxu0 0
    %1254 = vmatmul.mubr.bf16.gmra.mxu0 %v978
    %v1255 = vpop.f32.mrf.mxu0
    %v1256 = vadd.f32 %v399, %v1255
    %v1257 = vpop.f32.mrf.mxu0
    %v1258 = vpop.f32.mrf.mxu0
    %v1259 = vadd.f32 %v404, %v1258
    %v1260 = vpop.f32.mrf.mxu0
    %1261 = vmatprep.mubr.bf16.mxu0 0
    %1262 = vmatmul.mubr.bf16.gmra.mxu0 %v979
    %v1263 = vpop.f32.mrf.mxu0
    %v1264 = vadd.f32 %v409, %v1263
    %v1265 = vpop.f32.mrf.mxu0
    %v1266 = vpop.f32.mrf.mxu0
    %v1267 = vadd.f32 %v414, %v1266
    %v1268 = vpop.f32.mrf.mxu0
    %1269 = vmatprep.mubr.bf16.mxu0 0
    %1270 = vmatmul.mubr.bf16.gmra.mxu0 %v980
    %v1271 = vpop.f32.mrf.mxu0
    %v1272 = vadd.f32 %v419, %v1271
    %v1273 = vpop.f32.mrf.mxu0
    %v1274 = vpop.f32.mrf.mxu0
    %v1275 = vadd.f32 %v424, %v1274
    %v1276 = vpop.f32.mrf.mxu0
    %1277 = vmatprep.mubr.bf16.mxu0 0
    %1278 = vmatmul.mubr.bf16.gmra.mxu0 %v981
    %v1279 = vpop.f32.mrf.mxu0
    %v1280 = vadd.f32 %v429, %v1279
    %v1281 = vpop.f32.mrf.mxu0
    %v1282 = vpop.f32.mrf.mxu0
    %v1283 = vadd.f32 %v434, %v1282
    %v1284 = vpop.f32.mrf.mxu0
    %1285 = vmatprep.mubr.bf16.mxu0 0
    %1286 = vmatmul.mubr.bf16.gmra.mxu0 %v982
    %v1287 = vpop.f32.mrf.mxu0
    %v1288 = vadd.f32 %v439, %v1287
    %v1289 = vpop.f32.mrf.mxu0
    %v1290 = vpop.f32.mrf.mxu0
    %v1291 = vadd.f32 %v444, %v1290
    %v1292 = vpop.f32.mrf.mxu0
    %1293 = vmatprep.mubr.bf16.mxu0 0
    %1294 = vmatmul.mubr.bf16.gmra.mxu0 %v983
    %v1295 = vpop.f32.mrf.mxu0
    %v1296 = vadd.f32 %v449, %v1295
    %v1297 = vpop.f32.mrf.mxu0
    %v1298 = vpop.f32.mrf.mxu0
    %v1299 = vadd.f32 %v454, %v1298
    %v1300 = vpop.f32.mrf.mxu0
    %1301 = vmatprep.mubr.bf16.mxu0 0
    %1302 = vmatmul.mubr.bf16.gmra.mxu0 %v984
    %v1303 = vpop.f32.mrf.mxu0
    %v1304 = vadd.f32 %v459, %v1303
    %v1305 = vpop.f32.mrf.mxu0
    %v1306 = vpop.f32.mrf.mxu0
    %v1307 = vadd.f32 %v464, %v1306
    %v1308 = vpop.f32.mrf.mxu0
    %1309 = vmatprep.mubr.bf16.mxu0 0
    %1310 = vmatmul.mubr.bf16.gmra.mxu0 %v985
    %v1311 = vpop.f32.mrf.mxu0
    %v1312 = vadd.f32 %v469, %v1311
    %v1313 = vpop.f32.mrf.mxu0
    %v1314 = vpop.f32.mrf.mxu0
    %v1315 = vadd.f32 %v474, %v1314
    %v1316 = vpop.f32.mrf.mxu0
    %1317 = vmatprep.mubr.bf16.mxu0 0
    %1318 = vmatmul.mubr.bf16.gmra.mxu0 %v986
    %v1319 = vpop.f32.mrf.mxu0
    %v1320 = vadd.f32 %v479, %v1319
    %v1321 = vpop.f32.mrf.mxu0
    %v1322 = vpop.f32.mrf.mxu0
    %v1323 = vadd.f32 %v484, %v1322
    %v1324 = vpop.f32.mrf.mxu0
    %1325 = vmatprep.mubr.bf16.mxu0 0
    %1326 = vmatmul.mubr.bf16.gmra.mxu0 %v987
    %v1327 = vpop.f32.mrf.mxu0
    %v1328 = vadd.f32 %v489, %v1327
    %v1329 = vpop.f32.mrf.mxu0
    %v1330 = vpop.f32.mrf.mxu0
    %v1331 = vadd.f32 %v494, %v1330
    %v1332 = vpop.f32.mrf.mxu0
    %1333 = vmatprep.mubr.bf16.mxu0 0
    %1334 = vmatmul.mubr.bf16.gmra.mxu0 %v988
    %v1335 = vpop.f32.mrf.mxu0
    %v1336 = vadd.f32 %v499, %v1335
    %v1337 = vpop.f32.mrf.mxu0
    %v1338 = vpop.f32.mrf.mxu0
    %v1339 = vadd.f32 %v504, %v1338
    %v1340 = vpop.f32.mrf.mxu0
    %1341 = vdwg.mxu0
    %v1342 = vmax.f32 %v1088, 0.0
    %v1343 = vmax.f32 %v1091, 0.0
    %v1344 = vmax.f32 %v1096, 0.0
    %v1345 = vmax.f32 %v1099, 0.0
    %v1346 = vmax.f32 %v1104, 0.0
    %v1347 = vmax.f32 %v1107, 0.0
    %v1348 = vmax.f32 %v1112, 0.0
    %v1349 = vmax.f32 %v1115, 0.0
    %v1350 = vmax.f32 %v1120, 0.0
    %v1351 = vmax.f32 %v1123, 0.0
    %v1352 = vmax.f32 %v1128, 0.0
    %v1353 = vmax.f32 %v1131, 0.0
    %v1354 = vmax.f32 %v1136, 0.0
    %v1355 = vmax.f32 %v1139, 0.0
    %v1356 = vmax.f32 %v1144, 0.0
    %v1357 = vmax.f32 %v1147, 0.0
    %v1358 = vmax.f32 %v1152, 0.0
    %v1359 = vmax.f32 %v1155, 0.0
    %v1360 = vmax.f32 %v1160, 0.0
    %v1361 = vmax.f32 %v1163, 0.0
    %v1362 = vmax.f32 %v1168, 0.0
    %v1363 = vmax.f32 %v1171, 0.0
    %v1364 = vmax.f32 %v1176, 0.0
    %v1365 = vmax.f32 %v1179, 0.0
    %v1366 = vmax.f32 %v1184, 0.0
    %v1367 = vmax.f32 %v1187, 0.0
    %v1368 = vmax.f32 %v1192, 0.0
    %v1369 = vmax.f32 %v1195, 0.0
    %v1370 = vmax.f32 %v1200, 0.0
    %v1371 = vmax.f32 %v1203, 0.0
    %v1372 = vmax.f32 %v1208, 0.0
    %v1373 = vmax.f32 %v1211, 0.0
    %v1374 = vmax.f32 %v1216, 0.0
    %v1375 = vmax.f32 %v1219, 0.0
    %v1376 = vmax.f32 %v1224, 0.0
    %v1377 = vmax.f32 %v1227, 0.0
    %v1378 = vmax.f32 %v1232, 0.0
    %v1379 = vmax.f32 %v1235, 0.0
    %v1380 = vmax.f32 %v1240, 0.0
    %v1381 = vmax.f32 %v1243, 0.0
    %v1382 = vmax.f32 %v1248, 0.0
    %v1383 = vmax.f32 %v1251, 0.0
    %v1384 = vmax.f32 %v1256, 0.0
    %v1385 = vmax.f32 %v1259, 0.0
    %v1386 = vmax.f32 %v1264, 0.0
    %v1387 = vmax.f32 %v1267, 0.0
    %v1388 = vmax.f32 %v1272, 0.0
    %v1389 = vmax.f32 %v1275, 0.0
    %v1390 = vmax.f32 %v1280, 0.0
    %v1391 = vmax.f32 %v1283, 0.0
    %v1392 = vmax.f32 %v1288, 0.0
    %v1393 = vmax.f32 %v1291, 0.0
    %v1394 = vmax.f32 %v1296, 0.0
    %v1395 = vmax.f32 %v1299, 0.0
    %v1396 = vmax.f32 %v1304, 0.0
    %v1397 = vmax.f32 %v1307, 0.0
    %v1398 = vmax.f32 %v1312, 0.0
    %v1399 = vmax.f32 %v1315, 0.0
    %v1400 = vmax.f32 %v1320, 0.0
    %v1401 = vmax.f32 %v1323, 0.0
    %v1402 = vmax.f32 %v1328, 0.0
    %v1403 = vmax.f32 %v1331, 0.0
    %v1404 = vmax.f32 %v1336, 0.0
    %v1405 = vmax.f32 %v1339, 0.0
    %v1406 = vpack.c.bf16 %v1343, %v1342
    %v1407 = vpack.c.bf16 %v1345, %v1344
    %v1408 = vpack.c.bf16 %v1347, %v1346
    %v1409 = vpack.c.bf16 %v1349, %v1348
    %v1410 = vpack.c.bf16 %v1351, %v1350
    %v1411 = vpack.c.bf16 %v1353, %v1352
    %v1412 = vpack.c.bf16 %v1355, %v1354
    %v1413 = vpack.c.bf16 %v1357, %v1356
    %v1414 = vpack.c.bf16 %v1359, %v1358
    %v1415 = vpack.c.bf16 %v1361, %v1360
    %v1416 = vpack.c.bf16 %v1363, %v1362
    %v1417 = vpack.c.bf16 %v1365, %v1364
    %v1418 = vpack.c.bf16 %v1367, %v1366
    %v1419 = vpack.c.bf16 %v1369, %v1368
    %v1420 = vpack.c.bf16 %v1371, %v1370
    %v1421 = vpack.c.bf16 %v1373, %v1372
    %v1422 = vpack.c.bf16 %v1375, %v1374
    %v1423 = vpack.c.bf16 %v1377, %v1376
    %v1424 = vpack.c.bf16 %v1379, %v1378
    %v1425 = vpack.c.bf16 %v1381, %v1380
    %v1426 = vpack.c.bf16 %v1383, %v1382
    %v1427 = vpack.c.bf16 %v1385, %v1384
    %v1428 = vpack.c.bf16 %v1387, %v1386
    %v1429 = vpack.c.bf16 %v1389, %v1388
    %v1430 = vpack.c.bf16 %v1391, %v1390
    %v1431 = vpack.c.bf16 %v1393, %v1392
    %v1432 = vpack.c.bf16 %v1395, %v1394
    %v1433 = vpack.c.bf16 %v1397, %v1396
    %v1434 = vpack.c.bf16 %v1399, %v1398
    %v1435 = vpack.c.bf16 %v1401, %v1400
    %v1436 = vpack.c.bf16 %v1403, %v1402
    %v1437 = vpack.c.bf16 %v1405, %v1404
    %v1470 = vunpack.c.l.b16 %v1406
    %v1471 = vunpack.c.h.b16 %v1406
    %v1472 = vunpack.c.l.b16 %v1407
    %v1473 = vunpack.c.h.b16 %v1407
    %v1474 = vunpack.c.l.b16 %v1408
    %v1475 = vunpack.c.h.b16 %v1408
    %v1476 = vunpack.c.l.b16 %v1409
    %v1477 = vunpack.c.h.b16 %v1409
    %v1478 = vunpack.c.l.b16 %v1410
    %v1479 = vunpack.c.h.b16 %v1410
    %v1480 = vunpack.c.l.b16 %v1411
    %v1481 = vunpack.c.h.b16 %v1411
    %v1482 = vunpack.c.l.b16 %v1412
    %v1483 = vunpack.c.h.b16 %v1412
    %v1484 = vunpack.c.l.b16 %v1413
    %v1485 = vunpack.c.h.b16 %v1413
    %v1486 = vunpack.c.l.b16 %v1414
    %v1487 = vunpack.c.h.b16 %v1414
    %v1488 = vunpack.c.l.b16 %v1415
    %v1489 = vunpack.c.h.b16 %v1415
    %v1490 = vunpack.c.l.b16 %v1416
    %v1491 = vunpack.c.h.b16 %v1416
    %v1492 = vunpack.c.l.b16 %v1417
    %v1493 = vunpack.c.h.b16 %v1417
    %v1494 = vunpack.c.l.b16 %v1418
    %v1495 = vunpack.c.h.b16 %v1418
    %v1496 = vunpack.c.l.b16 %v1419
    %v1497 = vunpack.c.h.b16 %v1419
    %v1498 = vunpack.c.l.b16 %v1420
    %v1499 = vunpack.c.h.b16 %v1420
    %v1500 = vunpack.c.l.b16 %v1421
    %v1501 = vunpack.c.h.b16 %v1421
    %v1502 = vunpack.c.l.b16 %v1422
    %v1503 = vunpack.c.h.b16 %v1422
    %v1504 = vunpack.c.l.b16 %v1423
    %v1505 = vunpack.c.h.b16 %v1423
    %v1506 = vunpack.c.l.b16 %v1424
    %v1507 = vunpack.c.h.b16 %v1424
    %v1508 = vunpack.c.l.b16 %v1425
    %v1509 = vunpack.c.h.b16 %v1425
    %v1510 = vunpack.c.l.b16 %v1426
    %v1511 = vunpack.c.h.b16 %v1426
    %v1512 = vunpack.c.l.b16 %v1427
    %v1513 = vunpack.c.h.b16 %v1427
    %v1514 = vunpack.c.l.b16 %v1428
    %v1515 = vunpack.c.h.b16 %v1428
    %v1516 = vunpack.c.l.b16 %v1429
    %v1517 = vunpack.c.h.b16 %v1429
    %v1518 = vunpack.c.l.b16 %v1430
    %v1519 = vunpack.c.h.b16 %v1430
    %v1520 = vunpack.c.l.b16 %v1431
    %v1521 = vunpack.c.h.b16 %v1431
    %v1522 = vunpack.c.l.b16 %v1432
    %v1523 = vunpack.c.h.b16 %v1432
    %v1524 = vunpack.c.l.b16 %v1433
    %v1525 = vunpack.c.h.b16 %v1433
    %v1526 = vunpack.c.l.b16 %v1434
    %v1527 = vunpack.c.h.b16 %v1434
    %v1528 = vunpack.c.l.b16 %v1435
    %v1529 = vunpack.c.h.b16 %v1435
    %v1530 = vunpack.c.l.b16 %v1436
    %v1531 = vunpack.c.h.b16 %v1436
    %v1532 = vunpack.c.l.b16 %v1437
    %v1533 = vunpack.c.h.b16 %v1437
    %v1534 = vpack.c.b16 %v1470, %v1470
    %v1535 = vpack.c.b16 %v1471, %v1471
    %v1536 = vpack.c.b16 %v1472, %v1472
    %v1537 = vpack.c.b16 %v1473, %v1473
    %v1538 = vpack.c.b16 %v1474, %v1474
    %v1539 = vpack.c.b16 %v1475, %v1475
    %v1540 = vpack.c.b16 %v1476, %v1476
    %v1541 = vpack.c.b16 %v1477, %v1477
    %v1542 = vpack.c.b16 %v1478, %v1478
    %v1543 = vpack.c.b16 %v1479, %v1479
    %v1544 = vpack.c.b16 %v1480, %v1480
    %v1545 = vpack.c.b16 %v1481, %v1481
    %v1546 = vpack.c.b16 %v1482, %v1482
    %v1547 = vpack.c.b16 %v1483, %v1483
    %v1548 = vpack.c.b16 %v1484, %v1484
    %v1549 = vpack.c.b16 %v1485, %v1485
    %v1550 = vpack.c.b16 %v1486, %v1486
    %v1551 = vpack.c.b16 %v1487, %v1487
    %v1552 = vpack.c.b16 %v1488, %v1488
    %v1553 = vpack.c.b16 %v1489, %v1489
    %v1554 = vpack.c.b16 %v1490, %v1490
    %v1555 = vpack.c.b16 %v1491, %v1491
    %v1556 = vpack.c.b16 %v1492, %v1492
    %v1557 = vpack.c.b16 %v1493, %v1493
    %v1558 = vpack.c.b16 %v1494, %v1494
    %v1559 = vpack.c.b16 %v1495, %v1495
    %v1560 = vpack.c.b16 %v1496, %v1496
    %v1561 = vpack.c.b16 %v1497, %v1497
    %v1562 = vpack.c.b16 %v1498, %v1498
    %v1563 = vpack.c.b16 %v1499, %v1499
    %v1564 = vpack.c.b16 %v1500, %v1500
    %v1565 = vpack.c.b16 %v1501, %v1501
    %v1566 = vpack.c.b16 %v1502, %v1502
    %v1567 = vpack.c.b16 %v1503, %v1503
    %v1568 = vpack.c.b16 %v1504, %v1504
    %v1569 = vpack.c.b16 %v1505, %v1505
    %v1570 = vpack.c.b16 %v1506, %v1506
    %v1571 = vpack.c.b16 %v1507, %v1507
    %v1572 = vpack.c.b16 %v1508, %v1508
    %v1573 = vpack.c.b16 %v1509, %v1509
    %v1574 = vpack.c.b16 %v1510, %v1510
    %v1575 = vpack.c.b16 %v1511, %v1511
    %v1576 = vpack.c.b16 %v1512, %v1512
    %v1577 = vpack.c.b16 %v1513, %v1513
    %v1578 = vpack.c.b16 %v1514, %v1514
    %v1579 = vpack.c.b16 %v1515, %v1515
    %v1580 = vpack.c.b16 %v1516, %v1516
    %v1581 = vpack.c.b16 %v1517, %v1517
    %v1582 = vpack.c.b16 %v1518, %v1518
    %v1583 = vpack.c.b16 %v1519, %v1519
    %v1584 = vpack.c.b16 %v1520, %v1520
    %v1585 = vpack.c.b16 %v1521, %v1521
    %v1586 = vpack.c.b16 %v1522, %v1522
    %v1587 = vpack.c.b16 %v1523, %v1523
    %v1588 = vpack.c.b16 %v1524, %v1524
    %v1589 = vpack.c.b16 %v1525, %v1525
    %v1590 = vpack.c.b16 %v1526, %v1526
    %v1591 = vpack.c.b16 %v1527, %v1527
    %v1592 = vpack.c.b16 %v1528, %v1528
    %v1593 = vpack.c.b16 %v1529, %v1529
    %v1594 = vpack.c.b16 %v1530, %v1530
    %v1595 = vpack.c.b16 %v1531, %v1531
    %v1596 = vpack.c.b16 %v1532, %v1532
    %v1597 = vpack.c.b16 %v1533, %v1533
    %1662 = vst [vmem:[%s5] sm:$0xf] %v1534
    %1663 = vst [vmem:[%s5 + $0x4] sm:$0xf] %v1535
    %1664 = vst [vmem:[%s5 + $0x8] sm:$0xf] %v1536
    %1665 = vst [vmem:[%s5 + $0xc] sm:$0xf] %v1537
    %1666 = vst [vmem:[%s5 + $0x10] sm:$0xf] %v1538
    %1667 = vst [vmem:[%s5 + $0x14] sm:$0xf] %v1539
    %1668 = vst [vmem:[%s5 + $0x18] sm:$0xf] %v1540
    %1669 = vst [vmem:[%s5 + $0x1c] sm:$0xf] %v1541
    %1670 = vst [vmem:[%s5 + $0x20] sm:$0xf] %v1542
    %1671 = vst [vmem:[%s5 + $0x24] sm:$0xf] %v1543
    %1672 = vst [vmem:[%s5 + $0x28] sm:$0xf] %v1544
    %1673 = vst [vmem:[%s5 + $0x2c] sm:$0xf] %v1545
    %1674 = vst [vmem:[%s5 + $0x30] sm:$0xf] %v1546
    %1675 = vst [vmem:[%s5 + $0x34] sm:$0xf] %v1547
    %1676 = vst [vmem:[%s5 + $0x38] sm:$0xf] %v1548
    %1677 = vst [vmem:[%s5 + $0x3c] sm:$0xf] %v1549
    %1678 = vst [vmem:[%s5 + $0x40] sm:$0xf] %v1550
    %1679 = vst [vmem:[%s5 + $0x44] sm:$0xf] %v1551
    %1680 = vst [vmem:[%s5 + $0x48] sm:$0xf] %v1552
    %1681 = vst [vmem:[%s5 + $0x4c] sm:$0xf] %v1553
    %1682 = vst [vmem:[%s5 + $0x50] sm:$0xf] %v1554
    %1683 = vst [vmem:[%s5 + $0x54] sm:$0xf] %v1555
    %1684 = vst [vmem:[%s5 + $0x58] sm:$0xf] %v1556
    %1685 = vst [vmem:[%s5 + $0x5c] sm:$0xf] %v1557
    %1686 = vst [vmem:[%s5 + $0x60] sm:$0xf] %v1558
    %1687 = vst [vmem:[%s5 + $0x64] sm:$0xf] %v1559
    %1688 = vst [vmem:[%s5 + $0x68] sm:$0xf] %v1560
    %1689 = vst [vmem:[%s5 + $0x6c] sm:$0xf] %v1561
    %1690 = vst [vmem:[%s5 + $0x70] sm:$0xf] %v1562
    %1691 = vst [vmem:[%s5 + $0x74] sm:$0xf] %v1563
    %1692 = vst [vmem:[%s5 + $0x78] sm:$0xf] %v1564
    %1693 = vst [vmem:[%s5 + $0x7c] sm:$0xf] %v1565
    %1694 = vst [vmem:[%s5 + $0x80] sm:$0xf] %v1566
    %1695 = vst [vmem:[%s5 + $0x84] sm:$0xf] %v1567
    %1696 = vst [vmem:[%s5 + $0x88] sm:$0xf] %v1568
    %1697 = vst [vmem:[%s5 + $0x8c] sm:$0xf] %v1569
    %1698 = vst [vmem:[%s5 + $0x90] sm:$0xf] %v1570
    %1699 = vst [vmem:[%s5 + $0x94] sm:$0xf] %v1571
    %1700 = vst [vmem:[%s5 + $0x98] sm:$0xf] %v1572
    %1701 = vst [vmem:[%s5 + $0x9c] sm:$0xf] %v1573
    %1702 = vst [vmem:[%s5 + $0xa0] sm:$0xf] %v1574
    %1703 = vst [vmem:[%s5 + $0xa4] sm:$0xf] %v1575
    %1704 = vst [vmem:[%s5 + $0xa8] sm:$0xf] %v1576
    %1705 = vst [vmem:[%s5 + $0xac] sm:$0xf] %v1577
    %1706 = vst [vmem:[%s5 + $0xb0] sm:$0xf] %v1578
    %1707 = vst [vmem:[%s5 + $0xb4] sm:$0xf] %v1579
    %1708 = vst [vmem:[%s5 + $0xb8] sm:$0xf] %v1580
    %1709 = vst [vmem:[%s5 + $0xbc] sm:$0xf] %v1581
    %1710 = vst [vmem:[%s5 + $0xc0] sm:$0xf] %v1582
    %1711 = vst [vmem:[%s5 + $0xc4] sm:$0xf] %v1583
    %1712 = vst [vmem:[%s5 + $0xc8] sm:$0xf] %v1584
    %1713 = vst [vmem:[%s5 + $0xcc] sm:$0xf] %v1585
    %1714 = vst [vmem:[%s5 + $0xd0] sm:$0xf] %v1586
    %1715 = vst [vmem:[%s5 + $0xd4] sm:$0xf] %v1587
    %1716 = vst [vmem:[%s5 + $0xd8] sm:$0xf] %v1588
    %1717 = vst [vmem:[%s5 + $0xdc] sm:$0xf] %v1589
    %1718 = vst [vmem:[%s5 + $0xe0] sm:$0xf] %v1590
    %1719 = vst [vmem:[%s5 + $0xe4] sm:$0xf] %v1591
    %1720 = vst [vmem:[%s5 + $0xe8] sm:$0xf] %v1592
    %1721 = vst [vmem:[%s5 + $0xec] sm:$0xf] %v1593
    %1722 = vst [vmem:[%s5 + $0xf0] sm:$0xf] %v1594
    %1723 = vst [vmem:[%s5 + $0xf4] sm:$0xf] %v1595
    %1724 = vst [vmem:[%s5 + $0xf8] sm:$0xf] %v1596
    %1725 = vst [vmem:[%s5 + $0xfc] sm:$0xf] %v1597
    // Predicated region
    $region26: #{_lambda_.7} parent=1 // pred_check
      _
    $region27: #{_lambda_.7} parent=1 // pred_check_branch
      %1727 = sbr.rel (0) target = $region29
    $region28: #{_lambda_.7} parent=1 // pred_region
      _
    $region29: #{_lambda_.7} parent=1 // pred_fallthru
      _
    // Predicated region
    $region30: #{_lambda_.7} parent=1 // pred_check
      _
    $region31: #{_lambda_.7} parent=1 // pred_check_branch
      %1729 = sbr.rel (0) target = $region33
    $region32: #{_lambda_.7} parent=1 // pred_region
      _
    $region33: #{_lambda_.7} parent=1 // pred_fallthru
      _
    %1730 = vsyncpa [#allocation3], 1

</llo_original>
